<compile_context>
chip_gen: v5e
topology: v5e:2x2
jax: 0.10.0
libtpu: 0.0.40
codegen_flags: <defaults>
</compile_context>

<pallas_src>
import jax
import jax.numpy as jnp
from jax.experimental import pallas as pl
from jax.experimental.pallas import tpu as pltpu

D_IN = 3 * 32 * 32   # 3072
D_H0 = 512
D_H1 = 128
D_H2 = 512
D_OUT = 10
D_OUT_PAD = 128      # lane-dense padded output width (multiple of 128)
TB_MAX = 256         # max batch tile (feeds the MXU M stream on v6e/v7x)


def _round_up(x, m):
    return ((x + m - 1) // m) * m


def _choose_tb(batch):
    """Batch tile: small batches -> single step; >=256 rows -> >=2 grid steps."""
    b8 = _round_up(max(batch, 1), 8)
    if b8 < 2 * 128:
        return b8  # single grid step, only sublane padding
    # >= 256 rows: keep at least 2 grid steps (both v7x TensorCores get work),
    # cap the tile at TB_MAX (amortizes the ~0.35us per-step overhead on
    # v6e/v7x; v5e is already compute-dominated at these sizes).
    return min(TB_MAX, _round_up(pl.cdiv(b8, 2), 8))


def mlp_kernel(x_ref,
               w0_ref, b0_ref,
               w1_ref, b1_ref,
               w2_ref, b2_ref,
               w3_ref, b3_ref,
               o_ref):
    # Fused 4x (Linear [+ ReLU]) for one batch tile.  bf16 operands on the
    # MXU with f32 accumulation; bias adds and ReLU in f32 on the VPU, hidden
    # activations recast to bf16 before the next matmul.
    f32 = jnp.float32
    bf16 = jnp.bfloat16

    h = jnp.dot(x_ref[...], w0_ref[...], preferred_element_type=f32)
    h = jnp.maximum(h + b0_ref[...], 0.0).astype(bf16)

    h = jnp.dot(h, w1_ref[...], preferred_element_type=f32)
    h = jnp.maximum(h + b1_ref[...], 0.0).astype(bf16)

    # Dropout(p=0.0) is identity -> no-op.

    h = jnp.dot(h, w2_ref[...], preferred_element_type=f32)
    h = jnp.maximum(h + b2_ref[...], 0.0).astype(bf16)

    out = jnp.dot(h, w3_ref[...], preferred_element_type=f32) + b3_ref[...]
    o_ref[...] = out.astype(o_ref.dtype)   # lane-dense (TB, 128) unmasked store


def prepare_params(params):
    """One-time parameter preparation (call OUTSIDE the per-forward path).

    Transposes torch-style (out, in) weights to (in, out), zero-pads layer3 to
    a lane-dense 128-wide output, casts weights to bf16 (MXU operands) and
    keeps biases in f32 (tiny, exact epilogue adds).
    """
    w0, b0, w1, b1, w2, b2, w3, b3 = params
    bf16 = jnp.bfloat16
    f32 = jnp.float32
    w0t = jnp.asarray(w0).T.astype(bf16)
    w1t = jnp.asarray(w1).T.astype(bf16)
    w2t = jnp.asarray(w2).T.astype(bf16)
    w3t = jnp.pad(jnp.asarray(w3).T, ((0, 0), (0, D_OUT_PAD - D_OUT))).astype(bf16)
    b0r = jnp.asarray(b0, f32).reshape(1, D_H0)
    b1r = jnp.asarray(b1, f32).reshape(1, D_H1)
    b2r = jnp.asarray(b2, f32).reshape(1, D_H2)
    b3r = jnp.pad(jnp.asarray(b3, f32), (0, D_OUT_PAD - D_OUT)).reshape(1, D_OUT_PAD)
    return (w0t, b0r, w1t, b1r, w2t, b2r, w3t, b3r)


@jax.jit
def mlp_forward(x_nchw, prepared):
    """x_nchw: (B, 3, 32, 32) float32; prepared = prepare_params(params).

    Returns (B, 10) float32 logits.
    """
    B = x_nchw.shape[0]
    w0t, b0r, w1t, b1r, w2t, b2r, w3t, b3r = prepared

    x = x_nchw.reshape(B, D_IN).astype(jnp.bfloat16)   # flatten(1,-1) + bf16 feed

    TB = _choose_tb(B)
    B_pad = _round_up(B, TB)
    if B_pad != B:
        x = jnp.pad(x, ((0, B_pad - B), (0, 0)))
    grid = (B_pad // TB,)

    def full(shape):
        # Full-array block with a constant block index: DMA'd into VMEM once,
        # resident for all grid steps.
        return pl.BlockSpec(shape, lambda i: (0, 0))

    # Advisory cost for XLA's scheduler around the custom call.
    mm_flops = 2 * B_pad * (D_IN * D_H0 + D_H0 * D_H1 + D_H1 * D_H2 + D_H2 * D_OUT_PAD)
    weight_bytes = 2 * (D_IN * D_H0 + D_H0 * D_H1 + D_H1 * D_H2 + D_H2 * D_OUT_PAD)
    bias_bytes = 4 * (D_H0 + D_H1 + D_H2 + D_OUT_PAD)
    bytes_accessed = B_pad * D_IN * 2 + weight_bytes + bias_bytes + B_pad * D_OUT_PAD * 4

    out = pl.pallas_call(
        mlp_kernel,
        out_shape=jax.ShapeDtypeStruct((B_pad, D_OUT_PAD), jnp.float32),
        grid_spec=pltpu.PrefetchScalarGridSpec(
            num_scalar_prefetch=0,
            grid=grid,
            in_specs=[
                pl.BlockSpec((TB, D_IN), lambda i: (i, 0)),
                full((D_IN, D_H0)), full((1, D_H0)),
                full((D_H0, D_H1)), full((1, D_H1)),
                full((D_H1, D_H2)), full((1, D_H2)),
                full((D_H2, D_OUT_PAD)), full((1, D_OUT_PAD)),
            ],
            out_specs=pl.BlockSpec((TB, D_OUT_PAD), lambda i: (i, 0)),
        ),
        compiler_params=pltpu.CompilerParams(
            dimension_semantics=("parallel",),
            # Re-derived footprint: bf16 weights ~3.4 MiB (x2 buffers = 6.8)
            # + bf16 x tile <=1.5 MiB (x2) + out tile + f32 intermediates
            # ~= 12 MiB.  24 MiB leaves headroom, exceeds v5e's 16 MiB default
            # scoped limit, and stays well under v7x's 64 MiB physical VMEM.
            vmem_limit_bytes=24 * 1024 * 1024,
        ),
        cost_estimate=pl.CostEstimate(
            flops=mm_flops, transcendentals=0, bytes_accessed=bytes_accessed),
    )(x, w0t, b0r, w1t, b1r, w2t, b2r, w3t, b3r)

    return out[:B, :D_OUT]


def init_params(key):
    """Deterministic init matching torch.nn.Linear shapes (Kaiming-uniform-ish)."""
    def linear(key, fan_in, fan_out):
        kw, kb = jax.random.split(key)
        bound = 1.0 / jnp.sqrt(fan_in)
        w = jax.random.uniform(kw, (fan_out, fan_in), jnp.float32, -bound, bound)
        b = jax.random.uniform(kb, (fan_out,), jnp.float32, -bound, bound)
        return w, b

    k0, k1, k2, k3 = jax.random.split(key, 4)
    w0, b0 = linear(k0, D_IN, D_H0)
    w1, b1 = linear(k1, D_H0, D_H1)
    w2, b2 = linear(k2, D_H1, D_H2)
    w3, b3 = linear(k3, D_H2, D_OUT)
    return (w0, b0, w1, b1, w2, b2, w3, b3)


def mlp_reference(x_nchw, params):
    """Exact f32 PyTorch-semantics reference."""
    w0, b0, w1, b1, w2, b2, w3, b3 = params
    x = x_nchw.reshape(x_nchw.shape[0], -1)
    h = jnp.maximum(x @ w0.T + b0, 0.0)
    h = jnp.maximum(h @ w1.T + b1, 0.0)
    h = jnp.maximum(h @ w2.T + b2, 0.0)
    return h @ w3.T + b3


def mlp_reference_bf16(x_nchw, prepared):
    """XLA reference with the SAME bf16 operands / f32 accumulation as the kernel."""
    w0t, b0r, w1t, b1r, w2t, b2r, w3t, b3r = prepared
    f32 = jnp.float32
    bf16 = jnp.bfloat16
    x = x_nchw.reshape(x_nchw.shape[0], -1).astype(bf16)
    h = jnp.maximum(jnp.dot(x, w0t, preferred_element_type=f32) + b0r, 0.0).astype(bf16)
    h = jnp.maximum(jnp.dot(h, w1t, preferred_element_type=f32) + b1r, 0.0).astype(bf16)
    h = jnp.maximum(jnp.dot(h, w2t, preferred_element_type=f32) + b2r, 0.0).astype(bf16)
    out = jnp.dot(h, w3t, preferred_element_type=f32) + b3r
    return out[:, :D_OUT]


if __name__ == "__main__":
    key = jax.random.PRNGKey(0)
    kx, kp, kx2 = jax.random.split(key, 3)
    params = init_params(kp)
    prepared = prepare_params(params)   # hoisted: runs once, not per forward call

    # Small CIFAR10-shaped batch (NCHW; flatten(1,-1) implies 3*32*32 inputs).
    x_small = jax.random.normal(kx, (2, 3, 32, 32), jnp.float32)
    out_small = jax.block_until_ready(mlp_forward(x_small, prepared))
    assert out_small.shape == (2, D_OUT)
    # Tight check vs. an XLA reference with identical bf16 operands / f32 acc.
    assert jnp.allclose(out_small, mlp_reference_bf16(x_small, prepared),
                        atol=1e-3, rtol=1e-3)
    # Looser check vs. the exact f32 reference: bf16 operands over the K=3072
    # contraction land around 1e-2 relative, so use a 5e-2 tolerance.
    assert jnp.allclose(out_small, mlp_reference(x_small, params),
                        atol=5e-2, rtol=5e-2)

    # Larger batch: exercises the >=2-step parallel grid (two 128-row tiles,
    # so both v7x TensorCores get work).
    x_big = jax.random.normal(kx2, (256, 3, 32, 32), jnp.float32)
    out_big = jax.block_until_ready(mlp_forward(x_big, prepared))
    assert out_big.shape == (256, D_OUT)
    assert jnp.allclose(out_big, mlp_reference_bf16(x_big, prepared),
                        atol=1e-3, rtol=1e-3)
    assert jnp.allclose(out_big, mlp_reference(x_big, params),
                        atol=5e-2, rtol=5e-2)

    print("KERNEL_OK")
</pallas_src>

<mosaic_0001>
module attributes {stable_mosaic.version = 11 : i64} {
  func.func @mlp_kernel(%arg0: i32, %arg1: memref<8x3072xbf16, #tpu.memory_space<vmem>>, %arg2: memref<3072x512xbf16, #tpu.memory_space<vmem>>, %arg3: memref<1x512xf32, #tpu.memory_space<vmem>>, %arg4: memref<512x128xbf16, #tpu.memory_space<vmem>>, %arg5: memref<1x128xf32, #tpu.memory_space<vmem>>, %arg6: memref<128x512xbf16, #tpu.memory_space<vmem>>, %arg7: memref<1x512xf32, #tpu.memory_space<vmem>>, %arg8: memref<512x128xbf16, #tpu.memory_space<vmem>>, %arg9: memref<1x128xf32, #tpu.memory_space<vmem>>, %arg10: memref<8x128xf32, #tpu.memory_space<vmem>>) attributes {dimension_semantics = [#tpu.dimension_semantics<parallel>], iteration_bounds = array<i64: 1>, scalar_prefetch = 0 : i64, scratch_operands = 0 : i64, tpu.core_type = #tpu.core_type<tc>, window_params = [{transform_indices = @transform_0, window_bounds = array<i64: 8, 3072>}, {pipeline_mode = #tpu.pipeline_mode<synchronous>, transform_indices = @transform_1, window_bounds = array<i64: 3072, 512>}, {pipeline_mode = #tpu.pipeline_mode<synchronous>, transform_indices = @transform_2, window_bounds = array<i64: 1, 512>}, {pipeline_mode = #tpu.pipeline_mode<synchronous>, transform_indices = @transform_3, window_bounds = array<i64: 512, 128>}, {pipeline_mode = #tpu.pipeline_mode<synchronous>, transform_indices = @transform_4, window_bounds = array<i64: 1, 128>}, {pipeline_mode = #tpu.pipeline_mode<synchronous>, transform_indices = @transform_5, window_bounds = array<i64: 128, 512>}, {pipeline_mode = #tpu.pipeline_mode<synchronous>, transform_indices = @transform_6, window_bounds = array<i64: 1, 512>}, {pipeline_mode = #tpu.pipeline_mode<synchronous>, transform_indices = @transform_7, window_bounds = array<i64: 512, 128>}, {pipeline_mode = #tpu.pipeline_mode<synchronous>, transform_indices = @transform_8, window_bounds = array<i64: 1, 128>}, {transform_indices = @transform_9, window_bounds = array<i64: 8, 128>}]} {
    %c0 = arith.constant 0 : index
    %c0_0 = arith.constant 0 : index
    %0 = vector.load %arg1[%c0, %c0_0] : memref<8x3072xbf16, #tpu.memory_space<vmem>>, vector<8x3072xbf16>
    %c0_1 = arith.constant 0 : index
    %c0_2 = arith.constant 0 : index
    %1 = vector.load %arg2[%c0_1, %c0_2] : memref<3072x512xbf16, #tpu.memory_space<vmem>>, vector<3072x512xbf16>
    %cst = arith.constant dense<0.000000e+00> : vector<8x512xf32>
    %2 = tpu.matmul %0, %1, %cst {dimension_numbers = #tpu.dot_dimension_numbers<[1], [0], [0], [1], [0, 0, 1, 1], [], []>} : vector<8x3072xbf16>, vector<3072x512xbf16>, vector<8x512xf32> -> vector<8x512xf32>
    %c0_3 = arith.constant 0 : index
    %c0_4 = arith.constant 0 : index
    %3 = vector.load %arg3[%c0_3, %c0_4] : memref<1x512xf32, #tpu.memory_space<vmem>>, vector<1x512xf32>
    %4 = vector.broadcast %3 : vector<1x512xf32> to vector<8x512xf32>
    %5 = arith.addf %2, %4 : vector<8x512xf32>
    %cst_5 = arith.constant 0.000000e+00 : f32
    %6 = vector.broadcast %cst_5 : f32 to vector<8x512xf32>
    %7 = arith.maximumf %5, %6 : vector<8x512xf32>
    %8 = arith.truncf %7 : vector<8x512xf32> to vector<8x512xbf16>
    %c0_6 = arith.constant 0 : index
    %c0_7 = arith.constant 0 : index
    %9 = vector.load %arg4[%c0_6, %c0_7] : memref<512x128xbf16, #tpu.memory_space<vmem>>, vector<512x128xbf16>
    %cst_8 = arith.constant dense<0.000000e+00> : vector<8x128xf32>
    %10 = tpu.matmul %8, %9, %cst_8 {dimension_numbers = #tpu.dot_dimension_numbers<[1], [0], [0], [1], [0, 0, 1, 1], [], []>} : vector<8x512xbf16>, vector<512x128xbf16>, vector<8x128xf32> -> vector<8x128xf32>
    %c0_9 = arith.constant 0 : index
    %c0_10 = arith.constant 0 : index
    %11 = vector.load %arg5[%c0_9, %c0_10] : memref<1x128xf32, #tpu.memory_space<vmem>>, vector<1x128xf32>
    %12 = vector.broadcast %11 : vector<1x128xf32> to vector<8x128xf32>
    %13 = arith.addf %10, %12 : vector<8x128xf32>
    %cst_11 = arith.constant 0.000000e+00 : f32
    %14 = vector.broadcast %cst_11 : f32 to vector<8x128xf32>
    %15 = arith.maximumf %13, %14 : vector<8x128xf32>
    %16 = arith.truncf %15 : vector<8x128xf32> to vector<8x128xbf16>
    %c0_12 = arith.constant 0 : index
    %c0_13 = arith.constant 0 : index
    %17 = vector.load %arg6[%c0_12, %c0_13] : memref<128x512xbf16, #tpu.memory_space<vmem>>, vector<128x512xbf16>
    %cst_14 = arith.constant dense<0.000000e+00> : vector<8x512xf32>
    %18 = tpu.matmul %16, %17, %cst_14 {dimension_numbers = #tpu.dot_dimension_numbers<[1], [0], [0], [1], [0, 0, 1, 1], [], []>} : vector<8x128xbf16>, vector<128x512xbf16>, vector<8x512xf32> -> vector<8x512xf32>
    %c0_15 = arith.constant 0 : index
    %c0_16 = arith.constant 0 : index
    %19 = vector.load %arg7[%c0_15, %c0_16] : memref<1x512xf32, #tpu.memory_space<vmem>>, vector<1x512xf32>
    %20 = vector.broadcast %19 : vector<1x512xf32> to vector<8x512xf32>
    %21 = arith.addf %18, %20 : vector<8x512xf32>
    %cst_17 = arith.constant 0.000000e+00 : f32
    %22 = vector.broadcast %cst_17 : f32 to vector<8x512xf32>
    %23 = arith.maximumf %21, %22 : vector<8x512xf32>
    %24 = arith.truncf %23 : vector<8x512xf32> to vector<8x512xbf16>
    %c0_18 = arith.constant 0 : index
    %c0_19 = arith.constant 0 : index
    %25 = vector.load %arg8[%c0_18, %c0_19] : memref<512x128xbf16, #tpu.memory_space<vmem>>, vector<512x128xbf16>
    %cst_20 = arith.constant dense<0.000000e+00> : vector<8x128xf32>
    %26 = tpu.matmul %24, %25, %cst_20 {dimension_numbers = #tpu.dot_dimension_numbers<[1], [0], [0], [1], [0, 0, 1, 1], [], []>} : vector<8x512xbf16>, vector<512x128xbf16>, vector<8x128xf32> -> vector<8x128xf32>
    %c0_21 = arith.constant 0 : index
    %c0_22 = arith.constant 0 : index
    %27 = vector.load %arg9[%c0_21, %c0_22] : memref<1x128xf32, #tpu.memory_space<vmem>>, vector<1x128xf32>
    %28 = vector.broadcast %27 : vector<1x128xf32> to vector<8x128xf32>
    %29 = arith.addf %26, %28 : vector<8x128xf32>
    %c0_23 = arith.constant 0 : index
    %c0_24 = arith.constant 0 : index
    %30 = vector.load %arg10[%c0_23, %c0_24] : memref<8x128xf32, #tpu.memory_space<vmem>>, vector<8x128xf32>
    tpu.vector_store %arg10[%c0_23, %c0_24], %29 {strides = array<i32>} : memref<8x128xf32, #tpu.memory_space<vmem>>, vector<8x128xf32>,
    return
  }
  func.func @transform_0(%arg0: i32) -> (i32, i32) {
    %c0_i32 = arith.constant 0 : i32
    %c0_i32_0 = arith.constant 0 : i32
    return %arg0, %c0_i32 : i32, i32
  }
  func.func @transform_1(%arg0: i32) -> (i32, i32) {
    %c0_i32 = arith.constant 0 : i32
    %c0_i32_0 = arith.constant 0 : i32
    %c0_i32_1 = arith.constant 0 : i32
    return %c0_i32, %c0_i32_0 : i32, i32
  }
  func.func @transform_2(%arg0: i32) -> (i32, i32) {
    %c0_i32 = arith.constant 0 : i32
    %c0_i32_0 = arith.constant 0 : i32
    %c0_i32_1 = arith.constant 0 : i32
    return %c0_i32, %c0_i32_0 : i32, i32
  }
  func.func @transform_3(%arg0: i32) -> (i32, i32) {
    %c0_i32 = arith.constant 0 : i32
    %c0_i32_0 = arith.constant 0 : i32
    %c0_i32_1 = arith.constant 0 : i32
    return %c0_i32, %c0_i32_0 : i32, i32
  }
  func.func @transform_4(%arg0: i32) -> (i32, i32) {
    %c0_i32 = arith.constant 0 : i32
    %c0_i32_0 = arith.constant 0 : i32
    %c0_i32_1 = arith.constant 0 : i32
    return %c0_i32, %c0_i32_0 : i32, i32
  }
  func.func @transform_5(%arg0: i32) -> (i32, i32) {
    %c0_i32 = arith.constant 0 : i32
    %c0_i32_0 = arith.constant 0 : i32
    %c0_i32_1 = arith.constant 0 : i32
    return %c0_i32, %c0_i32_0 : i32, i32
  }
  func.func @transform_6(%arg0: i32) -> (i32, i32) {
    %c0_i32 = arith.constant 0 : i32
    %c0_i32_0 = arith.constant 0 : i32
    %c0_i32_1 = arith.constant 0 : i32
    return %c0_i32, %c0_i32_0 : i32, i32
  }
  func.func @transform_7(%arg0: i32) -> (i32, i32) {
    %c0_i32 = arith.constant 0 : i32
    %c0_i32_0 = arith.constant 0 : i32
    %c0_i32_1 = arith.constant 0 : i32
    return %c0_i32, %c0_i32_0 : i32, i32
  }
  func.func @transform_8(%arg0: i32) -> (i32, i32) {
    %c0_i32 = arith.constant 0 : i32
    %c0_i32_0 = arith.constant 0 : i32
    %c0_i32_1 = arith.constant 0 : i32
    return %c0_i32, %c0_i32_0 : i32, i32
  }
  func.func @transform_9(%arg0: i32) -> (i32, i32) {
    %c0_i32 = arith.constant 0 : i32
    %c0_i32_0 = arith.constant 0 : i32
    return %arg0, %c0_i32 : i32, i32
  }
}

</mosaic_0001>

<llo_original>
// kernel: mlp_forward.1
$region0: #{mlp_forward.1}
  #allocation0 [shape = 'u32[]', space=smem, size = 0x4, offset = 0x4, fixed_abs, tag = 'smem constant byte address 0x4 - core index']
  #allocation1 [shape = 'u32[72,128]{1,0:T(1,128)}', space=vmem, size = 0x9000, scoped, tag = 'internal scratch']
  %s0 = inlined_call_operand.vmem [shape: bf16[8,3072], index: 0, kind: input, shape index: {}]
  %s1 = inlined_call_operand.hbm [shape: bf16[3072,512], index: 1, kind: input, shape index: {}]
  %s2 = inlined_call_operand.hbm [shape: f32[1,512], index: 2, kind: input, shape index: {}]
  %s3 = inlined_call_operand.hbm [shape: bf16[512,128], index: 3, kind: input, shape index: {}]
  %s4 = inlined_call_operand.hbm [shape: f32[1,128], index: 4, kind: input, shape index: {}]
  %s5 = inlined_call_operand.hbm [shape: bf16[128,512], index: 5, kind: input, shape index: {}]
  %s6 = inlined_call_operand.hbm [shape: f32[1,512], index: 6, kind: input, shape index: {}]
  %s7 = inlined_call_operand.hbm [shape: bf16[512,128], index: 7, kind: input, shape index: {}]
  %s8 = inlined_call_operand.hbm [shape: f32[1,128], index: 8, kind: input, shape index: {}]
  %s9 = inlined_call_operand.vmem [shape: f32[8,128], index: 9, kind: output, shape index: {}]
  %s10 = sld [smem:[#allocation0]]
  $region78: #{mlp_forward.1} parent=0
    _
  %s12 = ssub.s32 1, %s10
  %s13 = scalar_select 0, %s12, %s10
  $region1: #{mlp_forward.1} parent=0
    #allocation2 [shape = 'u8[3145728]{0}', space=vmem, size = 0x300000, scoped, tag = 'input window, operand 1, single buffered']
    #allocation3 [shape = 's32[1]{0}', space=sflag, size = 0x4, scoped, tag = 'scoped memory for mlp_forward.1']
    #allocation4 [shape = 'u8[2048]{0}', space=vmem, size = 0x800, scoped, tag = 'input window, operand 2, single buffered']
    #allocation5 [shape = 's32[1]{0}', space=sflag, size = 0x4, scoped, tag = 'scoped memory for mlp_forward.1']
    #allocation6 [shape = 'u8[131072]{0}', space=vmem, size = 0x20000, scoped, tag = 'input window, operand 3, single buffered']
    #allocation7 [shape = 'u8[512]{0}', space=vmem, size = 0x400, scoped, tag = 'input window, operand 4, single buffered']
    #allocation8 [shape = 's32[1]{0}', space=sflag, size = 0x4, scoped, tag = 'scoped memory for mlp_forward.1']
    #allocation9 [shape = 'u8[131072]{0}', space=vmem, size = 0x20000, scoped, tag = 'input window, operand 5, single buffered']
    #allocation10 [shape = 'u8[2048]{0}', space=vmem, size = 0x800, scoped, tag = 'input window, operand 6, single buffered']
    #allocation11 [shape = 's32[1]{0}', space=sflag, size = 0x4, scoped, tag = 'scoped memory for mlp_forward.1']
    #allocation12 [shape = 'u8[131072]{0}', space=vmem, size = 0x20000, scoped, tag = 'input window, operand 7, single buffered']
    #allocation13 [shape = 'u8[512]{0}', space=vmem, size = 0x400, scoped, tag = 'input window, operand 8, single buffered']
    #allocation14 [shape = 's32[1]{0}', space=sflag, size = 0x4, scoped, tag = 'scoped memory for mlp_forward.1']
    %14 = vsyncpa [#allocation3], 0
    %15 = vsyncpa [#allocation5], 0
    %16 = vsyncpa [#allocation8], 0
    %17 = vsyncpa [#allocation11], 0
    %18 = vsyncpa [#allocation14], 0
    // Predicated region
    $region2: #{mlp_forward.1} parent=1 // pred_check
      _
    $region3: #{mlp_forward.1} parent=1 // pred_check_branch
      %20 = sbr.rel (0) target = $region5
    $region4: #{mlp_forward.1} parent=1 // pred_region
      _
    $region5: #{mlp_forward.1} parent=1 // pred_fallthru
      _
    // Predicated region
    $region6: #{mlp_forward.1} parent=1 // pred_check
      _
    $region7: #{mlp_forward.1} parent=1 // pred_check_branch
      %22 = sbr.rel (0) target = $region9
    $region8: #{mlp_forward.1} parent=1 // pred_region
      %24 = vsyncadd [#allocation3], 0
      %s25 = sshll.u32 %s1, 4
      %s26 = int_to_ptr.hbm [resolvable:$true] %s25
      %s27 = sshll.u32 [#allocation2], 4
      %s28 = int_to_ptr.vmem [resolvable:$true] %s27
      %33 = dma.hbm_to_vmem [thread:$0]  %s26, 98304, %s28, [#allocation3], 256, 256, 16
    $region9: #{mlp_forward.1} parent=1 // pred_fallthru
      _
    // Predicated region
    $region10: #{mlp_forward.1} parent=1 // pred_check
      _
    $region11: #{mlp_forward.1} parent=1 // pred_check_branch
      %35 = sbr.rel (0) target = $region13
    $region12: #{mlp_forward.1} parent=1 // pred_region
      %37 = vsyncadd [#allocation5], 0
      %s39 = sshll.u32 %s2, 4
      %s40 = int_to_ptr.hbm [resolvable:$true] %s39
      %s41 = sshll.u32 [#allocation4], 4
      %s42 = int_to_ptr.vmem [resolvable:$true] %s41
      %44 = dma.hbm_to_vmem [thread:$0]  %s40, 64, %s42, [#allocation5]
    $region13: #{mlp_forward.1} parent=1 // pred_fallthru
      _
    // Predicated region
    $region14: #{mlp_forward.1} parent=1 // pred_check
      _
    $region15: #{mlp_forward.1} parent=1 // pred_check_branch
      %46 = sbr.rel (0) target = $region17
    $region16: #{mlp_forward.1} parent=1 // pred_region
      %48 = vsyncadd [#allocation5], 0
      %s49 = sshll.u32 %s3, 4
      %s50 = int_to_ptr.hbm [resolvable:$true] %s49
      %s51 = sshll.u32 [#allocation6], 4
      %s52 = int_to_ptr.vmem [resolvable:$true] %s51
      %57 = dma.hbm_to_vmem [thread:$0]  %s50, 4096, %s52, [#allocation5], 64, 64, 4
    $region17: #{mlp_forward.1} parent=1 // pred_fallthru
      _
    // Predicated region
    $region18: #{mlp_forward.1} parent=1 // pred_check
      _
    $region19: #{mlp_forward.1} parent=1 // pred_check_branch
      %59 = sbr.rel (0) target = $region21
    $region20: #{mlp_forward.1} parent=1 // pred_region
      %61 = vsyncadd [#allocation8], 0
      %s63 = sshll.u32 %s4, 4
      %s64 = int_to_ptr.hbm [resolvable:$true] %s63
      %s65 = sshll.u32 [#allocation7], 4
      %s66 = int_to_ptr.vmem [resolvable:$true] %s65
      %68 = dma.hbm_to_vmem [thread:$0]  %s64, 16, %s66, [#allocation8]
    $region21: #{mlp_forward.1} parent=1 // pred_fallthru
      _
    // Predicated region
    $region22: #{mlp_forward.1} parent=1 // pred_check
      _
    $region23: #{mlp_forward.1} parent=1 // pred_check_branch
      %70 = sbr.rel (0) target = $region25
    $region24: #{mlp_forward.1} parent=1 // pred_region
      %72 = vsyncadd [#allocation8], 0
      %s73 = sshll.u32 %s5, 4
      %s74 = int_to_ptr.hbm [resolvable:$true] %s73
      %s75 = sshll.u32 [#allocation9], 4
      %s76 = int_to_ptr.vmem [resolvable:$true] %s75
      %81 = dma.hbm_to_vmem [thread:$0]  %s74, 4096, %s76, [#allocation8], 256, 256, 16
    $region25: #{mlp_forward.1} parent=1 // pred_fallthru
      _
    // Predicated region
    $region26: #{mlp_forward.1} parent=1 // pred_check
      _
    $region27: #{mlp_forward.1} parent=1 // pred_check_branch
      %83 = sbr.rel (0) target = $region29
    $region28: #{mlp_forward.1} parent=1 // pred_region
      %85 = vsyncadd [#allocation11], 0
      %s87 = sshll.u32 %s6, 4
      %s88 = int_to_ptr.hbm [resolvable:$true] %s87
      %s89 = sshll.u32 [#allocation10], 4
      %s90 = int_to_ptr.vmem [resolvable:$true] %s89
      %92 = dma.hbm_to_vmem [thread:$0]  %s88, 64, %s90, [#allocation11]
    $region29: #{mlp_forward.1} parent=1 // pred_fallthru
      _
    // Predicated region
    $region30: #{mlp_forward.1} parent=1 // pred_check
      _
    $region31: #{mlp_forward.1} parent=1 // pred_check_branch
      %94 = sbr.rel (0) target = $region33
    $region32: #{mlp_forward.1} parent=1 // pred_region
      %96 = vsyncadd [#allocation11], 0
      %s97 = sshll.u32 %s7, 4
      %s98 = int_to_ptr.hbm [resolvable:$true] %s97
      %s99 = sshll.u32 [#allocation12], 4
      %s100 = int_to_ptr.vmem [resolvable:$true] %s99
      %105 = dma.hbm_to_vmem [thread:$0]  %s98, 4096, %s100, [#allocation11], 64, 64, 4
    $region33: #{mlp_forward.1} parent=1 // pred_fallthru
      _
    // Predicated region
    $region34: #{mlp_forward.1} parent=1 // pred_check
      _
    $region35: #{mlp_forward.1} parent=1 // pred_check_branch
      %107 = sbr.rel (0) target = $region37
    $region36: #{mlp_forward.1} parent=1 // pred_region
      %109 = vsyncadd [#allocation14], 0
      %s111 = sshll.u32 %s8, 4
      %s112 = int_to_ptr.hbm [resolvable:$true] %s111
      %s113 = sshll.u32 [#allocation13], 4
      %s114 = int_to_ptr.vmem [resolvable:$true] %s113
      %116 = dma.hbm_to_vmem [thread:$0]  %s112, 16, %s114, [#allocation14]
    $region37: #{mlp_forward.1} parent=1 // pred_fallthru
      _
    // Predicated region
    $region38: #{mlp_forward.1} parent=1 // pred_check
      _
    $region39: #{mlp_forward.1} parent=1 // pred_check_branch
      %118 = sbr.rel (0) target = $region41
    $region40: #{mlp_forward.1} parent=1 // pred_region
      %120 = dma.done [#allocation3], 98304
    $region41: #{mlp_forward.1} parent=1 // pred_fallthru
      _
    // Predicated region
    $region42: #{mlp_forward.1} parent=1 // pred_check
      _
    $region43: #{mlp_forward.1} parent=1 // pred_check_branch
      %122 = sbr.rel (0) target = $region45
    $region44: #{mlp_forward.1} parent=1 // pred_region
      %124 = dma.done [#allocation5], 64
    $region45: #{mlp_forward.1} parent=1 // pred_fallthru
      _
    // Predicated region
    $region46: #{mlp_forward.1} parent=1 // pred_check
      _
    $region47: #{mlp_forward.1} parent=1 // pred_check_branch
      %126 = sbr.rel (0) target = $region49
    $region48: #{mlp_forward.1} parent=1 // pred_region
      %128 = dma.done [#allocation5], 4096
    $region49: #{mlp_forward.1} parent=1 // pred_fallthru
      _
    // Predicated region
    $region50: #{mlp_forward.1} parent=1 // pred_check
      _
    $region51: #{mlp_forward.1} parent=1 // pred_check_branch
      %130 = sbr.rel (0) target = $region53
    $region52: #{mlp_forward.1} parent=1 // pred_region
      %132 = dma.done [#allocation8], 16
    $region53: #{mlp_forward.1} parent=1 // pred_fallthru
      _
    // Predicated region
    $region54: #{mlp_forward.1} parent=1 // pred_check
      _
    $region55: #{mlp_forward.1} parent=1 // pred_check_branch
      %134 = sbr.rel (0) target = $region57
    $region56: #{mlp_forward.1} parent=1 // pred_region
      %136 = dma.done [#allocation8], 4096
    $region57: #{mlp_forward.1} parent=1 // pred_fallthru
      _
    // Predicated region
    $region58: #{mlp_forward.1} parent=1 // pred_check
      _
    $region59: #{mlp_forward.1} parent=1 // pred_check_branch
      %138 = sbr.rel (0) target = $region61
    $region60: #{mlp_forward.1} parent=1 // pred_region
      %140 = dma.done [#allocation11], 64
    $region61: #{mlp_forward.1} parent=1 // pred_fallthru
      _
    // Predicated region
    $region62: #{mlp_forward.1} parent=1 // pred_check
      _
    $region63: #{mlp_forward.1} parent=1 // pred_check_branch
      %142 = sbr.rel (0) target = $region65
    $region64: #{mlp_forward.1} parent=1 // pred_region
      %144 = dma.done [#allocation11], 4096
    $region65: #{mlp_forward.1} parent=1 // pred_fallthru
      _
    // Predicated region
    $region66: #{mlp_forward.1} parent=1 // pred_check
      _
    $region67: #{mlp_forward.1} parent=1 // pred_check_branch
      %146 = sbr.rel (0) target = $region69
    $region68: #{mlp_forward.1} parent=1 // pred_region
      %148 = dma.done [#allocation14], 16
    $region69: #{mlp_forward.1} parent=1 // pred_fallthru
      _
    %v149 = vld [vmem:[%s0] sm:$0xff]
    %v150 = vld [vmem:[%s0 + $0x8] sm:$0xff]
    %v151 = vld [vmem:[%s0 + $0x10] sm:$0xff]
    %v152 = vld [vmem:[%s0 + $0x18] sm:$0xff]
    %v153 = vld [vmem:[%s0 + $0x20] sm:$0xff]
    %v154 = vld [vmem:[%s0 + $0x28] sm:$0xff]
    %v155 = vld [vmem:[%s0 + $0x30] sm:$0xff]
    %v156 = vld [vmem:[%s0 + $0x38] sm:$0xff]
    %v157 = vld [vmem:[%s0 + $0x40] sm:$0xff]
    %v158 = vld [vmem:[%s0 + $0x48] sm:$0xff]
    %v159 = vld [vmem:[%s0 + $0x50] sm:$0xff]
    %v160 = vld [vmem:[%s0 + $0x58] sm:$0xff]
    %v161 = vld [vmem:[#allocation2] sm:$0xff]
    %v162 = vld [vmem:[#allocation2 + $0x8] sm:$0xff]
    %v163 = vld [vmem:[#allocation2 + $0x10] sm:$0xff]
    %v164 = vld [vmem:[#allocation2 + $0x18] sm:$0xff]
    %v165 = vld [vmem:[#allocation2 + $0x20] sm:$0xff]
    %v166 = vld [vmem:[#allocation2 + $0x28] sm:$0xff]
    %v167 = vld [vmem:[#allocation2 + $0x30] sm:$0xff]
    %v168 = vld [vmem:[#allocation2 + $0x38] sm:$0xff]
    %v169 = vld [vmem:[#allocation2 + $0x40] sm:$0xff]
    %v170 = vld [vmem:[#allocation2 + $0x48] sm:$0xff]
    %v171 = vld [vmem:[#allocation2 + $0x50] sm:$0xff]
    %v172 = vld [vmem:[#allocation2 + $0x58] sm:$0xff]
    %v173 = vld [vmem:[#allocation2 + $0x60] sm:$0xff]
    %v174 = vld [vmem:[#allocation2 + $0x68] sm:$0xff]
    %v175 = vld [vmem:[#allocation2 + $0x70] sm:$0xff]
    %v176 = vld [vmem:[#allocation2 + $0x78] sm:$0xff]
    %v177 = vld [vmem:[#allocation2 + $0x80] sm:$0xff]
    %v178 = vld [vmem:[#allocation2 + $0x88] sm:$0xff]
    %v179 = vld [vmem:[#allocation2 + $0x90] sm:$0xff]
    %v180 = vld [vmem:[#allocation2 + $0x98] sm:$0xff]
    %v181 = vld [vmem:[#allocation2 + $0xa0] sm:$0xff]
    %v182 = vld [vmem:[#allocation2 + $0xa8] sm:$0xff]
    %v183 = vld [vmem:[#allocation2 + $0xb0] sm:$0xff]
    %v184 = vld [vmem:[#allocation2 + $0xb8] sm:$0xff]
    %v185 = vld [vmem:[#allocation2 + $0xc0] sm:$0xff]
    %v186 = vld [vmem:[#allocation2 + $0xc8] sm:$0xff]
    %v187 = vld [vmem:[#allocation2 + $0xd0] sm:$0xff]
    %v188 = vld [vmem:[#allocation2 + $0xd8] sm:$0xff]
    %v189 = vld [vmem:[#allocation2 + $0xe0] sm:$0xff]
    %v190 = vld [vmem:[#allocation2 + $0xe8] sm:$0xff]
    %v191 = vld [vmem:[#allocation2 + $0xf0] sm:$0xff]
    %v192 = vld [vmem:[#allocation2 + $0xf8] sm:$0xff]
    %v193 = vld [vmem:[#allocation2 + $0x100] sm:$0xff]
    %v194 = vld [vmem:[#allocation2 + $0x108] sm:$0xff]
    %v195 = vld [vmem:[#allocation2 + $0x110] sm:$0xff]
    %v196 = vld [vmem:[#allocation2 + $0x118] sm:$0xff]
    %v197 = vld [vmem:[#allocation2 + $0x120] sm:$0xff]
    %v198 = vld [vmem:[#allocation2 + $0x128] sm:$0xff]
    %v199 = vld [vmem:[#allocation2 + $0x130] sm:$0xff]
    %v200 = vld [vmem:[#allocation2 + $0x138] sm:$0xff]
    %v201 = vld [vmem:[#allocation2 + $0x140] sm:$0xff]
    %v202 = vld [vmem:[#allocation2 + $0x148] sm:$0xff]
    %v203 = vld [vmem:[#allocation2 + $0x150] sm:$0xff]
    %v204 = vld [vmem:[#allocation2 + $0x158] sm:$0xff]
    %v205 = vld [vmem:[#allocation2 + $0x160] sm:$0xff]
    %v206 = vld [vmem:[#allocation2 + $0x168] sm:$0xff]
    %v207 = vld [vmem:[#allocation2 + $0x170] sm:$0xff]
    %v208 = vld [vmem:[#allocation2 + $0x178] sm:$0xff]
    %v209 = vld [vmem:[#allocation2 + $0x180] sm:$0xff]
    %v210 = vld [vmem:[#allocation2 + $0x188] sm:$0xff]
    %v211 = vld [vmem:[#allocation2 + $0x190] sm:$0xff]
    %v212 = vld [vmem:[#allocation2 + $0x198] sm:$0xff]
    %v213 = vld [vmem:[#allocation2 + $0x1a0] sm:$0xff]
    %v214 = vld [vmem:[#allocation2 + $0x1a8] sm:$0xff]
    %v215 = vld [vmem:[#allocation2 + $0x1b0] sm:$0xff]
    %v216 = vld [vmem:[#allocation2 + $0x1b8] sm:$0xff]
    %v217 = vld [vmem:[#allocation2 + $0x1c0] sm:$0xff]
    %v218 = vld [vmem:[#allocation2 + $0x1c8] sm:$0xff]
    %v219 = vld [vmem:[#allocation2 + $0x1d0] sm:$0xff]
    %v220 = vld [vmem:[#allocation2 + $0x1d8] sm:$0xff]
    %v221 = vld [vmem:[#allocation2 + $0x1e0] sm:$0xff]
    %v222 = vld [vmem:[#allocation2 + $0x1e8] sm:$0xff]
    %v223 = vld [vmem:[#allocation2 + $0x1f0] sm:$0xff]
    %v224 = vld [vmem:[#allocation2 + $0x1f8] sm:$0xff]
    %v225 = vld [vmem:[#allocation2 + $0x200] sm:$0xff]
    %v226 = vld [vmem:[#allocation2 + $0x208] sm:$0xff]
    %v227 = vld [vmem:[#allocation2 + $0x210] sm:$0xff]
    %v228 = vld [vmem:[#allocation2 + $0x218] sm:$0xff]
    %v229 = vld [vmem:[#allocation2 + $0x220] sm:$0xff]
    %v230 = vld [vmem:[#allocation2 + $0x228] sm:$0xff]
    %v231 = vld [vmem:[#allocation2 + $0x230] sm:$0xff]
    %v232 = vld [vmem:[#allocation2 + $0x238] sm:$0xff]
    %v233 = vld [vmem:[#allocation2 + $0x240] sm:$0xff]
    %v234 = vld [vmem:[#allocation2 + $0x248] sm:$0xff]
    %v235 = vld [vmem:[#allocation2 + $0x250] sm:$0xff]
    %v236 = vld [vmem:[#allocation2 + $0x258] sm:$0xff]
    %v237 = vld [vmem:[#allocation2 + $0x260] sm:$0xff]
    %v238 = vld [vmem:[#allocation2 + $0x268] sm:$0xff]
    %v239 = vld [vmem:[#allocation2 + $0x270] sm:$0xff]
    %v240 = vld [vmem:[#allocation2 + $0x278] sm:$0xff]
    %v241 = vld [vmem:[#allocation2 + $0x280] sm:$0xff]
    %v242 = vld [vmem:[#allocation2 + $0x288] sm:$0xff]
    %v243 = vld [vmem:[#allocation2 + $0x290] sm:$0xff]
    %v244 = vld [vmem:[#allocation2 + $0x298] sm:$0xff]
    %v245 = vld [vmem:[#allocation2 + $0x2a0] sm:$0xff]
    %v246 = vld [vmem:[#allocation2 + $0x2a8] sm:$0xff]
    %v247 = vld [vmem:[#allocation2 + $0x2b0] sm:$0xff]
    %v248 = vld [vmem:[#allocation2 + $0x2b8] sm:$0xff]
    %v249 = vld [vmem:[#allocation2 + $0x2c0] sm:$0xff]
    %v250 = vld [vmem:[#allocation2 + $0x2c8] sm:$0xff]
    %v251 = vld [vmem:[#allocation2 + $0x2d0] sm:$0xff]
    %v252 = vld [vmem:[#allocation2 + $0x2d8] sm:$0xff]
    %v253 = vld [vmem:[#allocation2 + $0x2e0] sm:$0xff]
    %v254 = vld [vmem:[#allocation2 + $0x2e8] sm:$0xff]
    %v255 = vld [vmem:[#allocation2 + $0x2f0] sm:$0xff]
    %v256 = vld [vmem:[#allocation2 + $0x2f8] sm:$0xff]
    %v257 = vld [vmem:[#allocation2 + $0x300] sm:$0xff]
    %v258 = vld [vmem:[#allocation2 + $0x308] sm:$0xff]
    %v259 = vld [vmem:[#allocation2 + $0x310] sm:$0xff]
    %v260 = vld [vmem:[#allocation2 + $0x318] sm:$0xff]
    %v261 = vld [vmem:[#allocation2 + $0x320] sm:$0xff]
    %v262 = vld [vmem:[#allocation2 + $0x328] sm:$0xff]
    %v263 = vld [vmem:[#allocation2 + $0x330] sm:$0xff]
    %v264 = vld [vmem:[#allocation2 + $0x338] sm:$0xff]
    %v265 = vld [vmem:[#allocation2 + $0x340] sm:$0xff]
    %v266 = vld [vmem:[#allocation2 + $0x348] sm:$0xff]
    %v267 = vld [vmem:[#allocation2 + $0x350] sm:$0xff]
    %v268 = vld [vmem:[#allocation2 + $0x358] sm:$0xff]
    %v269 = vld [vmem:[#allocation2 + $0x360] sm:$0xff]
    %v270 = vld [vmem:[#allocation2 + $0x368] sm:$0xff]
    %v271 = vld [vmem:[#allocation2 + $0x370] sm:$0xff]
    %v272 = vld [vmem:[#allocation2 + $0x378] sm:$0xff]
    %v273 = vld [vmem:[#allocation2 + $0x380] sm:$0xff]
    %v274 = vld [vmem:[#allocation2 + $0x388] sm:$0xff]
    %v275 = vld [vmem:[#allocation2 + $0x390] sm:$0xff]
    %v276 = vld [vmem:[#allocation2 + $0x398] sm:$0xff]
    %v277 = vld [vmem:[#allocation2 + $0x3a0] sm:$0xff]
    %v278 = vld [vmem:[#allocation2 + $0x3a8] sm:$0xff]
    %v279 = vld [vmem:[#allocation2 + $0x3b0] sm:$0xff]
    %v280 = vld [vmem:[#allocation2 + $0x3b8] sm:$0xff]
    %v281 = vld [vmem:[#allocation2 + $0x3c0] sm:$0xff]
    %v282 = vld [vmem:[#allocation2 + $0x3c8] sm:$0xff]
    %v283 = vld [vmem:[#allocation2 + $0x3d0] sm:$0xff]
    %v284 = vld [vmem:[#allocation2 + $0x3d8] sm:$0xff]
    %v285 = vld [vmem:[#allocation2 + $0x3e0] sm:$0xff]
    %v286 = vld [vmem:[#allocation2 + $0x3e8] sm:$0xff]
    %v287 = vld [vmem:[#allocation2 + $0x3f0] sm:$0xff]
    %v288 = vld [vmem:[#allocation2 + $0x3f8] sm:$0xff]
    %v289 = vld [vmem:[#allocation2 + $0x400] sm:$0xff]
    %v290 = vld [vmem:[#allocation2 + $0x408] sm:$0xff]
    %v291 = vld [vmem:[#allocation2 + $0x410] sm:$0xff]
    %v292 = vld [vmem:[#allocation2 + $0x418] sm:$0xff]
    %v293 = vld [vmem:[#allocation2 + $0x420] sm:$0xff]
    %v294 = vld [vmem:[#allocation2 + $0x428] sm:$0xff]
    %v295 = vld [vmem:[#allocation2 + $0x430] sm:$0xff]
    %v296 = vld [vmem:[#allocation2 + $0x438] sm:$0xff]
    %v297 = vld [vmem:[#allocation2 + $0x440] sm:$0xff]
    %v298 = vld [vmem:[#allocation2 + $0x448] sm:$0xff]
    %v299 = vld [vmem:[#allocation2 + $0x450] sm:$0xff]
    %v300 = vld [vmem:[#allocation2 + $0x458] sm:$0xff]
    %v301 = vld [vmem:[#allocation2 + $0x460] sm:$0xff]
    %v302 = vld [vmem:[#allocation2 + $0x468] sm:$0xff]
    %v303 = vld [vmem:[#allocation2 + $0x470] sm:$0xff]
    %v304 = vld [vmem:[#allocation2 + $0x478] sm:$0xff]
    %v305 = vld [vmem:[#allocation2 + $0x480] sm:$0xff]
    %v306 = vld [vmem:[#allocation2 + $0x488] sm:$0xff]
    %v307 = vld [vmem:[#allocation2 + $0x490] sm:$0xff]
    %v308 = vld [vmem:[#allocation2 + $0x498] sm:$0xff]
    %v309 = vld [vmem:[#allocation2 + $0x4a0] sm:$0xff]
    %v310 = vld [vmem:[#allocation2 + $0x4a8] sm:$0xff]
    %v311 = vld [vmem:[#allocation2 + $0x4b0] sm:$0xff]
    %v312 = vld [vmem:[#allocation2 + $0x4b8] sm:$0xff]
    %v313 = vld [vmem:[#allocation2 + $0x4c0] sm:$0xff]
    %v314 = vld [vmem:[#allocation2 + $0x4c8] sm:$0xff]
    %v315 = vld [vmem:[#allocation2 + $0x4d0] sm:$0xff]
    %v316 = vld [vmem:[#allocation2 + $0x4d8] sm:$0xff]
    %v317 = vld [vmem:[#allocation2 + $0x4e0] sm:$0xff]
    %v318 = vld [vmem:[#allocation2 + $0x4e8] sm:$0xff]
    %v319 = vld [vmem:[#allocation2 + $0x4f0] sm:$0xff]
    %v320 = vld [vmem:[#allocation2 + $0x4f8] sm:$0xff]
    %v321 = vld [vmem:[#allocation2 + $0x500] sm:$0xff]
    %v322 = vld [vmem:[#allocation2 + $0x508] sm:$0xff]
    %v323 = vld [vmem:[#allocation2 + $0x510] sm:$0xff]
    %v324 = vld [vmem:[#allocation2 + $0x518] sm:$0xff]
    %v325 = vld [vmem:[#allocation2 + $0x520] sm:$0xff]
    %v326 = vld [vmem:[#allocation2 + $0x528] sm:$0xff]
    %v327 = vld [vmem:[#allocation2 + $0x530] sm:$0xff]
    %v328 = vld [vmem:[#allocation2 + $0x538] sm:$0xff]
    %v329 = vld [vmem:[#allocation2 + $0x540] sm:$0xff]
    %v330 = vld [vmem:[#allocation2 + $0x548] sm:$0xff]
    %v331 = vld [vmem:[#allocation2 + $0x550] sm:$0xff]
    %v332 = vld [vmem:[#allocation2 + $0x558] sm:$0xff]
    %v333 = vld [vmem:[#allocation2 + $0x560] sm:$0xff]
    %v334 = vld [vmem:[#allocation2 + $0x568] sm:$0xff]
    %v335 = vld [vmem:[#allocation2 + $0x570] sm:$0xff]
    %v336 = vld [vmem:[#allocation2 + $0x578] sm:$0xff]
    %v337 = vld [vmem:[#allocation2 + $0x580] sm:$0xff]
    %v338 = vld [vmem:[#allocation2 + $0x588] sm:$0xff]
    %v339 = vld [vmem:[#allocation2 + $0x590] sm:$0xff]
    %v340 = vld [vmem:[#allocation2 + $0x598] sm:$0xff]
    %v341 = vld [vmem:[#allocation2 + $0x5a0] sm:$0xff]
    %v342 = vld [vmem:[#allocation2 + $0x5a8] sm:$0xff]
    %v343 = vld [vmem:[#allocation2 + $0x5b0] sm:$0xff]
    %v344 = vld [vmem:[#allocation2 + $0x5b8] sm:$0xff]
    %v345 = vld [vmem:[#allocation2 + $0x5c0] sm:$0xff]
    %v346 = vld [vmem:[#allocation2 + $0x5c8] sm:$0xff]
    %v347 = vld [vmem:[#allocation2 + $0x5d0] sm:$0xff]
    %v348 = vld [vmem:[#allocation2 + $0x5d8] sm:$0xff]
    %v349 = vld [vmem:[#allocation2 + $0x5e0] sm:$0xff]
    %v350 = vld [vmem:[#allocation2 + $0x5e8] sm:$0xff]
    %v351 = vld [vmem:[#allocation2 + $0x5f0] sm:$0xff]
    %v352 = vld [vmem:[#allocation2 + $0x5f8] sm:$0xff]
    %v353 = vld [vmem:[#allocation2 + $0x600] sm:$0xff]
    %v354 = vld [vmem:[#allocation2 + $0x608] sm:$0xff]
    %v355 = vld [vmem:[#allocation2 + $0x610] sm:$0xff]
    %v356 = vld [vmem:[#allocation2 + $0x618] sm:$0xff]
    %v357 = vld [vmem:[#allocation2 + $0x620] sm:$0xff]
    %v358 = vld [vmem:[#allocation2 + $0x628] sm:$0xff]
    %v359 = vld [vmem:[#allocation2 + $0x630] sm:$0xff]
    %v360 = vld [vmem:[#allocation2 + $0x638] sm:$0xff]
    %v361 = vld [vmem:[#allocation2 + $0x640] sm:$0xff]
    %v362 = vld [vmem:[#allocation2 + $0x648] sm:$0xff]
    %v363 = vld [vmem:[#allocation2 + $0x650] sm:$0xff]
    %v364 = vld [vmem:[#allocation2 + $0x658] sm:$0xff]
    %v365 = vld [vmem:[#allocation2 + $0x660] sm:$0xff]
    %v366 = vld [vmem:[#allocation2 + $0x668] sm:$0xff]
    %v367 = vld [vmem:[#allocation2 + $0x670] sm:$0xff]
    %v368 = vld [vmem:[#allocation2 + $0x678] sm:$0xff]
    %v369 = vld [vmem:[#allocation2 + $0x680] sm:$0xff]
    %v370 = vld [vmem:[#allocation2 + $0x688] sm:$0xff]
    %v371 = vld [vmem:[#allocation2 + $0x690] sm:$0xff]
    %v372 = vld [vmem:[#allocation2 + $0x698] sm:$0xff]
    %v373 = vld [vmem:[#allocation2 + $0x6a0] sm:$0xff]
    %v374 = vld [vmem:[#allocation2 + $0x6a8] sm:$0xff]
    %v375 = vld [vmem:[#allocation2 + $0x6b0] sm:$0xff]
    %v376 = vld [vmem:[#allocation2 + $0x6b8] sm:$0xff]
    %v377 = vld [vmem:[#allocation2 + $0x6c0] sm:$0xff]
    %v378 = vld [vmem:[#allocation2 + $0x6c8] sm:$0xff]
    %v379 = vld [vmem:[#allocation2 + $0x6d0] sm:$0xff]
    %v380 = vld [vmem:[#allocation2 + $0x6d8] sm:$0xff]
    %v381 = vld [vmem:[#allocation2 + $0x6e0] sm:$0xff]
    %v382 = vld [vmem:[#allocation2 + $0x6e8] sm:$0xff]
    %v383 = vld [vmem:[#allocation2 + $0x6f0] sm:$0xff]
    %v384 = vld [vmem:[#allocation2 + $0x6f8] sm:$0xff]
    %v385 = vld [vmem:[#allocation2 + $0x700] sm:$0xff]
    %v386 = vld [vmem:[#allocation2 + $0x708] sm:$0xff]
    %v387 = vld [vmem:[#allocation2 + $0x710] sm:$0xff]
    %v388 = vld [vmem:[#allocation2 + $0x718] sm:$0xff]
    %v389 = vld [vmem:[#allocation2 + $0x720] sm:$0xff]
    %v390 = vld [vmem:[#allocation2 + $0x728] sm:$0xff]
    %v391 = vld [vmem:[#allocation2 + $0x730] sm:$0xff]
    %v392 = vld [vmem:[#allocation2 + $0x738] sm:$0xff]
    %v393 = vld [vmem:[#allocation2 + $0x740] sm:$0xff]
    %v394 = vld [vmem:[#allocation2 + $0x748] sm:$0xff]
    %v395 = vld [vmem:[#allocation2 + $0x750] sm:$0xff]
    %v396 = vld [vmem:[#allocation2 + $0x758] sm:$0xff]
    %v397 = vld [vmem:[#allocation2 + $0x760] sm:$0xff]
    %v398 = vld [vmem:[#allocation2 + $0x768] sm:$0xff]
    %v399 = vld [vmem:[#allocation2 + $0x770] sm:$0xff]
    %v400 = vld [vmem:[#allocation2 + $0x778] sm:$0xff]
    %v401 = vld [vmem:[#allocation2 + $0x780] sm:$0xff]
    %v402 = vld [vmem:[#allocation2 + $0x788] sm:$0xff]
    %v403 = vld [vmem:[#allocation2 + $0x790] sm:$0xff]
    %v404 = vld [vmem:[#allocation2 + $0x798] sm:$0xff]
    %v405 = vld [vmem:[#allocation2 + $0x7a0] sm:$0xff]
    %v406 = vld [vmem:[#allocation2 + $0x7a8] sm:$0xff]
    %v407 = vld [vmem:[#allocation2 + $0x7b0] sm:$0xff]
    %v408 = vld [vmem:[#allocation2 + $0x7b8] sm:$0xff]
    %v409 = vld [vmem:[#allocation2 + $0x7c0] sm:$0xff]
    %v410 = vld [vmem:[#allocation2 + $0x7c8] sm:$0xff]
    %v411 = vld [vmem:[#allocation2 + $0x7d0] sm:$0xff]
    %v412 = vld [vmem:[#allocation2 + $0x7d8] sm:$0xff]
    %v413 = vld [vmem:[#allocation2 + $0x7e0] sm:$0xff]
    %v414 = vld [vmem:[#allocation2 + $0x7e8] sm:$0xff]
    %v415 = vld [vmem:[#allocation2 + $0x7f0] sm:$0xff]
    %v416 = vld [vmem:[#allocation2 + $0x7f8] sm:$0xff]
    %v417 = vld [vmem:[#allocation2 + $0x800] sm:$0xff]
    %v418 = vld [vmem:[#allocation2 + $0x808] sm:$0xff]
    %v419 = vld [vmem:[#allocation2 + $0x810] sm:$0xff]
    %v420 = vld [vmem:[#allocation2 + $0x818] sm:$0xff]
    %v421 = vld [vmem:[#allocation2 + $0x820] sm:$0xff]
    %v422 = vld [vmem:[#allocation2 + $0x828] sm:$0xff]
    %v423 = vld [vmem:[#allocation2 + $0x830] sm:$0xff]
    %v424 = vld [vmem:[#allocation2 + $0x838] sm:$0xff]
    %v425 = vld [vmem:[#allocation2 + $0x840] sm:$0xff]
    %v426 = vld [vmem:[#allocation2 + $0x848] sm:$0xff]
    %v427 = vld [vmem:[#allocation2 + $0x850] sm:$0xff]
    %v428 = vld [vmem:[#allocation2 + $0x858] sm:$0xff]
    %v429 = vld [vmem:[#allocation2 + $0x860] sm:$0xff]
    %v430 = vld [vmem:[#allocation2 + $0x868] sm:$0xff]
    %v431 = vld [vmem:[#allocation2 + $0x870] sm:$0xff]
    %v432 = vld [vmem:[#allocation2 + $0x878] sm:$0xff]
    %v433 = vld [vmem:[#allocation2 + $0x880] sm:$0xff]
    %v434 = vld [vmem:[#allocation2 + $0x888] sm:$0xff]
    %v435 = vld [vmem:[#allocation2 + $0x890] sm:$0xff]
    %v436 = vld [vmem:[#allocation2 + $0x898] sm:$0xff]
    %v437 = vld [vmem:[#allocation2 + $0x8a0] sm:$0xff]
    %v438 = vld [vmem:[#allocation2 + $0x8a8] sm:$0xff]
    %v439 = vld [vmem:[#allocation2 + $0x8b0] sm:$0xff]
    %v440 = vld [vmem:[#allocation2 + $0x8b8] sm:$0xff]
    %v441 = vld [vmem:[#allocation2 + $0x8c0] sm:$0xff]
    %v442 = vld [vmem:[#allocation2 + $0x8c8] sm:$0xff]
    %v443 = vld [vmem:[#allocation2 + $0x8d0] sm:$0xff]
    %v444 = vld [vmem:[#allocation2 + $0x8d8] sm:$0xff]
    %v445 = vld [vmem:[#allocation2 + $0x8e0] sm:$0xff]
    %v446 = vld [vmem:[#allocation2 + $0x8e8] sm:$0xff]
    %v447 = vld [vmem:[#allocation2 + $0x8f0] sm:$0xff]
    %v448 = vld [vmem:[#allocation2 + $0x8f8] sm:$0xff]
    %v449 = vld [vmem:[#allocation2 + $0x900] sm:$0xff]
    %v450 = vld [vmem:[#allocation2 + $0x908] sm:$0xff]
    %v451 = vld [vmem:[#allocation2 + $0x910] sm:$0xff]
    %v452 = vld [vmem:[#allocation2 + $0x918] sm:$0xff]
    %v453 = vld [vmem:[#allocation2 + $0x920] sm:$0xff]
    %v454 = vld [vmem:[#allocation2 + $0x928] sm:$0xff]
    %v455 = vld [vmem:[#allocation2 + $0x930] sm:$0xff]
    %v456 = vld [vmem:[#allocation2 + $0x938] sm:$0xff]
    %v457 = vld [vmem:[#allocation2 + $0x940] sm:$0xff]
    %v458 = vld [vmem:[#allocation2 + $0x948] sm:$0xff]
    %v459 = vld [vmem:[#allocation2 + $0x950] sm:$0xff]
    %v460 = vld [vmem:[#allocation2 + $0x958] sm:$0xff]
    %v461 = vld [vmem:[#allocation2 + $0x960] sm:$0xff]
    %v462 = vld [vmem:[#allocation2 + $0x968] sm:$0xff]
    %v463 = vld [vmem:[#allocation2 + $0x970] sm:$0xff]
    %v464 = vld [vmem:[#allocation2 + $0x978] sm:$0xff]
    %v465 = vld [vmem:[#allocation2 + $0x980] sm:$0xff]
    %v466 = vld [vmem:[#allocation2 + $0x988] sm:$0xff]
    %v467 = vld [vmem:[#allocation2 + $0x990] sm:$0xff]
    %v468 = vld [vmem:[#allocation2 + $0x998] sm:$0xff]
    %v469 = vld [vmem:[#allocation2 + $0x9a0] sm:$0xff]
    %v470 = vld [vmem:[#allocation2 + $0x9a8] sm:$0xff]
    %v471 = vld [vmem:[#allocation2 + $0x9b0] sm:$0xff]
    %v472 = vld [vmem:[#allocation2 + $0x9b8] sm:$0xff]
    %v473 = vld [vmem:[#allocation2 + $0x9c0] sm:$0xff]
    %v474 = vld [vmem:[#allocation2 + $0x9c8] sm:$0xff]
    %v475 = vld [vmem:[#allocation2 + $0x9d0] sm:$0xff]
    %v476 = vld [vmem:[#allocation2 + $0x9d8] sm:$0xff]
    %v477 = vld [vmem:[#allocation2 + $0x9e0] sm:$0xff]
    %v478 = vld [vmem:[#allocation2 + $0x9e8] sm:$0xff]
    %v479 = vld [vmem:[#allocation2 + $0x9f0] sm:$0xff]
    %v480 = vld [vmem:[#allocation2 + $0x9f8] sm:$0xff]
    %v481 = vld [vmem:[#allocation2 + $0xa00] sm:$0xff]
    %v482 = vld [vmem:[#allocation2 + $0xa08] sm:$0xff]
    %v483 = vld [vmem:[#allocation2 + $0xa10] sm:$0xff]
    %v484 = vld [vmem:[#allocation2 + $0xa18] sm:$0xff]
    %v485 = vld [vmem:[#allocation2 + $0xa20] sm:$0xff]
    %v486 = vld [vmem:[#allocation2 + $0xa28] sm:$0xff]
    %v487 = vld [vmem:[#allocation2 + $0xa30] sm:$0xff]
    %v488 = vld [vmem:[#allocation2 + $0xa38] sm:$0xff]
    %v489 = vld [vmem:[#allocation2 + $0xa40] sm:$0xff]
    %v490 = vld [vmem:[#allocation2 + $0xa48] sm:$0xff]
    %v491 = vld [vmem:[#allocation2 + $0xa50] sm:$0xff]
    %v492 = vld [vmem:[#allocation2 + $0xa58] sm:$0xff]
    %v493 = vld [vmem:[#allocation2 + $0xa60] sm:$0xff]
    %v494 = vld [vmem:[#allocation2 + $0xa68] sm:$0xff]
    %v495 = vld [vmem:[#allocation2 + $0xa70] sm:$0xff]
    %v496 = vld [vmem:[#allocation2 + $0xa78] sm:$0xff]
    %v497 = vld [vmem:[#allocation2 + $0xa80] sm:$0xff]
    %v498 = vld [vmem:[#allocation2 + $0xa88] sm:$0xff]
    %v499 = vld [vmem:[#allocation2 + $0xa90] sm:$0xff]
    %v500 = vld [vmem:[#allocation2 + $0xa98] sm:$0xff]
    %v501 = vld [vmem:[#allocation2 + $0xaa0] sm:$0xff]
    %v502 = vld [vmem:[#allocation2 + $0xaa8] sm:$0xff]
    %v503 = vld [vmem:[#allocation2 + $0xab0] sm:$0xff]
    %v504 = vld [vmem:[#allocation2 + $0xab8] sm:$0xff]
    %v505 = vld [vmem:[#allocation2 + $0xac0] sm:$0xff]
    %v506 = vld [vmem:[#allocation2 + $0xac8] sm:$0xff]
    %v507 = vld [vmem:[#allocation2 + $0xad0] sm:$0xff]
    %v508 = vld [vmem:[#allocation2 + $0xad8] sm:$0xff]
    %v509 = vld [vmem:[#allocation2 + $0xae0] sm:$0xff]
    %v510 = vld [vmem:[#allocation2 + $0xae8] sm:$0xff]
    %v511 = vld [vmem:[#allocation2 + $0xaf0] sm:$0xff]
    %v512 = vld [vmem:[#allocation2 + $0xaf8] sm:$0xff]
    %v513 = vld [vmem:[#allocation2 + $0xb00] sm:$0xff]
    %v514 = vld [vmem:[#allocation2 + $0xb08] sm:$0xff]
    %v515 = vld [vmem:[#allocation2 + $0xb10] sm:$0xff]
    %v516 = vld [vmem:[#allocation2 + $0xb18] sm:$0xff]
    %v517 = vld [vmem:[#allocation2 + $0xb20] sm:$0xff]
    %v518 = vld [vmem:[#allocation2 + $0xb28] sm:$0xff]
    %v519 = vld [vmem:[#allocation2 + $0xb30] sm:$0xff]
    %v520 = vld [vmem:[#allocation2 + $0xb38] sm:$0xff]
    %v521 = vld [vmem:[#allocation2 + $0xb40] sm:$0xff]
    %v522 = vld [vmem:[#allocation2 + $0xb48] sm:$0xff]
    %v523 = vld [vmem:[#allocation2 + $0xb50] sm:$0xff]
    %v524 = vld [vmem:[#allocation2 + $0xb58] sm:$0xff]
    %v525 = vld [vmem:[#allocation2 + $0xb60] sm:$0xff]
    %v526 = vld [vmem:[#allocation2 + $0xb68] sm:$0xff]
    %v527 = vld [vmem:[#allocation2 + $0xb70] sm:$0xff]
    %v528 = vld [vmem:[#allocation2 + $0xb78] sm:$0xff]
    %v529 = vld [vmem:[#allocation2 + $0xb80] sm:$0xff]
    %v530 = vld [vmem:[#allocation2 + $0xb88] sm:$0xff]
    %v531 = vld [vmem:[#allocation2 + $0xb90] sm:$0xff]
    %v532 = vld [vmem:[#allocation2 + $0xb98] sm:$0xff]
    %v533 = vld [vmem:[#allocation2 + $0xba0] sm:$0xff]
    %v534 = vld [vmem:[#allocation2 + $0xba8] sm:$0xff]
    %v535 = vld [vmem:[#allocation2 + $0xbb0] sm:$0xff]
    %v536 = vld [vmem:[#allocation2 + $0xbb8] sm:$0xff]
    %v537 = vld [vmem:[#allocation2 + $0xbc0] sm:$0xff]
    %v538 = vld [vmem:[#allocation2 + $0xbc8] sm:$0xff]
    %v539 = vld [vmem:[#allocation2 + $0xbd0] sm:$0xff]
    %v540 = vld [vmem:[#allocation2 + $0xbd8] sm:$0xff]
    %v541 = vld [vmem:[#allocation2 + $0xbe0] sm:$0xff]
    %v542 = vld [vmem:[#allocation2 + $0xbe8] sm:$0xff]
    %v543 = vld [vmem:[#allocation2 + $0xbf0] sm:$0xff]
    %v544 = vld [vmem:[#allocation2 + $0xbf8] sm:$0xff]
    %v545 = vld [vmem:[#allocation2 + $0xc00] sm:$0xff]
    %v546 = vld [vmem:[#allocation2 + $0xc08] sm:$0xff]
    %v547 = vld [vmem:[#allocation2 + $0xc10] sm:$0xff]
    %v548 = vld [vmem:[#allocation2 + $0xc18] sm:$0xff]
    %v549 = vld [vmem:[#allocation2 + $0xc20] sm:$0xff]
    %v550 = vld [vmem:[#allocation2 + $0xc28] sm:$0xff]
    %v551 = vld [vmem:[#allocation2 + $0xc30] sm:$0xff]
    %v552 = vld [vmem:[#allocation2 + $0xc38] sm:$0xff]
    %v553 = vld [vmem:[#allocation2 + $0xc40] sm:$0xff]
    %v554 = vld [vmem:[#allocation2 + $0xc48] sm:$0xff]
    %v555 = vld [vmem:[#allocation2 + $0xc50] sm:$0xff]
    %v556 = vld [vmem:[#allocation2 + $0xc58] sm:$0xff]
    %v557 = vld [vmem:[#allocation2 + $0xc60] sm:$0xff]
    %v558 = vld [vmem:[#allocation2 + $0xc68] sm:$0xff]
    %v559 = vld [vmem:[#allocation2 + $0xc70] sm:$0xff]
    %v560 = vld [vmem:[#allocation2 + $0xc78] sm:$0xff]
    %v561 = vld [vmem:[#allocation2 + $0xc80] sm:$0xff]
    %v562 = vld [vmem:[#allocation2 + $0xc88] sm:$0xff]
    %v563 = vld [vmem:[#allocation2 + $0xc90] sm:$0xff]
    %v564 = vld [vmem:[#allocation2 + $0xc98] sm:$0xff]
    %v565 = vld [vmem:[#allocation2 + $0xca0] sm:$0xff]
    %v566 = vld [vmem:[#allocation2 + $0xca8] sm:$0xff]
    %v567 = vld [vmem:[#allocation2 + $0xcb0] sm:$0xff]
    %v568 = vld [vmem:[#allocation2 + $0xcb8] sm:$0xff]
    %v569 = vld [vmem:[#allocation2 + $0xcc0] sm:$0xff]
    %v570 = vld [vmem:[#allocation2 + $0xcc8] sm:$0xff]
    %v571 = vld [vmem:[#allocation2 + $0xcd0] sm:$0xff]
    %v572 = vld [vmem:[#allocation2 + $0xcd8] sm:$0xff]
    %v573 = vld [vmem:[#allocation2 + $0xce0] sm:$0xff]
    %v574 = vld [vmem:[#allocation2 + $0xce8] sm:$0xff]
    %v575 = vld [vmem:[#allocation2 + $0xcf0] sm:$0xff]
    %v576 = vld [vmem:[#allocation2 + $0xcf8] sm:$0xff]
    %v577 = vld [vmem:[#allocation2 + $0xd00] sm:$0xff]
    %v578 = vld [vmem:[#allocation2 + $0xd08] sm:$0xff]
    %v579 = vld [vmem:[#allocation2 + $0xd10] sm:$0xff]
    %v580 = vld [vmem:[#allocation2 + $0xd18] sm:$0xff]
    %v581 = vld [vmem:[#allocation2 + $0xd20] sm:$0xff]
    %v582 = vld [vmem:[#allocation2 + $0xd28] sm:$0xff]
    %v583 = vld [vmem:[#allocation2 + $0xd30] sm:$0xff]
    %v584 = vld [vmem:[#allocation2 + $0xd38] sm:$0xff]
    %v585 = vld [vmem:[#allocation2 + $0xd40] sm:$0xff]
    %v586 = vld [vmem:[#allocation2 + $0xd48] sm:$0xff]
    %v587 = vld [vmem:[#allocation2 + $0xd50] sm:$0xff]
    %v588 = vld [vmem:[#allocation2 + $0xd58] sm:$0xff]
    %v589 = vld [vmem:[#allocation2 + $0xd60] sm:$0xff]
    %v590 = vld [vmem:[#allocation2 + $0xd68] sm:$0xff]
    %v591 = vld [vmem:[#allocation2 + $0xd70] sm:$0xff]
    %v592 = vld [vmem:[#allocation2 + $0xd78] sm:$0xff]
    %v593 = vld [vmem:[#allocation2 + $0xd80] sm:$0xff]
    %v594 = vld [vmem:[#allocation2 + $0xd88] sm:$0xff]
    %v595 = vld [vmem:[#allocation2 + $0xd90] sm:$0xff]
    %v596 = vld [vmem:[#allocation2 + $0xd98] sm:$0xff]
    %v597 = vld [vmem:[#allocation2 + $0xda0] sm:$0xff]
    %v598 = vld [vmem:[#allocation2 + $0xda8] sm:$0xff]
    %v599 = vld [vmem:[#allocation2 + $0xdb0] sm:$0xff]
    %v600 = vld [vmem:[#allocation2 + $0xdb8] sm:$0xff]
    %v601 = vld [vmem:[#allocation2 + $0xdc0] sm:$0xff]
    %v602 = vld [vmem:[#allocation2 + $0xdc8] sm:$0xff]
    %v603 = vld [vmem:[#allocation2 + $0xdd0] sm:$0xff]
    %v604 = vld [vmem:[#allocation2 + $0xdd8] sm:$0xff]
    %v605 = vld [vmem:[#allocation2 + $0xde0] sm:$0xff]
    %v606 = vld [vmem:[#allocation2 + $0xde8] sm:$0xff]
    %v607 = vld [vmem:[#allocation2 + $0xdf0] sm:$0xff]
    %v608 = vld [vmem:[#allocation2 + $0xdf8] sm:$0xff]
    %v609 = vld [vmem:[#allocation2 + $0xe00] sm:$0xff]
    %v610 = vld [vmem:[#allocation2 + $0xe08] sm:$0xff]
    %v611 = vld [vmem:[#allocation2 + $0xe10] sm:$0xff]
    %v612 = vld [vmem:[#allocation2 + $0xe18] sm:$0xff]
    %v613 = vld [vmem:[#allocation2 + $0xe20] sm:$0xff]
    %v614 = vld [vmem:[#allocation2 + $0xe28] sm:$0xff]
    %v615 = vld [vmem:[#allocation2 + $0xe30] sm:$0xff]
    %v616 = vld [vmem:[#allocation2 + $0xe38] sm:$0xff]
    %v617 = vld [vmem:[#allocation2 + $0xe40] sm:$0xff]
    %v618 = vld [vmem:[#allocation2 + $0xe48] sm:$0xff]
    %v619 = vld [vmem:[#allocation2 + $0xe50] sm:$0xff]
    %v620 = vld [vmem:[#allocation2 + $0xe58] sm:$0xff]
    %v621 = vld [vmem:[#allocation2 + $0xe60] sm:$0xff]
    %v622 = vld [vmem:[#allocation2 + $0xe68] sm:$0xff]
    %v623 = vld [vmem:[#allocation2 + $0xe70] sm:$0xff]
    %v624 = vld [vmem:[#allocation2 + $0xe78] sm:$0xff]
    %v625 = vld [vmem:[#allocation2 + $0xe80] sm:$0xff]
    %v626 = vld [vmem:[#allocation2 + $0xe88] sm:$0xff]
    %v627 = vld [vmem:[#allocation2 + $0xe90] sm:$0xff]
    %v628 = vld [vmem:[#allocation2 + $0xe98] sm:$0xff]
    %v629 = vld [vmem:[#allocation2 + $0xea0] sm:$0xff]
    %v630 = vld [vmem:[#allocation2 + $0xea8] sm:$0xff]
    %v631 = vld [vmem:[#allocation2 + $0xeb0] sm:$0xff]
    %v632 = vld [vmem:[#allocation2 + $0xeb8] sm:$0xff]
    %v633 = vld [vmem:[#allocation2 + $0xec0] sm:$0xff]
    %v634 = vld [vmem:[#allocation2 + $0xec8] sm:$0xff]
    %v635 = vld [vmem:[#allocation2 + $0xed0] sm:$0xff]
    %v636 = vld [vmem:[#allocation2 + $0xed8] sm:$0xff]
    %v637 = vld [vmem:[#allocation2 + $0xee0] sm:$0xff]
    %v638 = vld [vmem:[#allocation2 + $0xee8] sm:$0xff]
    %v639 = vld [vmem:[#allocation2 + $0xef0] sm:$0xff]
    %v640 = vld [vmem:[#allocation2 + $0xef8] sm:$0xff]
    %v641 = vld [vmem:[#allocation2 + $0xf00] sm:$0xff]
    %v642 = vld [vmem:[#allocation2 + $0xf08] sm:$0xff]
    %v643 = vld [vmem:[#allocation2 + $0xf10] sm:$0xff]
    %v644 = vld [vmem:[#allocation2 + $0xf18] sm:$0xff]
    %v645 = vld [vmem:[#allocation2 + $0xf20] sm:$0xff]
    %v646 = vld [vmem:[#allocation2 + $0xf28] sm:$0xff]
    %v647 = vld [vmem:[#allocation2 + $0xf30] sm:$0xff]
    %v648 = vld [vmem:[#allocation2 + $0xf38] sm:$0xff]
    %v649 = vld [vmem:[#allocation2 + $0xf40] sm:$0xff]
    %v650 = vld [vmem:[#allocation2 + $0xf48] sm:$0xff]
    %v651 = vld [vmem:[#allocation2 + $0xf50] sm:$0xff]
    %v652 = vld [vmem:[#allocation2 + $0xf58] sm:$0xff]
    %v653 = vld [vmem:[#allocation2 + $0xf60] sm:$0xff]
    %v654 = vld [vmem:[#allocation2 + $0xf68] sm:$0xff]
    %v655 = vld [vmem:[#allocation2 + $0xf70] sm:$0xff]
    %v656 = vld [vmem:[#allocation2 + $0xf78] sm:$0xff]
    %v657 = vld [vmem:[#allocation2 + $0xf80] sm:$0xff]
    %v658 = vld [vmem:[#allocation2 + $0xf88] sm:$0xff]
    %v659 = vld [vmem:[#allocation2 + $0xf90] sm:$0xff]
    %v660 = vld [vmem:[#allocation2 + $0xf98] sm:$0xff]
    %v661 = vld [vmem:[#allocation2 + $0xfa0] sm:$0xff]
    %v662 = vld [vmem:[#allocation2 + $0xfa8] sm:$0xff]
    %v663 = vld [vmem:[#allocation2 + $0xfb0] sm:$0xff]
    %v664 = vld [vmem:[#allocation2 + $0xfb8] sm:$0xff]
    %v665 = vld [vmem:[#allocation2 + $0xfc0] sm:$0xff]
    %v666 = vld [vmem:[#allocation2 + $0xfc8] sm:$0xff]
    %v667 = vld [vmem:[#allocation2 + $0xfd0] sm:$0xff]
    %v668 = vld [vmem:[#allocation2 + $0xfd8] sm:$0xff]
    %v669 = vld [vmem:[#allocation2 + $0xfe0] sm:$0xff]
    %v670 = vld [vmem:[#allocation2 + $0xfe8] sm:$0xff]
    %v671 = vld [vmem:[#allocation2 + $0xff0] sm:$0xff]
    %v672 = vld [vmem:[#allocation2 + $0xff8] sm:$0xff]
    %v673 = vld [vmem:[#allocation2 + $0x1000] sm:$0xff]
    %v674 = vld [vmem:[#allocation2 + $0x1008] sm:$0xff]
    %v675 = vld [vmem:[#allocation2 + $0x1010] sm:$0xff]
    %v676 = vld [vmem:[#allocation2 + $0x1018] sm:$0xff]
    %v677 = vld [vmem:[#allocation2 + $0x1020] sm:$0xff]
    %v678 = vld [vmem:[#allocation2 + $0x1028] sm:$0xff]
    %v679 = vld [vmem:[#allocation2 + $0x1030] sm:$0xff]
    %v680 = vld [vmem:[#allocation2 + $0x1038] sm:$0xff]
    %v681 = vld [vmem:[#allocation2 + $0x1040] sm:$0xff]
    %v682 = vld [vmem:[#allocation2 + $0x1048] sm:$0xff]
    %v683 = vld [vmem:[#allocation2 + $0x1050] sm:$0xff]
    %v684 = vld [vmem:[#allocation2 + $0x1058] sm:$0xff]
    %v685 = vld [vmem:[#allocation2 + $0x1060] sm:$0xff]
    %v686 = vld [vmem:[#allocation2 + $0x1068] sm:$0xff]
    %v687 = vld [vmem:[#allocation2 + $0x1070] sm:$0xff]
    %v688 = vld [vmem:[#allocation2 + $0x1078] sm:$0xff]
    %v689 = vld [vmem:[#allocation2 + $0x1080] sm:$0xff]
    %v690 = vld [vmem:[#allocation2 + $0x1088] sm:$0xff]
    %v691 = vld [vmem:[#allocation2 + $0x1090] sm:$0xff]
    %v692 = vld [vmem:[#allocation2 + $0x1098] sm:$0xff]
    %v693 = vld [vmem:[#allocation2 + $0x10a0] sm:$0xff]
    %v694 = vld [vmem:[#allocation2 + $0x10a8] sm:$0xff]
    %v695 = vld [vmem:[#allocation2 + $0x10b0] sm:$0xff]
    %v696 = vld [vmem:[#allocation2 + $0x10b8] sm:$0xff]
    %v697 = vld [vmem:[#allocation2 + $0x10c0] sm:$0xff]
    %v698 = vld [vmem:[#allocation2 + $0x10c8] sm:$0xff]
    %v699 = vld [vmem:[#allocation2 + $0x10d0] sm:$0xff]
    %v700 = vld [vmem:[#allocation2 + $0x10d8] sm:$0xff]
    %v701 = vld [vmem:[#allocation2 + $0x10e0] sm:$0xff]
    %v702 = vld [vmem:[#allocation2 + $0x10e8] sm:$0xff]
    %v703 = vld [vmem:[#allocation2 + $0x10f0] sm:$0xff]
    %v704 = vld [vmem:[#allocation2 + $0x10f8] sm:$0xff]
    %v705 = vld [vmem:[#allocation2 + $0x1100] sm:$0xff]
    %v706 = vld [vmem:[#allocation2 + $0x1108] sm:$0xff]
    %v707 = vld [vmem:[#allocation2 + $0x1110] sm:$0xff]
    %v708 = vld [vmem:[#allocation2 + $0x1118] sm:$0xff]
    %v709 = vld [vmem:[#allocation2 + $0x1120] sm:$0xff]
    %v710 = vld [vmem:[#allocation2 + $0x1128] sm:$0xff]
    %v711 = vld [vmem:[#allocation2 + $0x1130] sm:$0xff]
    %v712 = vld [vmem:[#allocation2 + $0x1138] sm:$0xff]
    %v713 = vld [vmem:[#allocation2 + $0x1140] sm:$0xff]
    %v714 = vld [vmem:[#allocation2 + $0x1148] sm:$0xff]
    %v715 = vld [vmem:[#allocation2 + $0x1150] sm:$0xff]
    %v716 = vld [vmem:[#allocation2 + $0x1158] sm:$0xff]
    %v717 = vld [vmem:[#allocation2 + $0x1160] sm:$0xff]
    %v718 = vld [vmem:[#allocation2 + $0x1168] sm:$0xff]
    %v719 = vld [vmem:[#allocation2 + $0x1170] sm:$0xff]
    %v720 = vld [vmem:[#allocation2 + $0x1178] sm:$0xff]
    %v721 = vld [vmem:[#allocation2 + $0x1180] sm:$0xff]
    %v722 = vld [vmem:[#allocation2 + $0x1188] sm:$0xff]
    %v723 = vld [vmem:[#allocation2 + $0x1190] sm:$0xff]
    %v724 = vld [vmem:[#allocation2 + $0x1198] sm:$0xff]
    %v725 = vld [vmem:[#allocation2 + $0x11a0] sm:$0xff]
    %v726 = vld [vmem:[#allocation2 + $0x11a8] sm:$0xff]
    %v727 = vld [vmem:[#allocation2 + $0x11b0] sm:$0xff]
    %v728 = vld [vmem:[#allocation2 + $0x11b8] sm:$0xff]
    %v729 = vld [vmem:[#allocation2 + $0x11c0] sm:$0xff]
    %v730 = vld [vmem:[#allocation2 + $0x11c8] sm:$0xff]
    %v731 = vld [vmem:[#allocation2 + $0x11d0] sm:$0xff]
    %v732 = vld [vmem:[#allocation2 + $0x11d8] sm:$0xff]
    %v733 = vld [vmem:[#allocation2 + $0x11e0] sm:$0xff]
    %v734 = vld [vmem:[#allocation2 + $0x11e8] sm:$0xff]
    %v735 = vld [vmem:[#allocation2 + $0x11f0] sm:$0xff]
    %v736 = vld [vmem:[#allocation2 + $0x11f8] sm:$0xff]
    %v737 = vld [vmem:[#allocation2 + $0x1200] sm:$0xff]
    %v738 = vld [vmem:[#allocation2 + $0x1208] sm:$0xff]
    %v739 = vld [vmem:[#allocation2 + $0x1210] sm:$0xff]
    %v740 = vld [vmem:[#allocation2 + $0x1218] sm:$0xff]
    %v741 = vld [vmem:[#allocation2 + $0x1220] sm:$0xff]
    %v742 = vld [vmem:[#allocation2 + $0x1228] sm:$0xff]
    %v743 = vld [vmem:[#allocation2 + $0x1230] sm:$0xff]
    %v744 = vld [vmem:[#allocation2 + $0x1238] sm:$0xff]
    %v745 = vld [vmem:[#allocation2 + $0x1240] sm:$0xff]
    %v746 = vld [vmem:[#allocation2 + $0x1248] sm:$0xff]
    %v747 = vld [vmem:[#allocation2 + $0x1250] sm:$0xff]
    %v748 = vld [vmem:[#allocation2 + $0x1258] sm:$0xff]
    %v749 = vld [vmem:[#allocation2 + $0x1260] sm:$0xff]
    %v750 = vld [vmem:[#allocation2 + $0x1268] sm:$0xff]
    %v751 = vld [vmem:[#allocation2 + $0x1270] sm:$0xff]
    %v752 = vld [vmem:[#allocation2 + $0x1278] sm:$0xff]
    %v753 = vld [vmem:[#allocation2 + $0x1280] sm:$0xff]
    %v754 = vld [vmem:[#allocation2 + $0x1288] sm:$0xff]
    %v755 = vld [vmem:[#allocation2 + $0x1290] sm:$0xff]
    %v756 = vld [vmem:[#allocation2 + $0x1298] sm:$0xff]
    %v757 = vld [vmem:[#allocation2 + $0x12a0] sm:$0xff]
    %v758 = vld [vmem:[#allocation2 + $0x12a8] sm:$0xff]
    %v759 = vld [vmem:[#allocation2 + $0x12b0] sm:$0xff]
    %v760 = vld [vmem:[#allocation2 + $0x12b8] sm:$0xff]
    %v761 = vld [vmem:[#allocation2 + $0x12c0] sm:$0xff]
    %v762 = vld [vmem:[#allocation2 + $0x12c8] sm:$0xff]
    %v763 = vld [vmem:[#allocation2 + $0x12d0] sm:$0xff]
    %v764 = vld [vmem:[#allocation2 + $0x12d8] sm:$0xff]
    %v765 = vld [vmem:[#allocation2 + $0x12e0] sm:$0xff]
    %v766 = vld [vmem:[#allocation2 + $0x12e8] sm:$0xff]
    %v767 = vld [vmem:[#allocation2 + $0x12f0] sm:$0xff]
    %v768 = vld [vmem:[#allocation2 + $0x12f8] sm:$0xff]
    %v769 = vld [vmem:[#allocation2 + $0x1300] sm:$0xff]
    %v770 = vld [vmem:[#allocation2 + $0x1308] sm:$0xff]
    %v771 = vld [vmem:[#allocation2 + $0x1310] sm:$0xff]
    %v772 = vld [vmem:[#allocation2 + $0x1318] sm:$0xff]
    %v773 = vld [vmem:[#allocation2 + $0x1320] sm:$0xff]
    %v774 = vld [vmem:[#allocation2 + $0x1328] sm:$0xff]
    %v775 = vld [vmem:[#allocation2 + $0x1330] sm:$0xff]
    %v776 = vld [vmem:[#allocation2 + $0x1338] sm:$0xff]
    %v777 = vld [vmem:[#allocation2 + $0x1340] sm:$0xff]
    %v778 = vld [vmem:[#allocation2 + $0x1348] sm:$0xff]
    %v779 = vld [vmem:[#allocation2 + $0x1350] sm:$0xff]
    %v780 = vld [vmem:[#allocation2 + $0x1358] sm:$0xff]
    %v781 = vld [vmem:[#allocation2 + $0x1360] sm:$0xff]
    %v782 = vld [vmem:[#allocation2 + $0x1368] sm:$0xff]
    %v783 = vld [vmem:[#allocation2 + $0x1370] sm:$0xff]
    %v784 = vld [vmem:[#allocation2 + $0x1378] sm:$0xff]
    %v785 = vld [vmem:[#allocation2 + $0x1380] sm:$0xff]
    %v786 = vld [vmem:[#allocation2 + $0x1388] sm:$0xff]
    %v787 = vld [vmem:[#allocation2 + $0x1390] sm:$0xff]
    %v788 = vld [vmem:[#allocation2 + $0x1398] sm:$0xff]
    %v789 = vld [vmem:[#allocation2 + $0x13a0] sm:$0xff]
    %v790 = vld [vmem:[#allocation2 + $0x13a8] sm:$0xff]
    %v791 = vld [vmem:[#allocation2 + $0x13b0] sm:$0xff]
    %v792 = vld [vmem:[#allocation2 + $0x13b8] sm:$0xff]
    %v793 = vld [vmem:[#allocation2 + $0x13c0] sm:$0xff]
    %v794 = vld [vmem:[#allocation2 + $0x13c8] sm:$0xff]
    %v795 = vld [vmem:[#allocation2 + $0x13d0] sm:$0xff]
    %v796 = vld [vmem:[#allocation2 + $0x13d8] sm:$0xff]
    %v797 = vld [vmem:[#allocation2 + $0x13e0] sm:$0xff]
    %v798 = vld [vmem:[#allocation2 + $0x13e8] sm:$0xff]
    %v799 = vld [vmem:[#allocation2 + $0x13f0] sm:$0xff]
    %v800 = vld [vmem:[#allocation2 + $0x13f8] sm:$0xff]
    %v801 = vld [vmem:[#allocation2 + $0x1400] sm:$0xff]
    %v802 = vld [vmem:[#allocation2 + $0x1408] sm:$0xff]
    %v803 = vld [vmem:[#allocation2 + $0x1410] sm:$0xff]
    %v804 = vld [vmem:[#allocation2 + $0x1418] sm:$0xff]
    %v805 = vld [vmem:[#allocation2 + $0x1420] sm:$0xff]
    %v806 = vld [vmem:[#allocation2 + $0x1428] sm:$0xff]
    %v807 = vld [vmem:[#allocation2 + $0x1430] sm:$0xff]
    %v808 = vld [vmem:[#allocation2 + $0x1438] sm:$0xff]
    %v809 = vld [vmem:[#allocation2 + $0x1440] sm:$0xff]
    %v810 = vld [vmem:[#allocation2 + $0x1448] sm:$0xff]
    %v811 = vld [vmem:[#allocation2 + $0x1450] sm:$0xff]
    %v812 = vld [vmem:[#allocation2 + $0x1458] sm:$0xff]
    %v813 = vld [vmem:[#allocation2 + $0x1460] sm:$0xff]
    %v814 = vld [vmem:[#allocation2 + $0x1468] sm:$0xff]
    %v815 = vld [vmem:[#allocation2 + $0x1470] sm:$0xff]
    %v816 = vld [vmem:[#allocation2 + $0x1478] sm:$0xff]
    %v817 = vld [vmem:[#allocation2 + $0x1480] sm:$0xff]
    %v818 = vld [vmem:[#allocation2 + $0x1488] sm:$0xff]
    %v819 = vld [vmem:[#allocation2 + $0x1490] sm:$0xff]
    %v820 = vld [vmem:[#allocation2 + $0x1498] sm:$0xff]
    %v821 = vld [vmem:[#allocation2 + $0x14a0] sm:$0xff]
    %v822 = vld [vmem:[#allocation2 + $0x14a8] sm:$0xff]
    %v823 = vld [vmem:[#allocation2 + $0x14b0] sm:$0xff]
    %v824 = vld [vmem:[#allocation2 + $0x14b8] sm:$0xff]
    %v825 = vld [vmem:[#allocation2 + $0x14c0] sm:$0xff]
    %v826 = vld [vmem:[#allocation2 + $0x14c8] sm:$0xff]
    %v827 = vld [vmem:[#allocation2 + $0x14d0] sm:$0xff]
    %v828 = vld [vmem:[#allocation2 + $0x14d8] sm:$0xff]
    %v829 = vld [vmem:[#allocation2 + $0x14e0] sm:$0xff]
    %v830 = vld [vmem:[#allocation2 + $0x14e8] sm:$0xff]
    %v831 = vld [vmem:[#allocation2 + $0x14f0] sm:$0xff]
    %v832 = vld [vmem:[#allocation2 + $0x14f8] sm:$0xff]
    %v833 = vld [vmem:[#allocation2 + $0x1500] sm:$0xff]
    %v834 = vld [vmem:[#allocation2 + $0x1508] sm:$0xff]
    %v835 = vld [vmem:[#allocation2 + $0x1510] sm:$0xff]
    %v836 = vld [vmem:[#allocation2 + $0x1518] sm:$0xff]
    %v837 = vld [vmem:[#allocation2 + $0x1520] sm:$0xff]
    %v838 = vld [vmem:[#allocation2 + $0x1528] sm:$0xff]
    %v839 = vld [vmem:[#allocation2 + $0x1530] sm:$0xff]
    %v840 = vld [vmem:[#allocation2 + $0x1538] sm:$0xff]
    %v841 = vld [vmem:[#allocation2 + $0x1540] sm:$0xff]
    %v842 = vld [vmem:[#allocation2 + $0x1548] sm:$0xff]
    %v843 = vld [vmem:[#allocation2 + $0x1550] sm:$0xff]
    %v844 = vld [vmem:[#allocation2 + $0x1558] sm:$0xff]
    %v845 = vld [vmem:[#allocation2 + $0x1560] sm:$0xff]
    %v846 = vld [vmem:[#allocation2 + $0x1568] sm:$0xff]
    %v847 = vld [vmem:[#allocation2 + $0x1570] sm:$0xff]
    %v848 = vld [vmem:[#allocation2 + $0x1578] sm:$0xff]
    %v849 = vld [vmem:[#allocation2 + $0x1580] sm:$0xff]
    %v850 = vld [vmem:[#allocation2 + $0x1588] sm:$0xff]
    %v851 = vld [vmem:[#allocation2 + $0x1590] sm:$0xff]
    %v852 = vld [vmem:[#allocation2 + $0x1598] sm:$0xff]
    %v853 = vld [vmem:[#allocation2 + $0x15a0] sm:$0xff]
    %v854 = vld [vmem:[#allocation2 + $0x15a8] sm:$0xff]
    %v855 = vld [vmem:[#allocation2 + $0x15b0] sm:$0xff]
    %v856 = vld [vmem:[#allocation2 + $0x15b8] sm:$0xff]
    %v857 = vld [vmem:[#allocation2 + $0x15c0] sm:$0xff]
    %v858 = vld [vmem:[#allocation2 + $0x15c8] sm:$0xff]
    %v859 = vld [vmem:[#allocation2 + $0x15d0] sm:$0xff]
    %v860 = vld [vmem:[#allocation2 + $0x15d8] sm:$0xff]
    %v861 = vld [vmem:[#allocation2 + $0x15e0] sm:$0xff]
    %v862 = vld [vmem:[#allocation2 + $0x15e8] sm:$0xff]
    %v863 = vld [vmem:[#allocation2 + $0x15f0] sm:$0xff]
    %v864 = vld [vmem:[#allocation2 + $0x15f8] sm:$0xff]
    %v865 = vld [vmem:[#allocation2 + $0x1600] sm:$0xff]
    %v866 = vld [vmem:[#allocation2 + $0x1608] sm:$0xff]
    %v867 = vld [vmem:[#allocation2 + $0x1610] sm:$0xff]
    %v868 = vld [vmem:[#allocation2 + $0x1618] sm:$0xff]
    %v869 = vld [vmem:[#allocation2 + $0x1620] sm:$0xff]
    %v870 = vld [vmem:[#allocation2 + $0x1628] sm:$0xff]
    %v871 = vld [vmem:[#allocation2 + $0x1630] sm:$0xff]
    %v872 = vld [vmem:[#allocation2 + $0x1638] sm:$0xff]
    %v873 = vld [vmem:[#allocation2 + $0x1640] sm:$0xff]
    %v874 = vld [vmem:[#allocation2 + $0x1648] sm:$0xff]
    %v875 = vld [vmem:[#allocation2 + $0x1650] sm:$0xff]
    %v876 = vld [vmem:[#allocation2 + $0x1658] sm:$0xff]
    %v877 = vld [vmem:[#allocation2 + $0x1660] sm:$0xff]
    %v878 = vld [vmem:[#allocation2 + $0x1668] sm:$0xff]
    %v879 = vld [vmem:[#allocation2 + $0x1670] sm:$0xff]
    %v880 = vld [vmem:[#allocation2 + $0x1678] sm:$0xff]
    %v881 = vld [vmem:[#allocation2 + $0x1680] sm:$0xff]
    %v882 = vld [vmem:[#allocation2 + $0x1688] sm:$0xff]
    %v883 = vld [vmem:[#allocation2 + $0x1690] sm:$0xff]
    %v884 = vld [vmem:[#allocation2 + $0x1698] sm:$0xff]
    %v885 = vld [vmem:[#allocation2 + $0x16a0] sm:$0xff]
    %v886 = vld [vmem:[#allocation2 + $0x16a8] sm:$0xff]
    %v887 = vld [vmem:[#allocation2 + $0x16b0] sm:$0xff]
    %v888 = vld [vmem:[#allocation2 + $0x16b8] sm:$0xff]
    %v889 = vld [vmem:[#allocation2 + $0x16c0] sm:$0xff]
    %v890 = vld [vmem:[#allocation2 + $0x16c8] sm:$0xff]
    %v891 = vld [vmem:[#allocation2 + $0x16d0] sm:$0xff]
    %v892 = vld [vmem:[#allocation2 + $0x16d8] sm:$0xff]
    %v893 = vld [vmem:[#allocation2 + $0x16e0] sm:$0xff]
    %v894 = vld [vmem:[#allocation2 + $0x16e8] sm:$0xff]
    %v895 = vld [vmem:[#allocation2 + $0x16f0] sm:$0xff]
    %v896 = vld [vmem:[#allocation2 + $0x16f8] sm:$0xff]
    %v897 = vld [vmem:[#allocation2 + $0x1700] sm:$0xff]
    %v898 = vld [vmem:[#allocation2 + $0x1708] sm:$0xff]
    %v899 = vld [vmem:[#allocation2 + $0x1710] sm:$0xff]
    %v900 = vld [vmem:[#allocation2 + $0x1718] sm:$0xff]
    %v901 = vld [vmem:[#allocation2 + $0x1720] sm:$0xff]
    %v902 = vld [vmem:[#allocation2 + $0x1728] sm:$0xff]
    %v903 = vld [vmem:[#allocation2 + $0x1730] sm:$0xff]
    %v904 = vld [vmem:[#allocation2 + $0x1738] sm:$0xff]
    %v905 = vld [vmem:[#allocation2 + $0x1740] sm:$0xff]
    %v906 = vld [vmem:[#allocation2 + $0x1748] sm:$0xff]
    %v907 = vld [vmem:[#allocation2 + $0x1750] sm:$0xff]
    %v908 = vld [vmem:[#allocation2 + $0x1758] sm:$0xff]
    %v909 = vld [vmem:[#allocation2 + $0x1760] sm:$0xff]
    %v910 = vld [vmem:[#allocation2 + $0x1768] sm:$0xff]
    %v911 = vld [vmem:[#allocation2 + $0x1770] sm:$0xff]
    %v912 = vld [vmem:[#allocation2 + $0x1778] sm:$0xff]
    %v913 = vld [vmem:[#allocation2 + $0x1780] sm:$0xff]
    %v914 = vld [vmem:[#allocation2 + $0x1788] sm:$0xff]
    %v915 = vld [vmem:[#allocation2 + $0x1790] sm:$0xff]
    %v916 = vld [vmem:[#allocation2 + $0x1798] sm:$0xff]
    %v917 = vld [vmem:[#allocation2 + $0x17a0] sm:$0xff]
    %v918 = vld [vmem:[#allocation2 + $0x17a8] sm:$0xff]
    %v919 = vld [vmem:[#allocation2 + $0x17b0] sm:$0xff]
    %v920 = vld [vmem:[#allocation2 + $0x17b8] sm:$0xff]
    %v921 = vld [vmem:[#allocation2 + $0x17c0] sm:$0xff]
    %v922 = vld [vmem:[#allocation2 + $0x17c8] sm:$0xff]
    %v923 = vld [vmem:[#allocation2 + $0x17d0] sm:$0xff]
    %v924 = vld [vmem:[#allocation2 + $0x17d8] sm:$0xff]
    %v925 = vld [vmem:[#allocation2 + $0x17e0] sm:$0xff]
    %v926 = vld [vmem:[#allocation2 + $0x17e8] sm:$0xff]
    %v927 = vld [vmem:[#allocation2 + $0x17f0] sm:$0xff]
    %v928 = vld [vmem:[#allocation2 + $0x17f8] sm:$0xff]
    %v929 = vld [vmem:[#allocation4] sm:$0xf]
    %v931 = vperm.slane %v929, 0
    %v932 = vperm.slane %v929, 1
    %v933 = vperm.slane %v929, 2
    %v934 = vperm.slane %v929, 3
    %v951 = vunpack.c.l.b16 %v149
    %v952 = vunpack.c.h.b16 %v149
    %v953 = vunpack.c.l.b16 %v150
    %v954 = vunpack.c.h.b16 %v150
    %v955 = vunpack.c.l.b16 %v151
    %v956 = vunpack.c.h.b16 %v151
    %v957 = vunpack.c.l.b16 %v152
    %v958 = vunpack.c.h.b16 %v152
    %v959 = vunpack.c.l.b16 %v153
    %v960 = vunpack.c.h.b16 %v153
    %v961 = vunpack.c.l.b16 %v154
    %v962 = vunpack.c.h.b16 %v154
    %v963 = vunpack.c.l.b16 %v155
    %v964 = vunpack.c.h.b16 %v155
    %v965 = vunpack.c.l.b16 %v156
    %v966 = vunpack.c.h.b16 %v156
    %v967 = vunpack.c.l.b16 %v157
    %v968 = vunpack.c.h.b16 %v157
    %v969 = vunpack.c.l.b16 %v158
    %v970 = vunpack.c.h.b16 %v158
    %v971 = vunpack.c.l.b16 %v159
    %v972 = vunpack.c.h.b16 %v159
    %v973 = vunpack.c.l.b16 %v160
    %v974 = vunpack.c.h.b16 %v160
    %v975 = vpack.c.b16 %v951, %v951
    %v976 = vpack.c.b16 %v952, %v952
    %v977 = vpack.c.b16 %v953, %v953
    %v978 = vpack.c.b16 %v954, %v954
    %v979 = vpack.c.b16 %v955, %v955
    %v980 = vpack.c.b16 %v956, %v956
    %v981 = vpack.c.b16 %v957, %v957
    %v982 = vpack.c.b16 %v958, %v958
    %v983 = vpack.c.b16 %v959, %v959
    %v984 = vpack.c.b16 %v960, %v960
    %v985 = vpack.c.b16 %v961, %v961
    %v986 = vpack.c.b16 %v962, %v962
    %v987 = vpack.c.b16 %v963, %v963
    %v988 = vpack.c.b16 %v964, %v964
    %v989 = vpack.c.b16 %v965, %v965
    %v990 = vpack.c.b16 %v966, %v966
    %v991 = vpack.c.b16 %v967, %v967
    %v992 = vpack.c.b16 %v968, %v968
    %v993 = vpack.c.b16 %v969, %v969
    %v994 = vpack.c.b16 %v970, %v970
    %v995 = vpack.c.b16 %v971, %v971
    %v996 = vpack.c.b16 %v972, %v972
    %v997 = vpack.c.b16 %v973, %v973
    %v998 = vpack.c.b16 %v974, %v974
    %v1791 = vunpack.c.l.b16 %v161
    %v1792 = vunpack.c.h.b16 %v161
    %v1793 = vunpack.c.l.b16 %v162
    %v1794 = vunpack.c.h.b16 %v162
    %v1795 = vunpack.c.l.b16 %v163
    %v1796 = vunpack.c.h.b16 %v163
    %v1797 = vunpack.c.l.b16 %v164
    %v1798 = vunpack.c.h.b16 %v164
    %v1799 = vunpack.c.l.b16 %v165
    %v1800 = vunpack.c.h.b16 %v165
    %v1801 = vunpack.c.l.b16 %v166
    %v1802 = vunpack.c.h.b16 %v166
    %v1803 = vunpack.c.l.b16 %v167
    %v1804 = vunpack.c.h.b16 %v167
    %v1805 = vunpack.c.l.b16 %v168
    %v1806 = vunpack.c.h.b16 %v168
    %v1807 = vunpack.c.l.b16 %v169
    %v1808 = vunpack.c.h.b16 %v169
    %v1809 = vunpack.c.l.b16 %v170
    %v1810 = vunpack.c.h.b16 %v170
    %v1811 = vunpack.c.l.b16 %v171
    %v1812 = vunpack.c.h.b16 %v171
    %v1813 = vunpack.c.l.b16 %v172
    %v1814 = vunpack.c.h.b16 %v172
    %v1815 = vunpack.c.l.b16 %v173
    %v1816 = vunpack.c.h.b16 %v173
    %v1817 = vunpack.c.l.b16 %v174
    %v1818 = vunpack.c.h.b16 %v174
    %v1819 = vunpack.c.l.b16 %v175
    %v1820 = vunpack.c.h.b16 %v175
    %v1821 = vunpack.c.l.b16 %v176
    %v1822 = vunpack.c.h.b16 %v176
    %v1823 = vunpack.c.l.b16 %v177
    %v1824 = vunpack.c.h.b16 %v177
    %v1825 = vunpack.c.l.b16 %v178
    %v1826 = vunpack.c.h.b16 %v178
    %v1827 = vunpack.c.l.b16 %v179
    %v1828 = vunpack.c.h.b16 %v179
    %v1829 = vunpack.c.l.b16 %v180
    %v1830 = vunpack.c.h.b16 %v180
    %v1831 = vunpack.c.l.b16 %v181
    %v1832 = vunpack.c.h.b16 %v181
    %v1833 = vunpack.c.l.b16 %v182
    %v1834 = vunpack.c.h.b16 %v182
    %v1835 = vunpack.c.l.b16 %v183
    %v1836 = vunpack.c.h.b16 %v183
    %v1837 = vunpack.c.l.b16 %v184
    %v1838 = vunpack.c.h.b16 %v184
    %v1839 = vunpack.c.l.b16 %v185
    %v1840 = vunpack.c.h.b16 %v185
    %v1841 = vunpack.c.l.b16 %v186
    %v1842 = vunpack.c.h.b16 %v186
    %v1843 = vunpack.c.l.b16 %v187
    %v1844 = vunpack.c.h.b16 %v187
    %v1845 = vunpack.c.l.b16 %v188
    %v1846 = vunpack.c.h.b16 %v188
    %v1847 = vunpack.c.l.b16 %v189
    %v1848 = vunpack.c.h.b16 %v189
    %v1849 = vunpack.c.l.b16 %v190
    %v1850 = vunpack.c.h.b16 %v190
    %v1851 = vunpack.c.l.b16 %v191
    %v1852 = vunpack.c.h.b16 %v191
    %v1853 = vunpack.c.l.b16 %v192
    %v1854 = vunpack.c.h.b16 %v192
    %v1855 = vunpack.c.l.b16 %v193
    %v1856 = vunpack.c.h.b16 %v193
    %v1857 = vunpack.c.l.b16 %v194
    %v1858 = vunpack.c.h.b16 %v194
    %v1859 = vunpack.c.l.b16 %v195
    %v1860 = vunpack.c.h.b16 %v195
    %v1861 = vunpack.c.l.b16 %v196
    %v1862 = vunpack.c.h.b16 %v196
    %v1863 = vunpack.c.l.b16 %v197
    %v1864 = vunpack.c.h.b16 %v197
    %v1865 = vunpack.c.l.b16 %v198
    %v1866 = vunpack.c.h.b16 %v198
    %v1867 = vunpack.c.l.b16 %v199
    %v1868 = vunpack.c.h.b16 %v199
    %v1869 = vunpack.c.l.b16 %v200
    %v1870 = vunpack.c.h.b16 %v200
    %v1871 = vunpack.c.l.b16 %v201
    %v1872 = vunpack.c.h.b16 %v201
    %v1873 = vunpack.c.l.b16 %v202
    %v1874 = vunpack.c.h.b16 %v202
    %v1875 = vunpack.c.l.b16 %v203
    %v1876 = vunpack.c.h.b16 %v203
    %v1877 = vunpack.c.l.b16 %v204
    %v1878 = vunpack.c.h.b16 %v204
    %v1879 = vunpack.c.l.b16 %v205
    %v1880 = vunpack.c.h.b16 %v205
    %v1881 = vunpack.c.l.b16 %v206
    %v1882 = vunpack.c.h.b16 %v206
    %v1883 = vunpack.c.l.b16 %v207
    %v1884 = vunpack.c.h.b16 %v207
    %v1885 = vunpack.c.l.b16 %v208
    %v1886 = vunpack.c.h.b16 %v208
    %v1887 = vunpack.c.l.b16 %v209
    %v1888 = vunpack.c.h.b16 %v209
    %v1889 = vunpack.c.l.b16 %v210
    %v1890 = vunpack.c.h.b16 %v210
    %v1891 = vunpack.c.l.b16 %v211
    %v1892 = vunpack.c.h.b16 %v211
    %v1893 = vunpack.c.l.b16 %v212
    %v1894 = vunpack.c.h.b16 %v212
    %v1895 = vunpack.c.l.b16 %v213
    %v1896 = vunpack.c.h.b16 %v213
    %v1897 = vunpack.c.l.b16 %v214
    %v1898 = vunpack.c.h.b16 %v214
    %v1899 = vunpack.c.l.b16 %v215
    %v1900 = vunpack.c.h.b16 %v215
    %v1901 = vunpack.c.l.b16 %v216
    %v1902 = vunpack.c.h.b16 %v216
    %v1903 = vunpack.c.l.b16 %v217
    %v1904 = vunpack.c.h.b16 %v217
    %v1905 = vunpack.c.l.b16 %v218
    %v1906 = vunpack.c.h.b16 %v218
    %v1907 = vunpack.c.l.b16 %v219
    %v1908 = vunpack.c.h.b16 %v219
    %v1909 = vunpack.c.l.b16 %v220
    %v1910 = vunpack.c.h.b16 %v220
    %v1911 = vunpack.c.l.b16 %v221
    %v1912 = vunpack.c.h.b16 %v221
    %v1913 = vunpack.c.l.b16 %v222
    %v1914 = vunpack.c.h.b16 %v222
    %v1915 = vunpack.c.l.b16 %v223
    %v1916 = vunpack.c.h.b16 %v223
    %v1917 = vunpack.c.l.b16 %v224
    %v1918 = vunpack.c.h.b16 %v224
    %v1919 = vunpack.c.l.b16 %v225
    %v1920 = vunpack.c.h.b16 %v225
    %v1921 = vunpack.c.l.b16 %v226
    %v1922 = vunpack.c.h.b16 %v226
    %v1923 = vunpack.c.l.b16 %v227
    %v1924 = vunpack.c.h.b16 %v227
    %v1925 = vunpack.c.l.b16 %v228
    %v1926 = vunpack.c.h.b16 %v228
    %v1927 = vunpack.c.l.b16 %v229
    %v1928 = vunpack.c.h.b16 %v229
    %v1929 = vunpack.c.l.b16 %v230
    %v1930 = vunpack.c.h.b16 %v230
    %v1931 = vunpack.c.l.b16 %v231
    %v1932 = vunpack.c.h.b16 %v231
    %v1933 = vunpack.c.l.b16 %v232
    %v1934 = vunpack.c.h.b16 %v232
    %v1935 = vunpack.c.l.b16 %v233
    %v1936 = vunpack.c.h.b16 %v233
    %v1937 = vunpack.c.l.b16 %v234
    %v1938 = vunpack.c.h.b16 %v234
    %v1939 = vunpack.c.l.b16 %v235
    %v1940 = vunpack.c.h.b16 %v235
    %v1941 = vunpack.c.l.b16 %v236
    %v1942 = vunpack.c.h.b16 %v236
    %v1943 = vunpack.c.l.b16 %v237
    %v1944 = vunpack.c.h.b16 %v237
    %v1945 = vunpack.c.l.b16 %v238
    %v1946 = vunpack.c.h.b16 %v238
    %v1947 = vunpack.c.l.b16 %v239
    %v1948 = vunpack.c.h.b16 %v239
    %v1949 = vunpack.c.l.b16 %v240
    %v1950 = vunpack.c.h.b16 %v240
    %v1951 = vunpack.c.l.b16 %v241
    %v1952 = vunpack.c.h.b16 %v241
    %v1953 = vunpack.c.l.b16 %v242
    %v1954 = vunpack.c.h.b16 %v242
    %v1955 = vunpack.c.l.b16 %v243
    %v1956 = vunpack.c.h.b16 %v243
    %v1957 = vunpack.c.l.b16 %v244
    %v1958 = vunpack.c.h.b16 %v244
    %v1959 = vunpack.c.l.b16 %v245
    %v1960 = vunpack.c.h.b16 %v245
    %v1961 = vunpack.c.l.b16 %v246
    %v1962 = vunpack.c.h.b16 %v246
    %v1963 = vunpack.c.l.b16 %v247
    %v1964 = vunpack.c.h.b16 %v247
    %v1965 = vunpack.c.l.b16 %v248
    %v1966 = vunpack.c.h.b16 %v248
    %v1967 = vunpack.c.l.b16 %v249
    %v1968 = vunpack.c.h.b16 %v249
    %v1969 = vunpack.c.l.b16 %v250
    %v1970 = vunpack.c.h.b16 %v250
    %v1971 = vunpack.c.l.b16 %v251
    %v1972 = vunpack.c.h.b16 %v251
    %v1973 = vunpack.c.l.b16 %v252
    %v1974 = vunpack.c.h.b16 %v252
    %v1975 = vunpack.c.l.b16 %v253
    %v1976 = vunpack.c.h.b16 %v253
    %v1977 = vunpack.c.l.b16 %v254
    %v1978 = vunpack.c.h.b16 %v254
    %v1979 = vunpack.c.l.b16 %v255
    %v1980 = vunpack.c.h.b16 %v255
    %v1981 = vunpack.c.l.b16 %v256
    %v1982 = vunpack.c.h.b16 %v256
    %v1983 = vunpack.c.l.b16 %v257
    %v1984 = vunpack.c.h.b16 %v257
    %v1985 = vunpack.c.l.b16 %v258
    %v1986 = vunpack.c.h.b16 %v258
    %v1987 = vunpack.c.l.b16 %v259
    %v1988 = vunpack.c.h.b16 %v259
    %v1989 = vunpack.c.l.b16 %v260
    %v1990 = vunpack.c.h.b16 %v260
    %v1991 = vunpack.c.l.b16 %v261
    %v1992 = vunpack.c.h.b16 %v261
    %v1993 = vunpack.c.l.b16 %v262
    %v1994 = vunpack.c.h.b16 %v262
    %v1995 = vunpack.c.l.b16 %v263
    %v1996 = vunpack.c.h.b16 %v263
    %v1997 = vunpack.c.l.b16 %v264
    %v1998 = vunpack.c.h.b16 %v264
    %v1999 = vunpack.c.l.b16 %v265
    %v2000 = vunpack.c.h.b16 %v265
    %v2001 = vunpack.c.l.b16 %v266
    %v2002 = vunpack.c.h.b16 %v266
    %v2003 = vunpack.c.l.b16 %v267
    %v2004 = vunpack.c.h.b16 %v267
    %v2005 = vunpack.c.l.b16 %v268
    %v2006 = vunpack.c.h.b16 %v268
    %v2007 = vunpack.c.l.b16 %v269
    %v2008 = vunpack.c.h.b16 %v269
    %v2009 = vunpack.c.l.b16 %v270
    %v2010 = vunpack.c.h.b16 %v270
    %v2011 = vunpack.c.l.b16 %v271
    %v2012 = vunpack.c.h.b16 %v271
    %v2013 = vunpack.c.l.b16 %v272
    %v2014 = vunpack.c.h.b16 %v272
    %v2015 = vunpack.c.l.b16 %v273
    %v2016 = vunpack.c.h.b16 %v273
    %v2017 = vunpack.c.l.b16 %v274
    %v2018 = vunpack.c.h.b16 %v274
    %v2019 = vunpack.c.l.b16 %v275
    %v2020 = vunpack.c.h.b16 %v275
    %v2021 = vunpack.c.l.b16 %v276
    %v2022 = vunpack.c.h.b16 %v276
    %v2023 = vunpack.c.l.b16 %v277
    %v2024 = vunpack.c.h.b16 %v277
    %v2025 = vunpack.c.l.b16 %v278
    %v2026 = vunpack.c.h.b16 %v278
    %v2027 = vunpack.c.l.b16 %v279
    %v2028 = vunpack.c.h.b16 %v279
    %v2029 = vunpack.c.l.b16 %v280
    %v2030 = vunpack.c.h.b16 %v280
    %v2031 = vunpack.c.l.b16 %v281
    %v2032 = vunpack.c.h.b16 %v281
    %v2033 = vunpack.c.l.b16 %v282
    %v2034 = vunpack.c.h.b16 %v282
    %v2035 = vunpack.c.l.b16 %v283
    %v2036 = vunpack.c.h.b16 %v283
    %v2037 = vunpack.c.l.b16 %v284
    %v2038 = vunpack.c.h.b16 %v284
    %v2039 = vunpack.c.l.b16 %v285
    %v2040 = vunpack.c.h.b16 %v285
    %v2041 = vunpack.c.l.b16 %v286
    %v2042 = vunpack.c.h.b16 %v286
    %v2043 = vunpack.c.l.b16 %v287
    %v2044 = vunpack.c.h.b16 %v287
    %v2045 = vunpack.c.l.b16 %v288
    %v2046 = vunpack.c.h.b16 %v288
    %v2047 = vunpack.c.l.b16 %v289
    %v2048 = vunpack.c.h.b16 %v289
    %v2049 = vunpack.c.l.b16 %v290
    %v2050 = vunpack.c.h.b16 %v290
    %v2051 = vunpack.c.l.b16 %v291
    %v2052 = vunpack.c.h.b16 %v291
    %v2053 = vunpack.c.l.b16 %v292
    %v2054 = vunpack.c.h.b16 %v292
    %v2055 = vunpack.c.l.b16 %v293
    %v2056 = vunpack.c.h.b16 %v293
    %v2057 = vunpack.c.l.b16 %v294
    %v2058 = vunpack.c.h.b16 %v294
    %v2059 = vunpack.c.l.b16 %v295
    %v2060 = vunpack.c.h.b16 %v295
    %v2061 = vunpack.c.l.b16 %v296
    %v2062 = vunpack.c.h.b16 %v296
    %v2063 = vunpack.c.l.b16 %v297
    %v2064 = vunpack.c.h.b16 %v297
    %v2065 = vunpack.c.l.b16 %v298
    %v2066 = vunpack.c.h.b16 %v298
    %v2067 = vunpack.c.l.b16 %v299
    %v2068 = vunpack.c.h.b16 %v299
    %v2069 = vunpack.c.l.b16 %v300
    %v2070 = vunpack.c.h.b16 %v300
    %v2071 = vunpack.c.l.b16 %v301
    %v2072 = vunpack.c.h.b16 %v301
    %v2073 = vunpack.c.l.b16 %v302
    %v2074 = vunpack.c.h.b16 %v302
    %v2075 = vunpack.c.l.b16 %v303
    %v2076 = vunpack.c.h.b16 %v303
    %v2077 = vunpack.c.l.b16 %v304
    %v2078 = vunpack.c.h.b16 %v304
    %v2079 = vunpack.c.l.b16 %v305
    %v2080 = vunpack.c.h.b16 %v305
    %v2081 = vunpack.c.l.b16 %v306
    %v2082 = vunpack.c.h.b16 %v306
    %v2083 = vunpack.c.l.b16 %v307
    %v2084 = vunpack.c.h.b16 %v307
    %v2085 = vunpack.c.l.b16 %v308
    %v2086 = vunpack.c.h.b16 %v308
    %v2087 = vunpack.c.l.b16 %v309
    %v2088 = vunpack.c.h.b16 %v309
    %v2089 = vunpack.c.l.b16 %v310
    %v2090 = vunpack.c.h.b16 %v310
    %v2091 = vunpack.c.l.b16 %v311
    %v2092 = vunpack.c.h.b16 %v311
    %v2093 = vunpack.c.l.b16 %v312
    %v2094 = vunpack.c.h.b16 %v312
    %v2095 = vunpack.c.l.b16 %v313
    %v2096 = vunpack.c.h.b16 %v313
    %v2097 = vunpack.c.l.b16 %v314
    %v2098 = vunpack.c.h.b16 %v314
    %v2099 = vunpack.c.l.b16 %v315
    %v2100 = vunpack.c.h.b16 %v315
    %v2101 = vunpack.c.l.b16 %v316
    %v2102 = vunpack.c.h.b16 %v316
    %v2103 = vunpack.c.l.b16 %v317
    %v2104 = vunpack.c.h.b16 %v317
    %v2105 = vunpack.c.l.b16 %v318
    %v2106 = vunpack.c.h.b16 %v318
    %v2107 = vunpack.c.l.b16 %v319
    %v2108 = vunpack.c.h.b16 %v319
    %v2109 = vunpack.c.l.b16 %v320
    %v2110 = vunpack.c.h.b16 %v320
    %v2111 = vunpack.c.l.b16 %v321
    %v2112 = vunpack.c.h.b16 %v321
    %v2113 = vunpack.c.l.b16 %v322
    %v2114 = vunpack.c.h.b16 %v322
    %v2115 = vunpack.c.l.b16 %v323
    %v2116 = vunpack.c.h.b16 %v323
    %v2117 = vunpack.c.l.b16 %v324
    %v2118 = vunpack.c.h.b16 %v324
    %v2119 = vunpack.c.l.b16 %v325
    %v2120 = vunpack.c.h.b16 %v325
    %v2121 = vunpack.c.l.b16 %v326
    %v2122 = vunpack.c.h.b16 %v326
    %v2123 = vunpack.c.l.b16 %v327
    %v2124 = vunpack.c.h.b16 %v327
    %v2125 = vunpack.c.l.b16 %v328
    %v2126 = vunpack.c.h.b16 %v328
    %v2127 = vunpack.c.l.b16 %v329
    %v2128 = vunpack.c.h.b16 %v329
    %v2129 = vunpack.c.l.b16 %v330
    %v2130 = vunpack.c.h.b16 %v330
    %v2131 = vunpack.c.l.b16 %v331
    %v2132 = vunpack.c.h.b16 %v331
    %v2133 = vunpack.c.l.b16 %v332
    %v2134 = vunpack.c.h.b16 %v332
    %v2135 = vunpack.c.l.b16 %v333
    %v2136 = vunpack.c.h.b16 %v333
    %v2137 = vunpack.c.l.b16 %v334
    %v2138 = vunpack.c.h.b16 %v334
    %v2139 = vunpack.c.l.b16 %v335
    %v2140 = vunpack.c.h.b16 %v335
    %v2141 = vunpack.c.l.b16 %v336
    %v2142 = vunpack.c.h.b16 %v336
    %v2143 = vunpack.c.l.b16 %v337
    %v2144 = vunpack.c.h.b16 %v337
    %v2145 = vunpack.c.l.b16 %v338
    %v2146 = vunpack.c.h.b16 %v338
    %v2147 = vunpack.c.l.b16 %v339
    %v2148 = vunpack.c.h.b16 %v339
    %v2149 = vunpack.c.l.b16 %v340
    %v2150 = vunpack.c.h.b16 %v340
    %v2151 = vunpack.c.l.b16 %v341
    %v2152 = vunpack.c.h.b16 %v341
    %v2153 = vunpack.c.l.b16 %v342
    %v2154 = vunpack.c.h.b16 %v342
    %v2155 = vunpack.c.l.b16 %v343
    %v2156 = vunpack.c.h.b16 %v343
    %v2157 = vunpack.c.l.b16 %v344
    %v2158 = vunpack.c.h.b16 %v344
    %v2159 = vunpack.c.l.b16 %v345
    %v2160 = vunpack.c.h.b16 %v345
    %v2161 = vunpack.c.l.b16 %v346
    %v2162 = vunpack.c.h.b16 %v346
    %v2163 = vunpack.c.l.b16 %v347
    %v2164 = vunpack.c.h.b16 %v347
    %v2165 = vunpack.c.l.b16 %v348
    %v2166 = vunpack.c.h.b16 %v348
    %v2167 = vunpack.c.l.b16 %v349
    %v2168 = vunpack.c.h.b16 %v349
    %v2169 = vunpack.c.l.b16 %v350
    %v2170 = vunpack.c.h.b16 %v350
    %v2171 = vunpack.c.l.b16 %v351
    %v2172 = vunpack.c.h.b16 %v351
    %v2173 = vunpack.c.l.b16 %v352
    %v2174 = vunpack.c.h.b16 %v352
    %v2175 = vunpack.c.l.b16 %v353
    %v2176 = vunpack.c.h.b16 %v353
    %v2177 = vunpack.c.l.b16 %v354
    %v2178 = vunpack.c.h.b16 %v354
    %v2179 = vunpack.c.l.b16 %v355
    %v2180 = vunpack.c.h.b16 %v355
    %v2181 = vunpack.c.l.b16 %v356
    %v2182 = vunpack.c.h.b16 %v356
    %v2183 = vunpack.c.l.b16 %v357
    %v2184 = vunpack.c.h.b16 %v357
    %v2185 = vunpack.c.l.b16 %v358
    %v2186 = vunpack.c.h.b16 %v358
    %v2187 = vunpack.c.l.b16 %v359
    %v2188 = vunpack.c.h.b16 %v359
    %v2189 = vunpack.c.l.b16 %v360
    %v2190 = vunpack.c.h.b16 %v360
    %v2191 = vunpack.c.l.b16 %v361
    %v2192 = vunpack.c.h.b16 %v361
    %v2193 = vunpack.c.l.b16 %v362
    %v2194 = vunpack.c.h.b16 %v362
    %v2195 = vunpack.c.l.b16 %v363
    %v2196 = vunpack.c.h.b16 %v363
    %v2197 = vunpack.c.l.b16 %v364
    %v2198 = vunpack.c.h.b16 %v364
    %v2199 = vunpack.c.l.b16 %v365
    %v2200 = vunpack.c.h.b16 %v365
    %v2201 = vunpack.c.l.b16 %v366
    %v2202 = vunpack.c.h.b16 %v366
    %v2203 = vunpack.c.l.b16 %v367
    %v2204 = vunpack.c.h.b16 %v367
    %v2205 = vunpack.c.l.b16 %v368
    %v2206 = vunpack.c.h.b16 %v368
    %v2207 = vunpack.c.l.b16 %v369
    %v2208 = vunpack.c.h.b16 %v369
    %v2209 = vunpack.c.l.b16 %v370
    %v2210 = vunpack.c.h.b16 %v370
    %v2211 = vunpack.c.l.b16 %v371
    %v2212 = vunpack.c.h.b16 %v371
    %v2213 = vunpack.c.l.b16 %v372
    %v2214 = vunpack.c.h.b16 %v372
    %v2215 = vunpack.c.l.b16 %v373
    %v2216 = vunpack.c.h.b16 %v373
    %v2217 = vunpack.c.l.b16 %v374
    %v2218 = vunpack.c.h.b16 %v374
    %v2219 = vunpack.c.l.b16 %v375
    %v2220 = vunpack.c.h.b16 %v375
    %v2221 = vunpack.c.l.b16 %v376
    %v2222 = vunpack.c.h.b16 %v376
    %v2223 = vunpack.c.l.b16 %v377
    %v2224 = vunpack.c.h.b16 %v377
    %v2225 = vunpack.c.l.b16 %v378
    %v2226 = vunpack.c.h.b16 %v378
    %v2227 = vunpack.c.l.b16 %v379
    %v2228 = vunpack.c.h.b16 %v379
    %v2229 = vunpack.c.l.b16 %v380
    %v2230 = vunpack.c.h.b16 %v380
    %v2231 = vunpack.c.l.b16 %v381
    %v2232 = vunpack.c.h.b16 %v381
    %v2233 = vunpack.c.l.b16 %v382
    %v2234 = vunpack.c.h.b16 %v382
    %v2235 = vunpack.c.l.b16 %v383
    %v2236 = vunpack.c.h.b16 %v383
    %v2237 = vunpack.c.l.b16 %v384
    %v2238 = vunpack.c.h.b16 %v384
    %v2239 = vunpack.c.l.b16 %v385
    %v2240 = vunpack.c.h.b16 %v385
    %v2241 = vunpack.c.l.b16 %v386
    %v2242 = vunpack.c.h.b16 %v386
    %v2243 = vunpack.c.l.b16 %v387
    %v2244 = vunpack.c.h.b16 %v387
    %v2245 = vunpack.c.l.b16 %v388
    %v2246 = vunpack.c.h.b16 %v388
    %v2247 = vunpack.c.l.b16 %v389
    %v2248 = vunpack.c.h.b16 %v389
    %v2249 = vunpack.c.l.b16 %v390
    %v2250 = vunpack.c.h.b16 %v390
    %v2251 = vunpack.c.l.b16 %v391
    %v2252 = vunpack.c.h.b16 %v391
    %v2253 = vunpack.c.l.b16 %v392
    %v2254 = vunpack.c.h.b16 %v392
    %v2255 = vunpack.c.l.b16 %v393
    %v2256 = vunpack.c.h.b16 %v393
    %v2257 = vunpack.c.l.b16 %v394
    %v2258 = vunpack.c.h.b16 %v394
    %v2259 = vunpack.c.l.b16 %v395
    %v2260 = vunpack.c.h.b16 %v395
    %v2261 = vunpack.c.l.b16 %v396
    %v2262 = vunpack.c.h.b16 %v396
    %v2263 = vunpack.c.l.b16 %v397
    %v2264 = vunpack.c.h.b16 %v397
    %v2265 = vunpack.c.l.b16 %v398
    %v2266 = vunpack.c.h.b16 %v398
    %v2267 = vunpack.c.l.b16 %v399
    %v2268 = vunpack.c.h.b16 %v399
    %v2269 = vunpack.c.l.b16 %v400
    %v2270 = vunpack.c.h.b16 %v400
    %v2271 = vunpack.c.l.b16 %v401
    %v2272 = vunpack.c.h.b16 %v401
    %v2273 = vunpack.c.l.b16 %v402
    %v2274 = vunpack.c.h.b16 %v402
    %v2275 = vunpack.c.l.b16 %v403
    %v2276 = vunpack.c.h.b16 %v403
    %v2277 = vunpack.c.l.b16 %v404
    %v2278 = vunpack.c.h.b16 %v404
    %v2279 = vunpack.c.l.b16 %v405
    %v2280 = vunpack.c.h.b16 %v405
    %v2281 = vunpack.c.l.b16 %v406
    %v2282 = vunpack.c.h.b16 %v406
    %v2283 = vunpack.c.l.b16 %v407
    %v2284 = vunpack.c.h.b16 %v407
    %v2285 = vunpack.c.l.b16 %v408
    %v2286 = vunpack.c.h.b16 %v408
    %v2287 = vunpack.c.l.b16 %v409
    %v2288 = vunpack.c.h.b16 %v409
    %v2289 = vunpack.c.l.b16 %v410
    %v2290 = vunpack.c.h.b16 %v410
    %v2291 = vunpack.c.l.b16 %v411
    %v2292 = vunpack.c.h.b16 %v411
    %v2293 = vunpack.c.l.b16 %v412
    %v2294 = vunpack.c.h.b16 %v412
    %v2295 = vunpack.c.l.b16 %v413
    %v2296 = vunpack.c.h.b16 %v413
    %v2297 = vunpack.c.l.b16 %v414
    %v2298 = vunpack.c.h.b16 %v414
    %v2299 = vunpack.c.l.b16 %v415
    %v2300 = vunpack.c.h.b16 %v415
    %v2301 = vunpack.c.l.b16 %v416
    %v2302 = vunpack.c.h.b16 %v416
    %v2303 = vunpack.c.l.b16 %v417
    %v2304 = vunpack.c.h.b16 %v417
    %v2305 = vunpack.c.l.b16 %v418
    %v2306 = vunpack.c.h.b16 %v418
    %v2307 = vunpack.c.l.b16 %v419
    %v2308 = vunpack.c.h.b16 %v419
    %v2309 = vunpack.c.l.b16 %v420
    %v2310 = vunpack.c.h.b16 %v420
    %v2311 = vunpack.c.l.b16 %v421
    %v2312 = vunpack.c.h.b16 %v421
    %v2313 = vunpack.c.l.b16 %v422
    %v2314 = vunpack.c.h.b16 %v422
    %v2315 = vunpack.c.l.b16 %v423
    %v2316 = vunpack.c.h.b16 %v423
    %v2317 = vunpack.c.l.b16 %v424
    %v2318 = vunpack.c.h.b16 %v424
    %v2319 = vunpack.c.l.b16 %v425
    %v2320 = vunpack.c.h.b16 %v425
    %v2321 = vunpack.c.l.b16 %v426
    %v2322 = vunpack.c.h.b16 %v426
    %v2323 = vunpack.c.l.b16 %v427
    %v2324 = vunpack.c.h.b16 %v427
    %v2325 = vunpack.c.l.b16 %v428
    %v2326 = vunpack.c.h.b16 %v428
    %v2327 = vunpack.c.l.b16 %v429
    %v2328 = vunpack.c.h.b16 %v429
    %v2329 = vunpack.c.l.b16 %v430
    %v2330 = vunpack.c.h.b16 %v430
    %v2331 = vunpack.c.l.b16 %v431
    %v2332 = vunpack.c.h.b16 %v431
    %v2333 = vunpack.c.l.b16 %v432
    %v2334 = vunpack.c.h.b16 %v432
    %v2335 = vunpack.c.l.b16 %v433
    %v2336 = vunpack.c.h.b16 %v433
    %v2337 = vunpack.c.l.b16 %v434
    %v2338 = vunpack.c.h.b16 %v434
    %v2339 = vunpack.c.l.b16 %v435
    %v2340 = vunpack.c.h.b16 %v435
    %v2341 = vunpack.c.l.b16 %v436
    %v2342 = vunpack.c.h.b16 %v436
    %v2343 = vunpack.c.l.b16 %v437
    %v2344 = vunpack.c.h.b16 %v437
    %v2345 = vunpack.c.l.b16 %v438
    %v2346 = vunpack.c.h.b16 %v438
    %v2347 = vunpack.c.l.b16 %v439
    %v2348 = vunpack.c.h.b16 %v439
    %v2349 = vunpack.c.l.b16 %v440
    %v2350 = vunpack.c.h.b16 %v440
    %v2351 = vunpack.c.l.b16 %v441
    %v2352 = vunpack.c.h.b16 %v441
    %v2353 = vunpack.c.l.b16 %v442
    %v2354 = vunpack.c.h.b16 %v442
    %v2355 = vunpack.c.l.b16 %v443
    %v2356 = vunpack.c.h.b16 %v443
    %v2357 = vunpack.c.l.b16 %v444
    %v2358 = vunpack.c.h.b16 %v444
    %v2359 = vunpack.c.l.b16 %v445
    %v2360 = vunpack.c.h.b16 %v445
    %v2361 = vunpack.c.l.b16 %v446
    %v2362 = vunpack.c.h.b16 %v446
    %v2363 = vunpack.c.l.b16 %v447
    %v2364 = vunpack.c.h.b16 %v447
    %v2365 = vunpack.c.l.b16 %v448
    %v2366 = vunpack.c.h.b16 %v448
    %v2367 = vunpack.c.l.b16 %v449
    %v2368 = vunpack.c.h.b16 %v449
    %v2369 = vunpack.c.l.b16 %v450
    %v2370 = vunpack.c.h.b16 %v450
    %v2371 = vunpack.c.l.b16 %v451
    %v2372 = vunpack.c.h.b16 %v451
    %v2373 = vunpack.c.l.b16 %v452
    %v2374 = vunpack.c.h.b16 %v452
    %v2375 = vunpack.c.l.b16 %v453
    %v2376 = vunpack.c.h.b16 %v453
    %v2377 = vunpack.c.l.b16 %v454
    %v2378 = vunpack.c.h.b16 %v454
    %v2379 = vunpack.c.l.b16 %v455
    %v2380 = vunpack.c.h.b16 %v455
    %v2381 = vunpack.c.l.b16 %v456
    %v2382 = vunpack.c.h.b16 %v456
    %v2383 = vunpack.c.l.b16 %v457
    %v2384 = vunpack.c.h.b16 %v457
    %v2385 = vunpack.c.l.b16 %v458
    %v2386 = vunpack.c.h.b16 %v458
    %v2387 = vunpack.c.l.b16 %v459
    %v2388 = vunpack.c.h.b16 %v459
    %v2389 = vunpack.c.l.b16 %v460
    %v2390 = vunpack.c.h.b16 %v460
    %v2391 = vunpack.c.l.b16 %v461
    %v2392 = vunpack.c.h.b16 %v461
    %v2393 = vunpack.c.l.b16 %v462
    %v2394 = vunpack.c.h.b16 %v462
    %v2395 = vunpack.c.l.b16 %v463
    %v2396 = vunpack.c.h.b16 %v463
    %v2397 = vunpack.c.l.b16 %v464
    %v2398 = vunpack.c.h.b16 %v464
    %v2399 = vunpack.c.l.b16 %v465
    %v2400 = vunpack.c.h.b16 %v465
    %v2401 = vunpack.c.l.b16 %v466
    %v2402 = vunpack.c.h.b16 %v466
    %v2403 = vunpack.c.l.b16 %v467
    %v2404 = vunpack.c.h.b16 %v467
    %v2405 = vunpack.c.l.b16 %v468
    %v2406 = vunpack.c.h.b16 %v468
    %v2407 = vunpack.c.l.b16 %v469
    %v2408 = vunpack.c.h.b16 %v469
    %v2409 = vunpack.c.l.b16 %v470
    %v2410 = vunpack.c.h.b16 %v470
    %v2411 = vunpack.c.l.b16 %v471
    %v2412 = vunpack.c.h.b16 %v471
    %v2413 = vunpack.c.l.b16 %v472
    %v2414 = vunpack.c.h.b16 %v472
    %v2415 = vunpack.c.l.b16 %v473
    %v2416 = vunpack.c.h.b16 %v473
    %v2417 = vunpack.c.l.b16 %v474
    %v2418 = vunpack.c.h.b16 %v474
    %v2419 = vunpack.c.l.b16 %v475
    %v2420 = vunpack.c.h.b16 %v475
    %v2421 = vunpack.c.l.b16 %v476
    %v2422 = vunpack.c.h.b16 %v476
    %v2423 = vunpack.c.l.b16 %v477
    %v2424 = vunpack.c.h.b16 %v477
    %v2425 = vunpack.c.l.b16 %v478
    %v2426 = vunpack.c.h.b16 %v478
    %v2427 = vunpack.c.l.b16 %v479
    %v2428 = vunpack.c.h.b16 %v479
    %v2429 = vunpack.c.l.b16 %v480
    %v2430 = vunpack.c.h.b16 %v480
    %v2431 = vunpack.c.l.b16 %v481
    %v2432 = vunpack.c.h.b16 %v481
    %v2433 = vunpack.c.l.b16 %v482
    %v2434 = vunpack.c.h.b16 %v482
    %v2435 = vunpack.c.l.b16 %v483
    %v2436 = vunpack.c.h.b16 %v483
    %v2437 = vunpack.c.l.b16 %v484
    %v2438 = vunpack.c.h.b16 %v484
    %v2439 = vunpack.c.l.b16 %v485
    %v2440 = vunpack.c.h.b16 %v485
    %v2441 = vunpack.c.l.b16 %v486
    %v2442 = vunpack.c.h.b16 %v486
    %v2443 = vunpack.c.l.b16 %v487
    %v2444 = vunpack.c.h.b16 %v487
    %v2445 = vunpack.c.l.b16 %v488
    %v2446 = vunpack.c.h.b16 %v488
    %v2447 = vunpack.c.l.b16 %v489
    %v2448 = vunpack.c.h.b16 %v489
    %v2449 = vunpack.c.l.b16 %v490
    %v2450 = vunpack.c.h.b16 %v490
    %v2451 = vunpack.c.l.b16 %v491
    %v2452 = vunpack.c.h.b16 %v491
    %v2453 = vunpack.c.l.b16 %v492
    %v2454 = vunpack.c.h.b16 %v492
    %v2455 = vunpack.c.l.b16 %v493
    %v2456 = vunpack.c.h.b16 %v493
    %v2457 = vunpack.c.l.b16 %v494
    %v2458 = vunpack.c.h.b16 %v494
    %v2459 = vunpack.c.l.b16 %v495
    %v2460 = vunpack.c.h.b16 %v495
    %v2461 = vunpack.c.l.b16 %v496
    %v2462 = vunpack.c.h.b16 %v496
    %v2463 = vunpack.c.l.b16 %v497
    %v2464 = vunpack.c.h.b16 %v497
    %v2465 = vunpack.c.l.b16 %v498
    %v2466 = vunpack.c.h.b16 %v498
    %v2467 = vunpack.c.l.b16 %v499
    %v2468 = vunpack.c.h.b16 %v499
    %v2469 = vunpack.c.l.b16 %v500
    %v2470 = vunpack.c.h.b16 %v500
    %v2471 = vunpack.c.l.b16 %v501
    %v2472 = vunpack.c.h.b16 %v501
    %v2473 = vunpack.c.l.b16 %v502
    %v2474 = vunpack.c.h.b16 %v502
    %v2475 = vunpack.c.l.b16 %v503
    %v2476 = vunpack.c.h.b16 %v503
    %v2477 = vunpack.c.l.b16 %v504
    %v2478 = vunpack.c.h.b16 %v504
    %v2479 = vunpack.c.l.b16 %v505
    %v2480 = vunpack.c.h.b16 %v505
    %v2481 = vunpack.c.l.b16 %v506
    %v2482 = vunpack.c.h.b16 %v506
    %v2483 = vunpack.c.l.b16 %v507
    %v2484 = vunpack.c.h.b16 %v507
    %v2485 = vunpack.c.l.b16 %v508
    %v2486 = vunpack.c.h.b16 %v508
    %v2487 = vunpack.c.l.b16 %v509
    %v2488 = vunpack.c.h.b16 %v509
    %v2489 = vunpack.c.l.b16 %v510
    %v2490 = vunpack.c.h.b16 %v510
    %v2491 = vunpack.c.l.b16 %v511
    %v2492 = vunpack.c.h.b16 %v511
    %v2493 = vunpack.c.l.b16 %v512
    %v2494 = vunpack.c.h.b16 %v512
    %v2495 = vunpack.c.l.b16 %v513
    %v2496 = vunpack.c.h.b16 %v513
    %v2497 = vunpack.c.l.b16 %v514
    %v2498 = vunpack.c.h.b16 %v514
    %v2499 = vunpack.c.l.b16 %v515
    %v2500 = vunpack.c.h.b16 %v515
    %v2501 = vunpack.c.l.b16 %v516
    %v2502 = vunpack.c.h.b16 %v516
    %v2503 = vunpack.c.l.b16 %v517
    %v2504 = vunpack.c.h.b16 %v517
    %v2505 = vunpack.c.l.b16 %v518
    %v2506 = vunpack.c.h.b16 %v518
    %v2507 = vunpack.c.l.b16 %v519
    %v2508 = vunpack.c.h.b16 %v519
    %v2509 = vunpack.c.l.b16 %v520
    %v2510 = vunpack.c.h.b16 %v520
    %v2511 = vunpack.c.l.b16 %v521
    %v2512 = vunpack.c.h.b16 %v521
    %v2513 = vunpack.c.l.b16 %v522
    %v2514 = vunpack.c.h.b16 %v522
    %v2515 = vunpack.c.l.b16 %v523
    %v2516 = vunpack.c.h.b16 %v523
    %v2517 = vunpack.c.l.b16 %v524
    %v2518 = vunpack.c.h.b16 %v524
    %v2519 = vunpack.c.l.b16 %v525
    %v2520 = vunpack.c.h.b16 %v525
    %v2521 = vunpack.c.l.b16 %v526
    %v2522 = vunpack.c.h.b16 %v526
    %v2523 = vunpack.c.l.b16 %v527
    %v2524 = vunpack.c.h.b16 %v527
    %v2525 = vunpack.c.l.b16 %v528
    %v2526 = vunpack.c.h.b16 %v528
    %v2527 = vunpack.c.l.b16 %v529
    %v2528 = vunpack.c.h.b16 %v529
    %v2529 = vunpack.c.l.b16 %v530
    %v2530 = vunpack.c.h.b16 %v530
    %v2531 = vunpack.c.l.b16 %v531
    %v2532 = vunpack.c.h.b16 %v531
    %v2533 = vunpack.c.l.b16 %v532
    %v2534 = vunpack.c.h.b16 %v532
    %v2535 = vunpack.c.l.b16 %v533
    %v2536 = vunpack.c.h.b16 %v533
    %v2537 = vunpack.c.l.b16 %v534
    %v2538 = vunpack.c.h.b16 %v534
    %v2539 = vunpack.c.l.b16 %v535
    %v2540 = vunpack.c.h.b16 %v535
    %v2541 = vunpack.c.l.b16 %v536
    %v2542 = vunpack.c.h.b16 %v536
    %v2543 = vunpack.c.l.b16 %v537
    %v2544 = vunpack.c.h.b16 %v537
    %v2545 = vunpack.c.l.b16 %v538
    %v2546 = vunpack.c.h.b16 %v538
    %v2547 = vunpack.c.l.b16 %v539
    %v2548 = vunpack.c.h.b16 %v539
    %v2549 = vunpack.c.l.b16 %v540
    %v2550 = vunpack.c.h.b16 %v540
    %v2551 = vunpack.c.l.b16 %v541
    %v2552 = vunpack.c.h.b16 %v541
    %v2553 = vunpack.c.l.b16 %v542
    %v2554 = vunpack.c.h.b16 %v542
    %v2555 = vunpack.c.l.b16 %v543
    %v2556 = vunpack.c.h.b16 %v543
    %v2557 = vunpack.c.l.b16 %v544
    %v2558 = vunpack.c.h.b16 %v544
    %v2559 = vunpack.c.l.b16 %v545
    %v2560 = vunpack.c.h.b16 %v545
    %v2561 = vunpack.c.l.b16 %v546
    %v2562 = vunpack.c.h.b16 %v546
    %v2563 = vunpack.c.l.b16 %v547
    %v2564 = vunpack.c.h.b16 %v547
    %v2565 = vunpack.c.l.b16 %v548
    %v2566 = vunpack.c.h.b16 %v548
    %v2567 = vunpack.c.l.b16 %v549
    %v2568 = vunpack.c.h.b16 %v549
    %v2569 = vunpack.c.l.b16 %v550
    %v2570 = vunpack.c.h.b16 %v550
    %v2571 = vunpack.c.l.b16 %v551
    %v2572 = vunpack.c.h.b16 %v551
    %v2573 = vunpack.c.l.b16 %v552
    %v2574 = vunpack.c.h.b16 %v552
    %v2575 = vunpack.c.l.b16 %v553
    %v2576 = vunpack.c.h.b16 %v553
    %v2577 = vunpack.c.l.b16 %v554
    %v2578 = vunpack.c.h.b16 %v554
    %v2579 = vunpack.c.l.b16 %v555
    %v2580 = vunpack.c.h.b16 %v555
    %v2581 = vunpack.c.l.b16 %v556
    %v2582 = vunpack.c.h.b16 %v556
    %v2583 = vunpack.c.l.b16 %v557
    %v2584 = vunpack.c.h.b16 %v557
    %v2585 = vunpack.c.l.b16 %v558
    %v2586 = vunpack.c.h.b16 %v558
    %v2587 = vunpack.c.l.b16 %v559
    %v2588 = vunpack.c.h.b16 %v559
    %v2589 = vunpack.c.l.b16 %v560
    %v2590 = vunpack.c.h.b16 %v560
    %v2591 = vunpack.c.l.b16 %v561
    %v2592 = vunpack.c.h.b16 %v561
    %v2593 = vunpack.c.l.b16 %v562
    %v2594 = vunpack.c.h.b16 %v562
    %v2595 = vunpack.c.l.b16 %v563
    %v2596 = vunpack.c.h.b16 %v563
    %v2597 = vunpack.c.l.b16 %v564
    %v2598 = vunpack.c.h.b16 %v564
    %v2599 = vunpack.c.l.b16 %v565
    %v2600 = vunpack.c.h.b16 %v565
    %v2601 = vunpack.c.l.b16 %v566
    %v2602 = vunpack.c.h.b16 %v566
    %v2603 = vunpack.c.l.b16 %v567
    %v2604 = vunpack.c.h.b16 %v567
    %v2605 = vunpack.c.l.b16 %v568
    %v2606 = vunpack.c.h.b16 %v568
    %v2607 = vunpack.c.l.b16 %v569
    %v2608 = vunpack.c.h.b16 %v569
    %v2609 = vunpack.c.l.b16 %v570
    %v2610 = vunpack.c.h.b16 %v570
    %v2611 = vunpack.c.l.b16 %v571
    %v2612 = vunpack.c.h.b16 %v571
    %v2613 = vunpack.c.l.b16 %v572
    %v2614 = vunpack.c.h.b16 %v572
    %v2615 = vunpack.c.l.b16 %v573
    %v2616 = vunpack.c.h.b16 %v573
    %v2617 = vunpack.c.l.b16 %v574
    %v2618 = vunpack.c.h.b16 %v574
    %v2619 = vunpack.c.l.b16 %v575
    %v2620 = vunpack.c.h.b16 %v575
    %v2621 = vunpack.c.l.b16 %v576
    %v2622 = vunpack.c.h.b16 %v576
    %v2623 = vunpack.c.l.b16 %v577
    %v2624 = vunpack.c.h.b16 %v577
    %v2625 = vunpack.c.l.b16 %v578
    %v2626 = vunpack.c.h.b16 %v578
    %v2627 = vunpack.c.l.b16 %v579
    %v2628 = vunpack.c.h.b16 %v579
    %v2629 = vunpack.c.l.b16 %v580
    %v2630 = vunpack.c.h.b16 %v580
    %v2631 = vunpack.c.l.b16 %v581
    %v2632 = vunpack.c.h.b16 %v581
    %v2633 = vunpack.c.l.b16 %v582
    %v2634 = vunpack.c.h.b16 %v582
    %v2635 = vunpack.c.l.b16 %v583
    %v2636 = vunpack.c.h.b16 %v583
    %v2637 = vunpack.c.l.b16 %v584
    %v2638 = vunpack.c.h.b16 %v584
    %v2639 = vunpack.c.l.b16 %v585
    %v2640 = vunpack.c.h.b16 %v585
    %v2641 = vunpack.c.l.b16 %v586
    %v2642 = vunpack.c.h.b16 %v586
    %v2643 = vunpack.c.l.b16 %v587
    %v2644 = vunpack.c.h.b16 %v587
    %v2645 = vunpack.c.l.b16 %v588
    %v2646 = vunpack.c.h.b16 %v588
    %v2647 = vunpack.c.l.b16 %v589
    %v2648 = vunpack.c.h.b16 %v589
    %v2649 = vunpack.c.l.b16 %v590
    %v2650 = vunpack.c.h.b16 %v590
    %v2651 = vunpack.c.l.b16 %v591
    %v2652 = vunpack.c.h.b16 %v591
    %v2653 = vunpack.c.l.b16 %v592
    %v2654 = vunpack.c.h.b16 %v592
    %v2655 = vunpack.c.l.b16 %v593
    %v2656 = vunpack.c.h.b16 %v593
    %v2657 = vunpack.c.l.b16 %v594
    %v2658 = vunpack.c.h.b16 %v594
    %v2659 = vunpack.c.l.b16 %v595
    %v2660 = vunpack.c.h.b16 %v595
    %v2661 = vunpack.c.l.b16 %v596
    %v2662 = vunpack.c.h.b16 %v596
    %v2663 = vunpack.c.l.b16 %v597
    %v2664 = vunpack.c.h.b16 %v597
    %v2665 = vunpack.c.l.b16 %v598
    %v2666 = vunpack.c.h.b16 %v598
    %v2667 = vunpack.c.l.b16 %v599
    %v2668 = vunpack.c.h.b16 %v599
    %v2669 = vunpack.c.l.b16 %v600
    %v2670 = vunpack.c.h.b16 %v600
    %v2671 = vunpack.c.l.b16 %v601
    %v2672 = vunpack.c.h.b16 %v601
    %v2673 = vunpack.c.l.b16 %v602
    %v2674 = vunpack.c.h.b16 %v602
    %v2675 = vunpack.c.l.b16 %v603
    %v2676 = vunpack.c.h.b16 %v603
    %v2677 = vunpack.c.l.b16 %v604
    %v2678 = vunpack.c.h.b16 %v604
    %v2679 = vunpack.c.l.b16 %v605
    %v2680 = vunpack.c.h.b16 %v605
    %v2681 = vunpack.c.l.b16 %v606
    %v2682 = vunpack.c.h.b16 %v606
    %v2683 = vunpack.c.l.b16 %v607
    %v2684 = vunpack.c.h.b16 %v607
    %v2685 = vunpack.c.l.b16 %v608
    %v2686 = vunpack.c.h.b16 %v608
    %v2687 = vunpack.c.l.b16 %v609
    %v2688 = vunpack.c.h.b16 %v609
    %v2689 = vunpack.c.l.b16 %v610
    %v2690 = vunpack.c.h.b16 %v610
    %v2691 = vunpack.c.l.b16 %v611
    %v2692 = vunpack.c.h.b16 %v611
    %v2693 = vunpack.c.l.b16 %v612
    %v2694 = vunpack.c.h.b16 %v612
    %v2695 = vunpack.c.l.b16 %v613
    %v2696 = vunpack.c.h.b16 %v613
    %v2697 = vunpack.c.l.b16 %v614
    %v2698 = vunpack.c.h.b16 %v614
    %v2699 = vunpack.c.l.b16 %v615
    %v2700 = vunpack.c.h.b16 %v615
    %v2701 = vunpack.c.l.b16 %v616
    %v2702 = vunpack.c.h.b16 %v616
    %v2703 = vunpack.c.l.b16 %v617
    %v2704 = vunpack.c.h.b16 %v617
    %v2705 = vunpack.c.l.b16 %v618
    %v2706 = vunpack.c.h.b16 %v618
    %v2707 = vunpack.c.l.b16 %v619
    %v2708 = vunpack.c.h.b16 %v619
    %v2709 = vunpack.c.l.b16 %v620
    %v2710 = vunpack.c.h.b16 %v620
    %v2711 = vunpack.c.l.b16 %v621
    %v2712 = vunpack.c.h.b16 %v621
    %v2713 = vunpack.c.l.b16 %v622
    %v2714 = vunpack.c.h.b16 %v622
    %v2715 = vunpack.c.l.b16 %v623
    %v2716 = vunpack.c.h.b16 %v623
    %v2717 = vunpack.c.l.b16 %v624
    %v2718 = vunpack.c.h.b16 %v624
    %v2719 = vunpack.c.l.b16 %v625
    %v2720 = vunpack.c.h.b16 %v625
    %v2721 = vunpack.c.l.b16 %v626
    %v2722 = vunpack.c.h.b16 %v626
    %v2723 = vunpack.c.l.b16 %v627
    %v2724 = vunpack.c.h.b16 %v627
    %v2725 = vunpack.c.l.b16 %v628
    %v2726 = vunpack.c.h.b16 %v628
    %v2727 = vunpack.c.l.b16 %v629
    %v2728 = vunpack.c.h.b16 %v629
    %v2729 = vunpack.c.l.b16 %v630
    %v2730 = vunpack.c.h.b16 %v630
    %v2731 = vunpack.c.l.b16 %v631
    %v2732 = vunpack.c.h.b16 %v631
    %v2733 = vunpack.c.l.b16 %v632
    %v2734 = vunpack.c.h.b16 %v632
    %v2735 = vunpack.c.l.b16 %v633
    %v2736 = vunpack.c.h.b16 %v633
    %v2737 = vunpack.c.l.b16 %v634
    %v2738 = vunpack.c.h.b16 %v634
    %v2739 = vunpack.c.l.b16 %v635
    %v2740 = vunpack.c.h.b16 %v635
    %v2741 = vunpack.c.l.b16 %v636
    %v2742 = vunpack.c.h.b16 %v636
    %v2743 = vunpack.c.l.b16 %v637
    %v2744 = vunpack.c.h.b16 %v637
    %v2745 = vunpack.c.l.b16 %v638
    %v2746 = vunpack.c.h.b16 %v638
    %v2747 = vunpack.c.l.b16 %v639
    %v2748 = vunpack.c.h.b16 %v639
    %v2749 = vunpack.c.l.b16 %v640
    %v2750 = vunpack.c.h.b16 %v640
    %v2751 = vunpack.c.l.b16 %v641
    %v2752 = vunpack.c.h.b16 %v641
    %v2753 = vunpack.c.l.b16 %v642
    %v2754 = vunpack.c.h.b16 %v642
    %v2755 = vunpack.c.l.b16 %v643
    %v2756 = vunpack.c.h.b16 %v643
    %v2757 = vunpack.c.l.b16 %v644
    %v2758 = vunpack.c.h.b16 %v644
    %v2759 = vunpack.c.l.b16 %v645
    %v2760 = vunpack.c.h.b16 %v645
    %v2761 = vunpack.c.l.b16 %v646
    %v2762 = vunpack.c.h.b16 %v646
    %v2763 = vunpack.c.l.b16 %v647
    %v2764 = vunpack.c.h.b16 %v647
    %v2765 = vunpack.c.l.b16 %v648
    %v2766 = vunpack.c.h.b16 %v648
    %v2767 = vunpack.c.l.b16 %v649
    %v2768 = vunpack.c.h.b16 %v649
    %v2769 = vunpack.c.l.b16 %v650
    %v2770 = vunpack.c.h.b16 %v650
    %v2771 = vunpack.c.l.b16 %v651
    %v2772 = vunpack.c.h.b16 %v651
    %v2773 = vunpack.c.l.b16 %v652
    %v2774 = vunpack.c.h.b16 %v652
    %v2775 = vunpack.c.l.b16 %v653
    %v2776 = vunpack.c.h.b16 %v653
    %v2777 = vunpack.c.l.b16 %v654
    %v2778 = vunpack.c.h.b16 %v654
    %v2779 = vunpack.c.l.b16 %v655
    %v2780 = vunpack.c.h.b16 %v655
    %v2781 = vunpack.c.l.b16 %v656
    %v2782 = vunpack.c.h.b16 %v656
    %v2783 = vunpack.c.l.b16 %v657
    %v2784 = vunpack.c.h.b16 %v657
    %v2785 = vunpack.c.l.b16 %v658
    %v2786 = vunpack.c.h.b16 %v658
    %v2787 = vunpack.c.l.b16 %v659
    %v2788 = vunpack.c.h.b16 %v659
    %v2789 = vunpack.c.l.b16 %v660
    %v2790 = vunpack.c.h.b16 %v660
    %v2791 = vunpack.c.l.b16 %v661
    %v2792 = vunpack.c.h.b16 %v661
    %v2793 = vunpack.c.l.b16 %v662
    %v2794 = vunpack.c.h.b16 %v662
    %v2795 = vunpack.c.l.b16 %v663
    %v2796 = vunpack.c.h.b16 %v663
    %v2797 = vunpack.c.l.b16 %v664
    %v2798 = vunpack.c.h.b16 %v664
    %v2799 = vunpack.c.l.b16 %v665
    %v2800 = vunpack.c.h.b16 %v665
    %v2801 = vunpack.c.l.b16 %v666
    %v2802 = vunpack.c.h.b16 %v666
    %v2803 = vunpack.c.l.b16 %v667
    %v2804 = vunpack.c.h.b16 %v667
    %v2805 = vunpack.c.l.b16 %v668
    %v2806 = vunpack.c.h.b16 %v668
    %v2807 = vunpack.c.l.b16 %v669
    %v2808 = vunpack.c.h.b16 %v669
    %v2809 = vunpack.c.l.b16 %v670
    %v2810 = vunpack.c.h.b16 %v670
    %v2811 = vunpack.c.l.b16 %v671
    %v2812 = vunpack.c.h.b16 %v671
    %v2813 = vunpack.c.l.b16 %v672
    %v2814 = vunpack.c.h.b16 %v672
    %v2815 = vunpack.c.l.b16 %v673
    %v2816 = vunpack.c.h.b16 %v673
    %v2817 = vunpack.c.l.b16 %v674
    %v2818 = vunpack.c.h.b16 %v674
    %v2819 = vunpack.c.l.b16 %v675
    %v2820 = vunpack.c.h.b16 %v675
    %v2821 = vunpack.c.l.b16 %v676
    %v2822 = vunpack.c.h.b16 %v676
    %v2823 = vunpack.c.l.b16 %v677
    %v2824 = vunpack.c.h.b16 %v677
    %v2825 = vunpack.c.l.b16 %v678
    %v2826 = vunpack.c.h.b16 %v678
    %v2827 = vunpack.c.l.b16 %v679
    %v2828 = vunpack.c.h.b16 %v679
    %v2829 = vunpack.c.l.b16 %v680
    %v2830 = vunpack.c.h.b16 %v680
    %v2831 = vunpack.c.l.b16 %v681
    %v2832 = vunpack.c.h.b16 %v681
    %v2833 = vunpack.c.l.b16 %v682
    %v2834 = vunpack.c.h.b16 %v682
    %v2835 = vunpack.c.l.b16 %v683
    %v2836 = vunpack.c.h.b16 %v683
    %v2837 = vunpack.c.l.b16 %v684
    %v2838 = vunpack.c.h.b16 %v684
    %v2839 = vunpack.c.l.b16 %v685
    %v2840 = vunpack.c.h.b16 %v685
    %v2841 = vunpack.c.l.b16 %v686
    %v2842 = vunpack.c.h.b16 %v686
    %v2843 = vunpack.c.l.b16 %v687
    %v2844 = vunpack.c.h.b16 %v687
    %v2845 = vunpack.c.l.b16 %v688
    %v2846 = vunpack.c.h.b16 %v688
    %v2847 = vunpack.c.l.b16 %v689
    %v2848 = vunpack.c.h.b16 %v689
    %v2849 = vunpack.c.l.b16 %v690
    %v2850 = vunpack.c.h.b16 %v690
    %v2851 = vunpack.c.l.b16 %v691
    %v2852 = vunpack.c.h.b16 %v691
    %v2853 = vunpack.c.l.b16 %v692
    %v2854 = vunpack.c.h.b16 %v692
    %v2855 = vunpack.c.l.b16 %v693
    %v2856 = vunpack.c.h.b16 %v693
    %v2857 = vunpack.c.l.b16 %v694
    %v2858 = vunpack.c.h.b16 %v694
    %v2859 = vunpack.c.l.b16 %v695
    %v2860 = vunpack.c.h.b16 %v695
    %v2861 = vunpack.c.l.b16 %v696
    %v2862 = vunpack.c.h.b16 %v696
    %v2863 = vunpack.c.l.b16 %v697
    %v2864 = vunpack.c.h.b16 %v697
    %v2865 = vunpack.c.l.b16 %v698
    %v2866 = vunpack.c.h.b16 %v698
    %v2867 = vunpack.c.l.b16 %v699
    %v2868 = vunpack.c.h.b16 %v699
    %v2869 = vunpack.c.l.b16 %v700
    %v2870 = vunpack.c.h.b16 %v700
    %v2871 = vunpack.c.l.b16 %v701
    %v2872 = vunpack.c.h.b16 %v701
    %v2873 = vunpack.c.l.b16 %v702
    %v2874 = vunpack.c.h.b16 %v702
    %v2875 = vunpack.c.l.b16 %v703
    %v2876 = vunpack.c.h.b16 %v703
    %v2877 = vunpack.c.l.b16 %v704
    %v2878 = vunpack.c.h.b16 %v704
    %v2879 = vunpack.c.l.b16 %v705
    %v2880 = vunpack.c.h.b16 %v705
    %v2881 = vunpack.c.l.b16 %v706
    %v2882 = vunpack.c.h.b16 %v706
    %v2883 = vunpack.c.l.b16 %v707
    %v2884 = vunpack.c.h.b16 %v707
    %v2885 = vunpack.c.l.b16 %v708
    %v2886 = vunpack.c.h.b16 %v708
    %v2887 = vunpack.c.l.b16 %v709
    %v2888 = vunpack.c.h.b16 %v709
    %v2889 = vunpack.c.l.b16 %v710
    %v2890 = vunpack.c.h.b16 %v710
    %v2891 = vunpack.c.l.b16 %v711
    %v2892 = vunpack.c.h.b16 %v711
    %v2893 = vunpack.c.l.b16 %v712
    %v2894 = vunpack.c.h.b16 %v712
    %v2895 = vunpack.c.l.b16 %v713
    %v2896 = vunpack.c.h.b16 %v713
    %v2897 = vunpack.c.l.b16 %v714
    %v2898 = vunpack.c.h.b16 %v714
    %v2899 = vunpack.c.l.b16 %v715
    %v2900 = vunpack.c.h.b16 %v715
    %v2901 = vunpack.c.l.b16 %v716
    %v2902 = vunpack.c.h.b16 %v716
    %v2903 = vunpack.c.l.b16 %v717
    %v2904 = vunpack.c.h.b16 %v717
    %v2905 = vunpack.c.l.b16 %v718
    %v2906 = vunpack.c.h.b16 %v718
    %v2907 = vunpack.c.l.b16 %v719
    %v2908 = vunpack.c.h.b16 %v719
    %v2909 = vunpack.c.l.b16 %v720
    %v2910 = vunpack.c.h.b16 %v720
    %v2911 = vunpack.c.l.b16 %v721
    %v2912 = vunpack.c.h.b16 %v721
    %v2913 = vunpack.c.l.b16 %v722
    %v2914 = vunpack.c.h.b16 %v722
    %v2915 = vunpack.c.l.b16 %v723
    %v2916 = vunpack.c.h.b16 %v723
    %v2917 = vunpack.c.l.b16 %v724
    %v2918 = vunpack.c.h.b16 %v724
    %v2919 = vunpack.c.l.b16 %v725
    %v2920 = vunpack.c.h.b16 %v725
    %v2921 = vunpack.c.l.b16 %v726
    %v2922 = vunpack.c.h.b16 %v726
    %v2923 = vunpack.c.l.b16 %v727
    %v2924 = vunpack.c.h.b16 %v727
    %v2925 = vunpack.c.l.b16 %v728
    %v2926 = vunpack.c.h.b16 %v728
    %v2927 = vunpack.c.l.b16 %v729
    %v2928 = vunpack.c.h.b16 %v729
    %v2929 = vunpack.c.l.b16 %v730
    %v2930 = vunpack.c.h.b16 %v730
    %v2931 = vunpack.c.l.b16 %v731
    %v2932 = vunpack.c.h.b16 %v731
    %v2933 = vunpack.c.l.b16 %v732
    %v2934 = vunpack.c.h.b16 %v732
    %v2935 = vunpack.c.l.b16 %v733
    %v2936 = vunpack.c.h.b16 %v733
    %v2937 = vunpack.c.l.b16 %v734
    %v2938 = vunpack.c.h.b16 %v734
    %v2939 = vunpack.c.l.b16 %v735
    %v2940 = vunpack.c.h.b16 %v735
    %v2941 = vunpack.c.l.b16 %v736
    %v2942 = vunpack.c.h.b16 %v736
    %v2943 = vunpack.c.l.b16 %v737
    %v2944 = vunpack.c.h.b16 %v737
    %v2945 = vunpack.c.l.b16 %v738
    %v2946 = vunpack.c.h.b16 %v738
    %v2947 = vunpack.c.l.b16 %v739
    %v2948 = vunpack.c.h.b16 %v739
    %v2949 = vunpack.c.l.b16 %v740
    %v2950 = vunpack.c.h.b16 %v740
    %v2951 = vunpack.c.l.b16 %v741
    %v2952 = vunpack.c.h.b16 %v741
    %v2953 = vunpack.c.l.b16 %v742
    %v2954 = vunpack.c.h.b16 %v742
    %v2955 = vunpack.c.l.b16 %v743
    %v2956 = vunpack.c.h.b16 %v743
    %v2957 = vunpack.c.l.b16 %v744
    %v2958 = vunpack.c.h.b16 %v744
    %v2959 = vunpack.c.l.b16 %v745
    %v2960 = vunpack.c.h.b16 %v745
    %v2961 = vunpack.c.l.b16 %v746
    %v2962 = vunpack.c.h.b16 %v746
    %v2963 = vunpack.c.l.b16 %v747
    %v2964 = vunpack.c.h.b16 %v747
    %v2965 = vunpack.c.l.b16 %v748
    %v2966 = vunpack.c.h.b16 %v748
    %v2967 = vunpack.c.l.b16 %v749
    %v2968 = vunpack.c.h.b16 %v749
    %v2969 = vunpack.c.l.b16 %v750
    %v2970 = vunpack.c.h.b16 %v750
    %v2971 = vunpack.c.l.b16 %v751
    %v2972 = vunpack.c.h.b16 %v751
    %v2973 = vunpack.c.l.b16 %v752
    %v2974 = vunpack.c.h.b16 %v752
    %v2975 = vunpack.c.l.b16 %v753
    %v2976 = vunpack.c.h.b16 %v753
    %v2977 = vunpack.c.l.b16 %v754
    %v2978 = vunpack.c.h.b16 %v754
    %v2979 = vunpack.c.l.b16 %v755
    %v2980 = vunpack.c.h.b16 %v755
    %v2981 = vunpack.c.l.b16 %v756
    %v2982 = vunpack.c.h.b16 %v756
    %v2983 = vunpack.c.l.b16 %v757
    %v2984 = vunpack.c.h.b16 %v757
    %v2985 = vunpack.c.l.b16 %v758
    %v2986 = vunpack.c.h.b16 %v758
    %v2987 = vunpack.c.l.b16 %v759
    %v2988 = vunpack.c.h.b16 %v759
    %v2989 = vunpack.c.l.b16 %v760
    %v2990 = vunpack.c.h.b16 %v760
    %v2991 = vunpack.c.l.b16 %v761
    %v2992 = vunpack.c.h.b16 %v761
    %v2993 = vunpack.c.l.b16 %v762
    %v2994 = vunpack.c.h.b16 %v762
    %v2995 = vunpack.c.l.b16 %v763
    %v2996 = vunpack.c.h.b16 %v763
    %v2997 = vunpack.c.l.b16 %v764
    %v2998 = vunpack.c.h.b16 %v764
    %v2999 = vunpack.c.l.b16 %v765
    %v3000 = vunpack.c.h.b16 %v765
    %v3001 = vunpack.c.l.b16 %v766
    %v3002 = vunpack.c.h.b16 %v766
    %v3003 = vunpack.c.l.b16 %v767
    %v3004 = vunpack.c.h.b16 %v767
    %v3005 = vunpack.c.l.b16 %v768
    %v3006 = vunpack.c.h.b16 %v768
    %v3007 = vunpack.c.l.b16 %v769
    %v3008 = vunpack.c.h.b16 %v769
    %v3009 = vunpack.c.l.b16 %v770
    %v3010 = vunpack.c.h.b16 %v770
    %v3011 = vunpack.c.l.b16 %v771
    %v3012 = vunpack.c.h.b16 %v771
    %v3013 = vunpack.c.l.b16 %v772
    %v3014 = vunpack.c.h.b16 %v772
    %v3015 = vunpack.c.l.b16 %v773
    %v3016 = vunpack.c.h.b16 %v773
    %v3017 = vunpack.c.l.b16 %v774
    %v3018 = vunpack.c.h.b16 %v774
    %v3019 = vunpack.c.l.b16 %v775
    %v3020 = vunpack.c.h.b16 %v775
    %v3021 = vunpack.c.l.b16 %v776
    %v3022 = vunpack.c.h.b16 %v776
    %v3023 = vunpack.c.l.b16 %v777
    %v3024 = vunpack.c.h.b16 %v777
    %v3025 = vunpack.c.l.b16 %v778
    %v3026 = vunpack.c.h.b16 %v778
    %v3027 = vunpack.c.l.b16 %v779
    %v3028 = vunpack.c.h.b16 %v779
    %v3029 = vunpack.c.l.b16 %v780
    %v3030 = vunpack.c.h.b16 %v780
    %v3031 = vunpack.c.l.b16 %v781
    %v3032 = vunpack.c.h.b16 %v781
    %v3033 = vunpack.c.l.b16 %v782
    %v3034 = vunpack.c.h.b16 %v782
    %v3035 = vunpack.c.l.b16 %v783
    %v3036 = vunpack.c.h.b16 %v783
    %v3037 = vunpack.c.l.b16 %v784
    %v3038 = vunpack.c.h.b16 %v784
    %v3039 = vunpack.c.l.b16 %v785
    %v3040 = vunpack.c.h.b16 %v785
    %v3041 = vunpack.c.l.b16 %v786
    %v3042 = vunpack.c.h.b16 %v786
    %v3043 = vunpack.c.l.b16 %v787
    %v3044 = vunpack.c.h.b16 %v787
    %v3045 = vunpack.c.l.b16 %v788
    %v3046 = vunpack.c.h.b16 %v788
    %v3047 = vunpack.c.l.b16 %v789
    %v3048 = vunpack.c.h.b16 %v789
    %v3049 = vunpack.c.l.b16 %v790
    %v3050 = vunpack.c.h.b16 %v790
    %v3051 = vunpack.c.l.b16 %v791
    %v3052 = vunpack.c.h.b16 %v791
    %v3053 = vunpack.c.l.b16 %v792
    %v3054 = vunpack.c.h.b16 %v792
    %v3055 = vunpack.c.l.b16 %v793
    %v3056 = vunpack.c.h.b16 %v793
    %v3057 = vunpack.c.l.b16 %v794
    %v3058 = vunpack.c.h.b16 %v794
    %v3059 = vunpack.c.l.b16 %v795
    %v3060 = vunpack.c.h.b16 %v795
    %v3061 = vunpack.c.l.b16 %v796
    %v3062 = vunpack.c.h.b16 %v796
    %v3063 = vunpack.c.l.b16 %v797
    %v3064 = vunpack.c.h.b16 %v797
    %v3065 = vunpack.c.l.b16 %v798
    %v3066 = vunpack.c.h.b16 %v798
    %v3067 = vunpack.c.l.b16 %v799
    %v3068 = vunpack.c.h.b16 %v799
    %v3069 = vunpack.c.l.b16 %v800
    %v3070 = vunpack.c.h.b16 %v800
    %v3071 = vunpack.c.l.b16 %v801
    %v3072 = vunpack.c.h.b16 %v801
    %v3073 = vunpack.c.l.b16 %v802
    %v3074 = vunpack.c.h.b16 %v802
    %v3075 = vunpack.c.l.b16 %v803
    %v3076 = vunpack.c.h.b16 %v803
    %v3077 = vunpack.c.l.b16 %v804
    %v3078 = vunpack.c.h.b16 %v804
    %v3079 = vunpack.c.l.b16 %v805
    %v3080 = vunpack.c.h.b16 %v805
    %v3081 = vunpack.c.l.b16 %v806
    %v3082 = vunpack.c.h.b16 %v806
    %v3083 = vunpack.c.l.b16 %v807
    %v3084 = vunpack.c.h.b16 %v807
    %v3085 = vunpack.c.l.b16 %v808
    %v3086 = vunpack.c.h.b16 %v808
    %v3087 = vunpack.c.l.b16 %v809
    %v3088 = vunpack.c.h.b16 %v809
    %v3089 = vunpack.c.l.b16 %v810
    %v3090 = vunpack.c.h.b16 %v810
    %v3091 = vunpack.c.l.b16 %v811
    %v3092 = vunpack.c.h.b16 %v811
    %v3093 = vunpack.c.l.b16 %v812
    %v3094 = vunpack.c.h.b16 %v812
    %v3095 = vunpack.c.l.b16 %v813
    %v3096 = vunpack.c.h.b16 %v813
    %v3097 = vunpack.c.l.b16 %v814
    %v3098 = vunpack.c.h.b16 %v814
    %v3099 = vunpack.c.l.b16 %v815
    %v3100 = vunpack.c.h.b16 %v815
    %v3101 = vunpack.c.l.b16 %v816
    %v3102 = vunpack.c.h.b16 %v816
    %v3103 = vunpack.c.l.b16 %v817
    %v3104 = vunpack.c.h.b16 %v817
    %v3105 = vunpack.c.l.b16 %v818
    %v3106 = vunpack.c.h.b16 %v818
    %v3107 = vunpack.c.l.b16 %v819
    %v3108 = vunpack.c.h.b16 %v819
    %v3109 = vunpack.c.l.b16 %v820
    %v3110 = vunpack.c.h.b16 %v820
    %v3111 = vunpack.c.l.b16 %v821
    %v3112 = vunpack.c.h.b16 %v821
    %v3113 = vunpack.c.l.b16 %v822
    %v3114 = vunpack.c.h.b16 %v822
    %v3115 = vunpack.c.l.b16 %v823
    %v3116 = vunpack.c.h.b16 %v823
    %v3117 = vunpack.c.l.b16 %v824
    %v3118 = vunpack.c.h.b16 %v824
    %v3119 = vunpack.c.l.b16 %v825
    %v3120 = vunpack.c.h.b16 %v825
    %v3121 = vunpack.c.l.b16 %v826
    %v3122 = vunpack.c.h.b16 %v826
    %v3123 = vunpack.c.l.b16 %v827
    %v3124 = vunpack.c.h.b16 %v827
    %v3125 = vunpack.c.l.b16 %v828
    %v3126 = vunpack.c.h.b16 %v828
    %v3127 = vunpack.c.l.b16 %v829
    %v3128 = vunpack.c.h.b16 %v829
    %v3129 = vunpack.c.l.b16 %v830
    %v3130 = vunpack.c.h.b16 %v830
    %v3131 = vunpack.c.l.b16 %v831
    %v3132 = vunpack.c.h.b16 %v831
    %v3133 = vunpack.c.l.b16 %v832
    %v3134 = vunpack.c.h.b16 %v832
    %v3135 = vunpack.c.l.b16 %v833
    %v3136 = vunpack.c.h.b16 %v833
    %v3137 = vunpack.c.l.b16 %v834
    %v3138 = vunpack.c.h.b16 %v834
    %v3139 = vunpack.c.l.b16 %v835
    %v3140 = vunpack.c.h.b16 %v835
    %v3141 = vunpack.c.l.b16 %v836
    %v3142 = vunpack.c.h.b16 %v836
    %v3143 = vunpack.c.l.b16 %v837
    %v3144 = vunpack.c.h.b16 %v837
    %v3145 = vunpack.c.l.b16 %v838
    %v3146 = vunpack.c.h.b16 %v838
    %v3147 = vunpack.c.l.b16 %v839
    %v3148 = vunpack.c.h.b16 %v839
    %v3149 = vunpack.c.l.b16 %v840
    %v3150 = vunpack.c.h.b16 %v840
    %v3151 = vunpack.c.l.b16 %v841
    %v3152 = vunpack.c.h.b16 %v841
    %v3153 = vunpack.c.l.b16 %v842
    %v3154 = vunpack.c.h.b16 %v842
    %v3155 = vunpack.c.l.b16 %v843
    %v3156 = vunpack.c.h.b16 %v843
    %v3157 = vunpack.c.l.b16 %v844
    %v3158 = vunpack.c.h.b16 %v844
    %v3159 = vunpack.c.l.b16 %v845
    %v3160 = vunpack.c.h.b16 %v845
    %v3161 = vunpack.c.l.b16 %v846
    %v3162 = vunpack.c.h.b16 %v846
    %v3163 = vunpack.c.l.b16 %v847
    %v3164 = vunpack.c.h.b16 %v847
    %v3165 = vunpack.c.l.b16 %v848
    %v3166 = vunpack.c.h.b16 %v848
    %v3167 = vunpack.c.l.b16 %v849
    %v3168 = vunpack.c.h.b16 %v849
    %v3169 = vunpack.c.l.b16 %v850
    %v3170 = vunpack.c.h.b16 %v850
    %v3171 = vunpack.c.l.b16 %v851
    %v3172 = vunpack.c.h.b16 %v851
    %v3173 = vunpack.c.l.b16 %v852
    %v3174 = vunpack.c.h.b16 %v852
    %v3175 = vunpack.c.l.b16 %v853
    %v3176 = vunpack.c.h.b16 %v853
    %v3177 = vunpack.c.l.b16 %v854
    %v3178 = vunpack.c.h.b16 %v854
    %v3179 = vunpack.c.l.b16 %v855
    %v3180 = vunpack.c.h.b16 %v855
    %v3181 = vunpack.c.l.b16 %v856
    %v3182 = vunpack.c.h.b16 %v856
    %v3183 = vunpack.c.l.b16 %v857
    %v3184 = vunpack.c.h.b16 %v857
    %v3185 = vunpack.c.l.b16 %v858
    %v3186 = vunpack.c.h.b16 %v858
    %v3187 = vunpack.c.l.b16 %v859
    %v3188 = vunpack.c.h.b16 %v859
    %v3189 = vunpack.c.l.b16 %v860
    %v3190 = vunpack.c.h.b16 %v860
    %v3191 = vunpack.c.l.b16 %v861
    %v3192 = vunpack.c.h.b16 %v861
    %v3193 = vunpack.c.l.b16 %v862
    %v3194 = vunpack.c.h.b16 %v862
    %v3195 = vunpack.c.l.b16 %v863
    %v3196 = vunpack.c.h.b16 %v863
    %v3197 = vunpack.c.l.b16 %v864
    %v3198 = vunpack.c.h.b16 %v864
    %v3199 = vunpack.c.l.b16 %v865
    %v3200 = vunpack.c.h.b16 %v865
    %v3201 = vunpack.c.l.b16 %v866
    %v3202 = vunpack.c.h.b16 %v866
    %v3203 = vunpack.c.l.b16 %v867
    %v3204 = vunpack.c.h.b16 %v867
    %v3205 = vunpack.c.l.b16 %v868
    %v3206 = vunpack.c.h.b16 %v868
    %v3207 = vunpack.c.l.b16 %v869
    %v3208 = vunpack.c.h.b16 %v869
    %v3209 = vunpack.c.l.b16 %v870
    %v3210 = vunpack.c.h.b16 %v870
    %v3211 = vunpack.c.l.b16 %v871
    %v3212 = vunpack.c.h.b16 %v871
    %v3213 = vunpack.c.l.b16 %v872
    %v3214 = vunpack.c.h.b16 %v872
    %v3215 = vunpack.c.l.b16 %v873
    %v3216 = vunpack.c.h.b16 %v873
    %v3217 = vunpack.c.l.b16 %v874
    %v3218 = vunpack.c.h.b16 %v874
    %v3219 = vunpack.c.l.b16 %v875
    %v3220 = vunpack.c.h.b16 %v875
    %v3221 = vunpack.c.l.b16 %v876
    %v3222 = vunpack.c.h.b16 %v876
    %v3223 = vunpack.c.l.b16 %v877
    %v3224 = vunpack.c.h.b16 %v877
    %v3225 = vunpack.c.l.b16 %v878
    %v3226 = vunpack.c.h.b16 %v878
    %v3227 = vunpack.c.l.b16 %v879
    %v3228 = vunpack.c.h.b16 %v879
    %v3229 = vunpack.c.l.b16 %v880
    %v3230 = vunpack.c.h.b16 %v880
    %v3231 = vunpack.c.l.b16 %v881
    %v3232 = vunpack.c.h.b16 %v881
    %v3233 = vunpack.c.l.b16 %v882
    %v3234 = vunpack.c.h.b16 %v882
    %v3235 = vunpack.c.l.b16 %v883
    %v3236 = vunpack.c.h.b16 %v883
    %v3237 = vunpack.c.l.b16 %v884
    %v3238 = vunpack.c.h.b16 %v884
    %v3239 = vunpack.c.l.b16 %v885
    %v3240 = vunpack.c.h.b16 %v885
    %v3241 = vunpack.c.l.b16 %v886
    %v3242 = vunpack.c.h.b16 %v886
    %v3243 = vunpack.c.l.b16 %v887
    %v3244 = vunpack.c.h.b16 %v887
    %v3245 = vunpack.c.l.b16 %v888
    %v3246 = vunpack.c.h.b16 %v888
    %v3247 = vunpack.c.l.b16 %v889
    %v3248 = vunpack.c.h.b16 %v889
    %v3249 = vunpack.c.l.b16 %v890
    %v3250 = vunpack.c.h.b16 %v890
    %v3251 = vunpack.c.l.b16 %v891
    %v3252 = vunpack.c.h.b16 %v891
    %v3253 = vunpack.c.l.b16 %v892
    %v3254 = vunpack.c.h.b16 %v892
    %v3255 = vunpack.c.l.b16 %v893
    %v3256 = vunpack.c.h.b16 %v893
    %v3257 = vunpack.c.l.b16 %v894
    %v3258 = vunpack.c.h.b16 %v894
    %v3259 = vunpack.c.l.b16 %v895
    %v3260 = vunpack.c.h.b16 %v895
    %v3261 = vunpack.c.l.b16 %v896
    %v3262 = vunpack.c.h.b16 %v896
    %v3263 = vunpack.c.l.b16 %v897
    %v3264 = vunpack.c.h.b16 %v897
    %v3265 = vunpack.c.l.b16 %v898
    %v3266 = vunpack.c.h.b16 %v898
    %v3267 = vunpack.c.l.b16 %v899
    %v3268 = vunpack.c.h.b16 %v899
    %v3269 = vunpack.c.l.b16 %v900
    %v3270 = vunpack.c.h.b16 %v900
    %v3271 = vunpack.c.l.b16 %v901
    %v3272 = vunpack.c.h.b16 %v901
    %v3273 = vunpack.c.l.b16 %v902
    %v3274 = vunpack.c.h.b16 %v902
    %v3275 = vunpack.c.l.b16 %v903
    %v3276 = vunpack.c.h.b16 %v903
    %v3277 = vunpack.c.l.b16 %v904
    %v3278 = vunpack.c.h.b16 %v904
    %v3279 = vunpack.c.l.b16 %v905
    %v3280 = vunpack.c.h.b16 %v905
    %v3281 = vunpack.c.l.b16 %v906
    %v3282 = vunpack.c.h.b16 %v906
    %v3283 = vunpack.c.l.b16 %v907
    %v3284 = vunpack.c.h.b16 %v907
    %v3285 = vunpack.c.l.b16 %v908
    %v3286 = vunpack.c.h.b16 %v908
    %v3287 = vunpack.c.l.b16 %v909
    %v3288 = vunpack.c.h.b16 %v909
    %v3289 = vunpack.c.l.b16 %v910
    %v3290 = vunpack.c.h.b16 %v910
    %v3291 = vunpack.c.l.b16 %v911
    %v3292 = vunpack.c.h.b16 %v911
    %v3293 = vunpack.c.l.b16 %v912
    %v3294 = vunpack.c.h.b16 %v912
    %v3295 = vunpack.c.l.b16 %v913
    %v3296 = vunpack.c.h.b16 %v913
    %v3297 = vunpack.c.l.b16 %v914
    %v3298 = vunpack.c.h.b16 %v914
    %v3299 = vunpack.c.l.b16 %v915
    %v3300 = vunpack.c.h.b16 %v915
    %v3301 = vunpack.c.l.b16 %v916
    %v3302 = vunpack.c.h.b16 %v916
    %v3303 = vunpack.c.l.b16 %v917
    %v3304 = vunpack.c.h.b16 %v917
    %v3305 = vunpack.c.l.b16 %v918
    %v3306 = vunpack.c.h.b16 %v918
    %v3307 = vunpack.c.l.b16 %v919
    %v3308 = vunpack.c.h.b16 %v919
    %v3309 = vunpack.c.l.b16 %v920
    %v3310 = vunpack.c.h.b16 %v920
    %v3311 = vunpack.c.l.b16 %v921
    %v3312 = vunpack.c.h.b16 %v921
    %v3313 = vunpack.c.l.b16 %v922
    %v3314 = vunpack.c.h.b16 %v922
    %v3315 = vunpack.c.l.b16 %v923
    %v3316 = vunpack.c.h.b16 %v923
    %v3317 = vunpack.c.l.b16 %v924
    %v3318 = vunpack.c.h.b16 %v924
    %v3319 = vunpack.c.l.b16 %v925
    %v3320 = vunpack.c.h.b16 %v925
    %v3321 = vunpack.c.l.b16 %v926
    %v3322 = vunpack.c.h.b16 %v926
    %v3323 = vunpack.c.l.b16 %v927
    %v3324 = vunpack.c.h.b16 %v927
    %v3325 = vunpack.c.l.b16 %v928
    %v3326 = vunpack.c.h.b16 %v928
    %v3327 = vpack.c.b16 %v1795, %v1791
    %v3328 = vpack.c.b16 %v1796, %v1792
    %v3329 = vpack.c.b16 %v1797, %v1793
    %v3330 = vpack.c.b16 %v1798, %v1794
    %v3331 = vpack.c.b16 %v1803, %v1799
    %v3332 = vpack.c.b16 %v1804, %v1800
    %v3333 = vpack.c.b16 %v1805, %v1801
    %v3334 = vpack.c.b16 %v1806, %v1802
    %v3335 = vpack.c.b16 %v1811, %v1807
    %v3336 = vpack.c.b16 %v1812, %v1808
    %v3337 = vpack.c.b16 %v1813, %v1809
    %v3338 = vpack.c.b16 %v1814, %v1810
    %v3339 = vpack.c.b16 %v1819, %v1815
    %v3340 = vpack.c.b16 %v1820, %v1816
    %v3341 = vpack.c.b16 %v1821, %v1817
    %v3342 = vpack.c.b16 %v1822, %v1818
    %v3343 = vpack.c.b16 %v1827, %v1823
    %v3344 = vpack.c.b16 %v1828, %v1824
    %v3345 = vpack.c.b16 %v1829, %v1825
    %v3346 = vpack.c.b16 %v1830, %v1826
    %v3347 = vpack.c.b16 %v1835, %v1831
    %v3348 = vpack.c.b16 %v1836, %v1832
    %v3349 = vpack.c.b16 %v1837, %v1833
    %v3350 = vpack.c.b16 %v1838, %v1834
    %v3351 = vpack.c.b16 %v1843, %v1839
    %v3352 = vpack.c.b16 %v1844, %v1840
    %v3353 = vpack.c.b16 %v1845, %v1841
    %v3354 = vpack.c.b16 %v1846, %v1842
    %v3355 = vpack.c.b16 %v1851, %v1847
    %v3356 = vpack.c.b16 %v1852, %v1848
    %v3357 = vpack.c.b16 %v1853, %v1849
    %v3358 = vpack.c.b16 %v1854, %v1850
    %v3359 = vpack.c.b16 %v1859, %v1855
    %v3360 = vpack.c.b16 %v1860, %v1856
    %v3361 = vpack.c.b16 %v1861, %v1857
    %v3362 = vpack.c.b16 %v1862, %v1858
    %v3363 = vpack.c.b16 %v1867, %v1863
    %v3364 = vpack.c.b16 %v1868, %v1864
    %v3365 = vpack.c.b16 %v1869, %v1865
    %v3366 = vpack.c.b16 %v1870, %v1866
    %v3367 = vpack.c.b16 %v1875, %v1871
    %v3368 = vpack.c.b16 %v1876, %v1872
    %v3369 = vpack.c.b16 %v1877, %v1873
    %v3370 = vpack.c.b16 %v1878, %v1874
    %v3371 = vpack.c.b16 %v1883, %v1879
    %v3372 = vpack.c.b16 %v1884, %v1880
    %v3373 = vpack.c.b16 %v1885, %v1881
    %v3374 = vpack.c.b16 %v1886, %v1882
    %v3375 = vpack.c.b16 %v1891, %v1887
    %v3376 = vpack.c.b16 %v1892, %v1888
    %v3377 = vpack.c.b16 %v1893, %v1889
    %v3378 = vpack.c.b16 %v1894, %v1890
    %v3379 = vpack.c.b16 %v1899, %v1895
    %v3380 = vpack.c.b16 %v1900, %v1896
    %v3381 = vpack.c.b16 %v1901, %v1897
    %v3382 = vpack.c.b16 %v1902, %v1898
    %v3383 = vpack.c.b16 %v1907, %v1903
    %v3384 = vpack.c.b16 %v1908, %v1904
    %v3385 = vpack.c.b16 %v1909, %v1905
    %v3386 = vpack.c.b16 %v1910, %v1906
    %v3387 = vpack.c.b16 %v1915, %v1911
    %v3388 = vpack.c.b16 %v1916, %v1912
    %v3389 = vpack.c.b16 %v1917, %v1913
    %v3390 = vpack.c.b16 %v1918, %v1914
    %v3391 = vpack.c.b16 %v1923, %v1919
    %v3392 = vpack.c.b16 %v1924, %v1920
    %v3393 = vpack.c.b16 %v1925, %v1921
    %v3394 = vpack.c.b16 %v1926, %v1922
    %v3395 = vpack.c.b16 %v1931, %v1927
    %v3396 = vpack.c.b16 %v1932, %v1928
    %v3397 = vpack.c.b16 %v1933, %v1929
    %v3398 = vpack.c.b16 %v1934, %v1930
    %v3399 = vpack.c.b16 %v1939, %v1935
    %v3400 = vpack.c.b16 %v1940, %v1936
    %v3401 = vpack.c.b16 %v1941, %v1937
    %v3402 = vpack.c.b16 %v1942, %v1938
    %v3403 = vpack.c.b16 %v1947, %v1943
    %v3404 = vpack.c.b16 %v1948, %v1944
    %v3405 = vpack.c.b16 %v1949, %v1945
    %v3406 = vpack.c.b16 %v1950, %v1946
    %v3407 = vpack.c.b16 %v1955, %v1951
    %v3408 = vpack.c.b16 %v1956, %v1952
    %v3409 = vpack.c.b16 %v1957, %v1953
    %v3410 = vpack.c.b16 %v1958, %v1954
    %v3411 = vpack.c.b16 %v1963, %v1959
    %v3412 = vpack.c.b16 %v1964, %v1960
    %v3413 = vpack.c.b16 %v1965, %v1961
    %v3414 = vpack.c.b16 %v1966, %v1962
    %v3415 = vpack.c.b16 %v1971, %v1967
    %v3416 = vpack.c.b16 %v1972, %v1968
    %v3417 = vpack.c.b16 %v1973, %v1969
    %v3418 = vpack.c.b16 %v1974, %v1970
    %v3419 = vpack.c.b16 %v1979, %v1975
    %v3420 = vpack.c.b16 %v1980, %v1976
    %v3421 = vpack.c.b16 %v1981, %v1977
    %v3422 = vpack.c.b16 %v1982, %v1978
    %v3423 = vpack.c.b16 %v1987, %v1983
    %v3424 = vpack.c.b16 %v1988, %v1984
    %v3425 = vpack.c.b16 %v1989, %v1985
    %v3426 = vpack.c.b16 %v1990, %v1986
    %v3427 = vpack.c.b16 %v1995, %v1991
    %v3428 = vpack.c.b16 %v1996, %v1992
    %v3429 = vpack.c.b16 %v1997, %v1993
    %v3430 = vpack.c.b16 %v1998, %v1994
    %v3431 = vpack.c.b16 %v2003, %v1999
    %v3432 = vpack.c.b16 %v2004, %v2000
    %v3433 = vpack.c.b16 %v2005, %v2001
    %v3434 = vpack.c.b16 %v2006, %v2002
    %v3435 = vpack.c.b16 %v2011, %v2007
    %v3436 = vpack.c.b16 %v2012, %v2008
    %v3437 = vpack.c.b16 %v2013, %v2009
    %v3438 = vpack.c.b16 %v2014, %v2010
    %v3439 = vpack.c.b16 %v2019, %v2015
    %v3440 = vpack.c.b16 %v2020, %v2016
    %v3441 = vpack.c.b16 %v2021, %v2017
    %v3442 = vpack.c.b16 %v2022, %v2018
    %v3443 = vpack.c.b16 %v2027, %v2023
    %v3444 = vpack.c.b16 %v2028, %v2024
    %v3445 = vpack.c.b16 %v2029, %v2025
    %v3446 = vpack.c.b16 %v2030, %v2026
    %v3447 = vpack.c.b16 %v2035, %v2031
    %v3448 = vpack.c.b16 %v2036, %v2032
    %v3449 = vpack.c.b16 %v2037, %v2033
    %v3450 = vpack.c.b16 %v2038, %v2034
    %v3451 = vpack.c.b16 %v2043, %v2039
    %v3452 = vpack.c.b16 %v2044, %v2040
    %v3453 = vpack.c.b16 %v2045, %v2041
    %v3454 = vpack.c.b16 %v2046, %v2042
    %v3455 = vpack.c.b16 %v2051, %v2047
    %v3456 = vpack.c.b16 %v2052, %v2048
    %v3457 = vpack.c.b16 %v2053, %v2049
    %v3458 = vpack.c.b16 %v2054, %v2050
    %v3459 = vpack.c.b16 %v2059, %v2055
    %v3460 = vpack.c.b16 %v2060, %v2056
    %v3461 = vpack.c.b16 %v2061, %v2057
    %v3462 = vpack.c.b16 %v2062, %v2058
    %v3463 = vpack.c.b16 %v2067, %v2063
    %v3464 = vpack.c.b16 %v2068, %v2064
    %v3465 = vpack.c.b16 %v2069, %v2065
    %v3466 = vpack.c.b16 %v2070, %v2066
    %v3467 = vpack.c.b16 %v2075, %v2071
    %v3468 = vpack.c.b16 %v2076, %v2072
    %v3469 = vpack.c.b16 %v2077, %v2073
    %v3470 = vpack.c.b16 %v2078, %v2074
    %v3471 = vpack.c.b16 %v2083, %v2079
    %v3472 = vpack.c.b16 %v2084, %v2080
    %v3473 = vpack.c.b16 %v2085, %v2081
    %v3474 = vpack.c.b16 %v2086, %v2082
    %v3475 = vpack.c.b16 %v2091, %v2087
    %v3476 = vpack.c.b16 %v2092, %v2088
    %v3477 = vpack.c.b16 %v2093, %v2089
    %v3478 = vpack.c.b16 %v2094, %v2090
    %v3479 = vpack.c.b16 %v2099, %v2095
    %v3480 = vpack.c.b16 %v2100, %v2096
    %v3481 = vpack.c.b16 %v2101, %v2097
    %v3482 = vpack.c.b16 %v2102, %v2098
    %v3483 = vpack.c.b16 %v2107, %v2103
    %v3484 = vpack.c.b16 %v2108, %v2104
    %v3485 = vpack.c.b16 %v2109, %v2105
    %v3486 = vpack.c.b16 %v2110, %v2106
    %v3487 = vpack.c.b16 %v2115, %v2111
    %v3488 = vpack.c.b16 %v2116, %v2112
    %v3489 = vpack.c.b16 %v2117, %v2113
    %v3490 = vpack.c.b16 %v2118, %v2114
    %v3491 = vpack.c.b16 %v2123, %v2119
    %v3492 = vpack.c.b16 %v2124, %v2120
    %v3493 = vpack.c.b16 %v2125, %v2121
    %v3494 = vpack.c.b16 %v2126, %v2122
    %v3495 = vpack.c.b16 %v2131, %v2127
    %v3496 = vpack.c.b16 %v2132, %v2128
    %v3497 = vpack.c.b16 %v2133, %v2129
    %v3498 = vpack.c.b16 %v2134, %v2130
    %v3499 = vpack.c.b16 %v2139, %v2135
    %v3500 = vpack.c.b16 %v2140, %v2136
    %v3501 = vpack.c.b16 %v2141, %v2137
    %v3502 = vpack.c.b16 %v2142, %v2138
    %v3503 = vpack.c.b16 %v2147, %v2143
    %v3504 = vpack.c.b16 %v2148, %v2144
    %v3505 = vpack.c.b16 %v2149, %v2145
    %v3506 = vpack.c.b16 %v2150, %v2146
    %v3507 = vpack.c.b16 %v2155, %v2151
    %v3508 = vpack.c.b16 %v2156, %v2152
    %v3509 = vpack.c.b16 %v2157, %v2153
    %v3510 = vpack.c.b16 %v2158, %v2154
    %v3511 = vpack.c.b16 %v2163, %v2159
    %v3512 = vpack.c.b16 %v2164, %v2160
    %v3513 = vpack.c.b16 %v2165, %v2161
    %v3514 = vpack.c.b16 %v2166, %v2162
    %v3515 = vpack.c.b16 %v2171, %v2167
    %v3516 = vpack.c.b16 %v2172, %v2168
    %v3517 = vpack.c.b16 %v2173, %v2169
    %v3518 = vpack.c.b16 %v2174, %v2170
    %v3519 = vpack.c.b16 %v2179, %v2175
    %v3520 = vpack.c.b16 %v2180, %v2176
    %v3521 = vpack.c.b16 %v2181, %v2177
    %v3522 = vpack.c.b16 %v2182, %v2178
    %v3523 = vpack.c.b16 %v2187, %v2183
    %v3524 = vpack.c.b16 %v2188, %v2184
    %v3525 = vpack.c.b16 %v2189, %v2185
    %v3526 = vpack.c.b16 %v2190, %v2186
    %v3527 = vpack.c.b16 %v2195, %v2191
    %v3528 = vpack.c.b16 %v2196, %v2192
    %v3529 = vpack.c.b16 %v2197, %v2193
    %v3530 = vpack.c.b16 %v2198, %v2194
    %v3531 = vpack.c.b16 %v2203, %v2199
    %v3532 = vpack.c.b16 %v2204, %v2200
    %v3533 = vpack.c.b16 %v2205, %v2201
    %v3534 = vpack.c.b16 %v2206, %v2202
    %v3535 = vpack.c.b16 %v2211, %v2207
    %v3536 = vpack.c.b16 %v2212, %v2208
    %v3537 = vpack.c.b16 %v2213, %v2209
    %v3538 = vpack.c.b16 %v2214, %v2210
    %v3539 = vpack.c.b16 %v2219, %v2215
    %v3540 = vpack.c.b16 %v2220, %v2216
    %v3541 = vpack.c.b16 %v2221, %v2217
    %v3542 = vpack.c.b16 %v2222, %v2218
    %v3543 = vpack.c.b16 %v2227, %v2223
    %v3544 = vpack.c.b16 %v2228, %v2224
    %v3545 = vpack.c.b16 %v2229, %v2225
    %v3546 = vpack.c.b16 %v2230, %v2226
    %v3547 = vpack.c.b16 %v2235, %v2231
    %v3548 = vpack.c.b16 %v2236, %v2232
    %v3549 = vpack.c.b16 %v2237, %v2233
    %v3550 = vpack.c.b16 %v2238, %v2234
    %v3551 = vpack.c.b16 %v2243, %v2239
    %v3552 = vpack.c.b16 %v2244, %v2240
    %v3553 = vpack.c.b16 %v2245, %v2241
    %v3554 = vpack.c.b16 %v2246, %v2242
    %v3555 = vpack.c.b16 %v2251, %v2247
    %v3556 = vpack.c.b16 %v2252, %v2248
    %v3557 = vpack.c.b16 %v2253, %v2249
    %v3558 = vpack.c.b16 %v2254, %v2250
    %v3559 = vpack.c.b16 %v2259, %v2255
    %v3560 = vpack.c.b16 %v2260, %v2256
    %v3561 = vpack.c.b16 %v2261, %v2257
    %v3562 = vpack.c.b16 %v2262, %v2258
    %v3563 = vpack.c.b16 %v2267, %v2263
    %v3564 = vpack.c.b16 %v2268, %v2264
    %v3565 = vpack.c.b16 %v2269, %v2265
    %v3566 = vpack.c.b16 %v2270, %v2266
    %v3567 = vpack.c.b16 %v2275, %v2271
    %v3568 = vpack.c.b16 %v2276, %v2272
    %v3569 = vpack.c.b16 %v2277, %v2273
    %v3570 = vpack.c.b16 %v2278, %v2274
    %v3571 = vpack.c.b16 %v2283, %v2279
    %v3572 = vpack.c.b16 %v2284, %v2280
    %v3573 = vpack.c.b16 %v2285, %v2281
    %v3574 = vpack.c.b16 %v2286, %v2282
    %v3575 = vpack.c.b16 %v2291, %v2287
    %v3576 = vpack.c.b16 %v2292, %v2288
    %v3577 = vpack.c.b16 %v2293, %v2289
    %v3578 = vpack.c.b16 %v2294, %v2290
    %v3579 = vpack.c.b16 %v2299, %v2295
    %v3580 = vpack.c.b16 %v2300, %v2296
    %v3581 = vpack.c.b16 %v2301, %v2297
    %v3582 = vpack.c.b16 %v2302, %v2298
    %v3583 = vpack.c.b16 %v2307, %v2303
    %v3584 = vpack.c.b16 %v2308, %v2304
    %v3585 = vpack.c.b16 %v2309, %v2305
    %v3586 = vpack.c.b16 %v2310, %v2306
    %v3587 = vpack.c.b16 %v2315, %v2311
    %v3588 = vpack.c.b16 %v2316, %v2312
    %v3589 = vpack.c.b16 %v2317, %v2313
    %v3590 = vpack.c.b16 %v2318, %v2314
    %v3591 = vpack.c.b16 %v2323, %v2319
    %v3592 = vpack.c.b16 %v2324, %v2320
    %v3593 = vpack.c.b16 %v2325, %v2321
    %v3594 = vpack.c.b16 %v2326, %v2322
    %v3595 = vpack.c.b16 %v2331, %v2327
    %v3596 = vpack.c.b16 %v2332, %v2328
    %v3597 = vpack.c.b16 %v2333, %v2329
    %v3598 = vpack.c.b16 %v2334, %v2330
    %v3599 = vpack.c.b16 %v2339, %v2335
    %v3600 = vpack.c.b16 %v2340, %v2336
    %v3601 = vpack.c.b16 %v2341, %v2337
    %v3602 = vpack.c.b16 %v2342, %v2338
    %v3603 = vpack.c.b16 %v2347, %v2343
    %v3604 = vpack.c.b16 %v2348, %v2344
    %v3605 = vpack.c.b16 %v2349, %v2345
    %v3606 = vpack.c.b16 %v2350, %v2346
    %v3607 = vpack.c.b16 %v2355, %v2351
    %v3608 = vpack.c.b16 %v2356, %v2352
    %v3609 = vpack.c.b16 %v2357, %v2353
    %v3610 = vpack.c.b16 %v2358, %v2354
    %v3611 = vpack.c.b16 %v2363, %v2359
    %v3612 = vpack.c.b16 %v2364, %v2360
    %v3613 = vpack.c.b16 %v2365, %v2361
    %v3614 = vpack.c.b16 %v2366, %v2362
    %v3615 = vpack.c.b16 %v2371, %v2367
    %v3616 = vpack.c.b16 %v2372, %v2368
    %v3617 = vpack.c.b16 %v2373, %v2369
    %v3618 = vpack.c.b16 %v2374, %v2370
    %v3619 = vpack.c.b16 %v2379, %v2375
    %v3620 = vpack.c.b16 %v2380, %v2376
    %v3621 = vpack.c.b16 %v2381, %v2377
    %v3622 = vpack.c.b16 %v2382, %v2378
    %v3623 = vpack.c.b16 %v2387, %v2383
    %v3624 = vpack.c.b16 %v2388, %v2384
    %v3625 = vpack.c.b16 %v2389, %v2385
    %v3626 = vpack.c.b16 %v2390, %v2386
    %v3627 = vpack.c.b16 %v2395, %v2391
    %v3628 = vpack.c.b16 %v2396, %v2392
    %v3629 = vpack.c.b16 %v2397, %v2393
    %v3630 = vpack.c.b16 %v2398, %v2394
    %v3631 = vpack.c.b16 %v2403, %v2399
    %v3632 = vpack.c.b16 %v2404, %v2400
    %v3633 = vpack.c.b16 %v2405, %v2401
    %v3634 = vpack.c.b16 %v2406, %v2402
    %v3635 = vpack.c.b16 %v2411, %v2407
    %v3636 = vpack.c.b16 %v2412, %v2408
    %v3637 = vpack.c.b16 %v2413, %v2409
    %v3638 = vpack.c.b16 %v2414, %v2410
    %v3639 = vpack.c.b16 %v2419, %v2415
    %v3640 = vpack.c.b16 %v2420, %v2416
    %v3641 = vpack.c.b16 %v2421, %v2417
    %v3642 = vpack.c.b16 %v2422, %v2418
    %v3643 = vpack.c.b16 %v2427, %v2423
    %v3644 = vpack.c.b16 %v2428, %v2424
    %v3645 = vpack.c.b16 %v2429, %v2425
    %v3646 = vpack.c.b16 %v2430, %v2426
    %v3647 = vpack.c.b16 %v2435, %v2431
    %v3648 = vpack.c.b16 %v2436, %v2432
    %v3649 = vpack.c.b16 %v2437, %v2433
    %v3650 = vpack.c.b16 %v2438, %v2434
    %v3651 = vpack.c.b16 %v2443, %v2439
    %v3652 = vpack.c.b16 %v2444, %v2440
    %v3653 = vpack.c.b16 %v2445, %v2441
    %v3654 = vpack.c.b16 %v2446, %v2442
    %v3655 = vpack.c.b16 %v2451, %v2447
    %v3656 = vpack.c.b16 %v2452, %v2448
    %v3657 = vpack.c.b16 %v2453, %v2449
    %v3658 = vpack.c.b16 %v2454, %v2450
    %v3659 = vpack.c.b16 %v2459, %v2455
    %v3660 = vpack.c.b16 %v2460, %v2456
    %v3661 = vpack.c.b16 %v2461, %v2457
    %v3662 = vpack.c.b16 %v2462, %v2458
    %v3663 = vpack.c.b16 %v2467, %v2463
    %v3664 = vpack.c.b16 %v2468, %v2464
    %v3665 = vpack.c.b16 %v2469, %v2465
    %v3666 = vpack.c.b16 %v2470, %v2466
    %v3667 = vpack.c.b16 %v2475, %v2471
    %v3668 = vpack.c.b16 %v2476, %v2472
    %v3669 = vpack.c.b16 %v2477, %v2473
    %v3670 = vpack.c.b16 %v2478, %v2474
    %v3671 = vpack.c.b16 %v2483, %v2479
    %v3672 = vpack.c.b16 %v2484, %v2480
    %v3673 = vpack.c.b16 %v2485, %v2481
    %v3674 = vpack.c.b16 %v2486, %v2482
    %v3675 = vpack.c.b16 %v2491, %v2487
    %v3676 = vpack.c.b16 %v2492, %v2488
    %v3677 = vpack.c.b16 %v2493, %v2489
    %v3678 = vpack.c.b16 %v2494, %v2490
    %v3679 = vpack.c.b16 %v2499, %v2495
    %v3680 = vpack.c.b16 %v2500, %v2496
    %v3681 = vpack.c.b16 %v2501, %v2497
    %v3682 = vpack.c.b16 %v2502, %v2498
    %v3683 = vpack.c.b16 %v2507, %v2503
    %v3684 = vpack.c.b16 %v2508, %v2504
    %v3685 = vpack.c.b16 %v2509, %v2505
    %v3686 = vpack.c.b16 %v2510, %v2506
    %v3687 = vpack.c.b16 %v2515, %v2511
    %v3688 = vpack.c.b16 %v2516, %v2512
    %v3689 = vpack.c.b16 %v2517, %v2513
    %v3690 = vpack.c.b16 %v2518, %v2514
    %v3691 = vpack.c.b16 %v2523, %v2519
    %v3692 = vpack.c.b16 %v2524, %v2520
    %v3693 = vpack.c.b16 %v2525, %v2521
    %v3694 = vpack.c.b16 %v2526, %v2522
    %v3695 = vpack.c.b16 %v2531, %v2527
    %v3696 = vpack.c.b16 %v2532, %v2528
    %v3697 = vpack.c.b16 %v2533, %v2529
    %v3698 = vpack.c.b16 %v2534, %v2530
    %v3699 = vpack.c.b16 %v2539, %v2535
    %v3700 = vpack.c.b16 %v2540, %v2536
    %v3701 = vpack.c.b16 %v2541, %v2537
    %v3702 = vpack.c.b16 %v2542, %v2538
    %v3703 = vpack.c.b16 %v2547, %v2543
    %v3704 = vpack.c.b16 %v2548, %v2544
    %v3705 = vpack.c.b16 %v2549, %v2545
    %v3706 = vpack.c.b16 %v2550, %v2546
    %v3707 = vpack.c.b16 %v2555, %v2551
    %v3708 = vpack.c.b16 %v2556, %v2552
    %v3709 = vpack.c.b16 %v2557, %v2553
    %v3710 = vpack.c.b16 %v2558, %v2554
    %v3711 = vpack.c.b16 %v2563, %v2559
    %v3712 = vpack.c.b16 %v2564, %v2560
    %v3713 = vpack.c.b16 %v2565, %v2561
    %v3714 = vpack.c.b16 %v2566, %v2562
    %v3715 = vpack.c.b16 %v2571, %v2567
    %v3716 = vpack.c.b16 %v2572, %v2568
    %v3717 = vpack.c.b16 %v2573, %v2569
    %v3718 = vpack.c.b16 %v2574, %v2570
    %v3719 = vpack.c.b16 %v2579, %v2575
    %v3720 = vpack.c.b16 %v2580, %v2576
    %v3721 = vpack.c.b16 %v2581, %v2577
    %v3722 = vpack.c.b16 %v2582, %v2578
    %v3723 = vpack.c.b16 %v2587, %v2583
    %v3724 = vpack.c.b16 %v2588, %v2584
    %v3725 = vpack.c.b16 %v2589, %v2585
    %v3726 = vpack.c.b16 %v2590, %v2586
    %v3727 = vpack.c.b16 %v2595, %v2591
    %v3728 = vpack.c.b16 %v2596, %v2592
    %v3729 = vpack.c.b16 %v2597, %v2593
    %v3730 = vpack.c.b16 %v2598, %v2594
    %v3731 = vpack.c.b16 %v2603, %v2599
    %v3732 = vpack.c.b16 %v2604, %v2600
    %v3733 = vpack.c.b16 %v2605, %v2601
    %v3734 = vpack.c.b16 %v2606, %v2602
    %v3735 = vpack.c.b16 %v2611, %v2607
    %v3736 = vpack.c.b16 %v2612, %v2608
    %v3737 = vpack.c.b16 %v2613, %v2609
    %v3738 = vpack.c.b16 %v2614, %v2610
    %v3739 = vpack.c.b16 %v2619, %v2615
    %v3740 = vpack.c.b16 %v2620, %v2616
    %v3741 = vpack.c.b16 %v2621, %v2617
    %v3742 = vpack.c.b16 %v2622, %v2618
    %v3743 = vpack.c.b16 %v2627, %v2623
    %v3744 = vpack.c.b16 %v2628, %v2624
    %v3745 = vpack.c.b16 %v2629, %v2625
    %v3746 = vpack.c.b16 %v2630, %v2626
    %v3747 = vpack.c.b16 %v2635, %v2631
    %v3748 = vpack.c.b16 %v2636, %v2632
    %v3749 = vpack.c.b16 %v2637, %v2633
    %v3750 = vpack.c.b16 %v2638, %v2634
    %v3751 = vpack.c.b16 %v2643, %v2639
    %v3752 = vpack.c.b16 %v2644, %v2640
    %v3753 = vpack.c.b16 %v2645, %v2641
    %v3754 = vpack.c.b16 %v2646, %v2642
    %v3755 = vpack.c.b16 %v2651, %v2647
    %v3756 = vpack.c.b16 %v2652, %v2648
    %v3757 = vpack.c.b16 %v2653, %v2649
    %v3758 = vpack.c.b16 %v2654, %v2650
    %v3759 = vpack.c.b16 %v2659, %v2655
    %v3760 = vpack.c.b16 %v2660, %v2656
    %v3761 = vpack.c.b16 %v2661, %v2657
    %v3762 = vpack.c.b16 %v2662, %v2658
    %v3763 = vpack.c.b16 %v2667, %v2663
    %v3764 = vpack.c.b16 %v2668, %v2664
    %v3765 = vpack.c.b16 %v2669, %v2665
    %v3766 = vpack.c.b16 %v2670, %v2666
    %v3767 = vpack.c.b16 %v2675, %v2671
    %v3768 = vpack.c.b16 %v2676, %v2672
    %v3769 = vpack.c.b16 %v2677, %v2673
    %v3770 = vpack.c.b16 %v2678, %v2674
    %v3771 = vpack.c.b16 %v2683, %v2679
    %v3772 = vpack.c.b16 %v2684, %v2680
    %v3773 = vpack.c.b16 %v2685, %v2681
    %v3774 = vpack.c.b16 %v2686, %v2682
    %v3775 = vpack.c.b16 %v2691, %v2687
    %v3776 = vpack.c.b16 %v2692, %v2688
    %v3777 = vpack.c.b16 %v2693, %v2689
    %v3778 = vpack.c.b16 %v2694, %v2690
    %v3779 = vpack.c.b16 %v2699, %v2695
    %v3780 = vpack.c.b16 %v2700, %v2696
    %v3781 = vpack.c.b16 %v2701, %v2697
    %v3782 = vpack.c.b16 %v2702, %v2698
    %v3783 = vpack.c.b16 %v2707, %v2703
    %v3784 = vpack.c.b16 %v2708, %v2704
    %v3785 = vpack.c.b16 %v2709, %v2705
    %v3786 = vpack.c.b16 %v2710, %v2706
    %v3787 = vpack.c.b16 %v2715, %v2711
    %v3788 = vpack.c.b16 %v2716, %v2712
    %v3789 = vpack.c.b16 %v2717, %v2713
    %v3790 = vpack.c.b16 %v2718, %v2714
    %v3791 = vpack.c.b16 %v2723, %v2719
    %v3792 = vpack.c.b16 %v2724, %v2720
    %v3793 = vpack.c.b16 %v2725, %v2721
    %v3794 = vpack.c.b16 %v2726, %v2722
    %v3795 = vpack.c.b16 %v2731, %v2727
    %v3796 = vpack.c.b16 %v2732, %v2728
    %v3797 = vpack.c.b16 %v2733, %v2729
    %v3798 = vpack.c.b16 %v2734, %v2730
    %v3799 = vpack.c.b16 %v2739, %v2735
    %v3800 = vpack.c.b16 %v2740, %v2736
    %v3801 = vpack.c.b16 %v2741, %v2737
    %v3802 = vpack.c.b16 %v2742, %v2738
    %v3803 = vpack.c.b16 %v2747, %v2743
    %v3804 = vpack.c.b16 %v2748, %v2744
    %v3805 = vpack.c.b16 %v2749, %v2745
    %v3806 = vpack.c.b16 %v2750, %v2746
    %v3807 = vpack.c.b16 %v2755, %v2751
    %v3808 = vpack.c.b16 %v2756, %v2752
    %v3809 = vpack.c.b16 %v2757, %v2753
    %v3810 = vpack.c.b16 %v2758, %v2754
    %v3811 = vpack.c.b16 %v2763, %v2759
    %v3812 = vpack.c.b16 %v2764, %v2760
    %v3813 = vpack.c.b16 %v2765, %v2761
    %v3814 = vpack.c.b16 %v2766, %v2762
    %v3815 = vpack.c.b16 %v2771, %v2767
    %v3816 = vpack.c.b16 %v2772, %v2768
    %v3817 = vpack.c.b16 %v2773, %v2769
    %v3818 = vpack.c.b16 %v2774, %v2770
    %v3819 = vpack.c.b16 %v2779, %v2775
    %v3820 = vpack.c.b16 %v2780, %v2776
    %v3821 = vpack.c.b16 %v2781, %v2777
    %v3822 = vpack.c.b16 %v2782, %v2778
    %v3823 = vpack.c.b16 %v2787, %v2783
    %v3824 = vpack.c.b16 %v2788, %v2784
    %v3825 = vpack.c.b16 %v2789, %v2785
    %v3826 = vpack.c.b16 %v2790, %v2786
    %v3827 = vpack.c.b16 %v2795, %v2791
    %v3828 = vpack.c.b16 %v2796, %v2792
    %v3829 = vpack.c.b16 %v2797, %v2793
    %v3830 = vpack.c.b16 %v2798, %v2794
    %v3831 = vpack.c.b16 %v2803, %v2799
    %v3832 = vpack.c.b16 %v2804, %v2800
    %v3833 = vpack.c.b16 %v2805, %v2801
    %v3834 = vpack.c.b16 %v2806, %v2802
    %v3835 = vpack.c.b16 %v2811, %v2807
    %v3836 = vpack.c.b16 %v2812, %v2808
    %v3837 = vpack.c.b16 %v2813, %v2809
    %v3838 = vpack.c.b16 %v2814, %v2810
    %v3839 = vpack.c.b16 %v2819, %v2815
    %v3840 = vpack.c.b16 %v2820, %v2816
    %v3841 = vpack.c.b16 %v2821, %v2817
    %v3842 = vpack.c.b16 %v2822, %v2818
    %v3843 = vpack.c.b16 %v2827, %v2823
    %v3844 = vpack.c.b16 %v2828, %v2824
    %v3845 = vpack.c.b16 %v2829, %v2825
    %v3846 = vpack.c.b16 %v2830, %v2826
    %v3847 = vpack.c.b16 %v2835, %v2831
    %v3848 = vpack.c.b16 %v2836, %v2832
    %v3849 = vpack.c.b16 %v2837, %v2833
    %v3850 = vpack.c.b16 %v2838, %v2834
    %v3851 = vpack.c.b16 %v2843, %v2839
    %v3852 = vpack.c.b16 %v2844, %v2840
    %v3853 = vpack.c.b16 %v2845, %v2841
    %v3854 = vpack.c.b16 %v2846, %v2842
    %v3855 = vpack.c.b16 %v2851, %v2847
    %v3856 = vpack.c.b16 %v2852, %v2848
    %v3857 = vpack.c.b16 %v2853, %v2849
    %v3858 = vpack.c.b16 %v2854, %v2850
    %v3859 = vpack.c.b16 %v2859, %v2855
    %v3860 = vpack.c.b16 %v2860, %v2856
    %v3861 = vpack.c.b16 %v2861, %v2857
    %v3862 = vpack.c.b16 %v2862, %v2858
    %v3863 = vpack.c.b16 %v2867, %v2863
    %v3864 = vpack.c.b16 %v2868, %v2864
    %v3865 = vpack.c.b16 %v2869, %v2865
    %v3866 = vpack.c.b16 %v2870, %v2866
    %v3867 = vpack.c.b16 %v2875, %v2871
    %v3868 = vpack.c.b16 %v2876, %v2872
    %v3869 = vpack.c.b16 %v2877, %v2873
    %v3870 = vpack.c.b16 %v2878, %v2874
    %v3871 = vpack.c.b16 %v2883, %v2879
    %v3872 = vpack.c.b16 %v2884, %v2880
    %v3873 = vpack.c.b16 %v2885, %v2881
    %v3874 = vpack.c.b16 %v2886, %v2882
    %v3875 = vpack.c.b16 %v2891, %v2887
    %v3876 = vpack.c.b16 %v2892, %v2888
    %v3877 = vpack.c.b16 %v2893, %v2889
    %v3878 = vpack.c.b16 %v2894, %v2890
    %v3879 = vpack.c.b16 %v2899, %v2895
    %v3880 = vpack.c.b16 %v2900, %v2896
    %v3881 = vpack.c.b16 %v2901, %v2897
    %v3882 = vpack.c.b16 %v2902, %v2898
    %v3883 = vpack.c.b16 %v2907, %v2903
    %v3884 = vpack.c.b16 %v2908, %v2904
    %v3885 = vpack.c.b16 %v2909, %v2905
    %v3886 = vpack.c.b16 %v2910, %v2906
    %v3887 = vpack.c.b16 %v2915, %v2911
    %v3888 = vpack.c.b16 %v2916, %v2912
    %v3889 = vpack.c.b16 %v2917, %v2913
    %v3890 = vpack.c.b16 %v2918, %v2914
    %v3891 = vpack.c.b16 %v2923, %v2919
    %v3892 = vpack.c.b16 %v2924, %v2920
    %v3893 = vpack.c.b16 %v2925, %v2921
    %v3894 = vpack.c.b16 %v2926, %v2922
    %v3895 = vpack.c.b16 %v2931, %v2927
    %v3896 = vpack.c.b16 %v2932, %v2928
    %v3897 = vpack.c.b16 %v2933, %v2929
    %v3898 = vpack.c.b16 %v2934, %v2930
    %v3899 = vpack.c.b16 %v2939, %v2935
    %v3900 = vpack.c.b16 %v2940, %v2936
    %v3901 = vpack.c.b16 %v2941, %v2937
    %v3902 = vpack.c.b16 %v2942, %v2938
    %v3903 = vpack.c.b16 %v2947, %v2943
    %v3904 = vpack.c.b16 %v2948, %v2944
    %v3905 = vpack.c.b16 %v2949, %v2945
    %v3906 = vpack.c.b16 %v2950, %v2946
    %v3907 = vpack.c.b16 %v2955, %v2951
    %v3908 = vpack.c.b16 %v2956, %v2952
    %v3909 = vpack.c.b16 %v2957, %v2953
    %v3910 = vpack.c.b16 %v2958, %v2954
    %v3911 = vpack.c.b16 %v2963, %v2959
    %v3912 = vpack.c.b16 %v2964, %v2960
    %v3913 = vpack.c.b16 %v2965, %v2961
    %v3914 = vpack.c.b16 %v2966, %v2962
    %v3915 = vpack.c.b16 %v2971, %v2967
    %v3916 = vpack.c.b16 %v2972, %v2968
    %v3917 = vpack.c.b16 %v2973, %v2969
    %v3918 = vpack.c.b16 %v2974, %v2970
    %v3919 = vpack.c.b16 %v2979, %v2975
    %v3920 = vpack.c.b16 %v2980, %v2976
    %v3921 = vpack.c.b16 %v2981, %v2977
    %v3922 = vpack.c.b16 %v2982, %v2978
    %v3923 = vpack.c.b16 %v2987, %v2983
    %v3924 = vpack.c.b16 %v2988, %v2984
    %v3925 = vpack.c.b16 %v2989, %v2985
    %v3926 = vpack.c.b16 %v2990, %v2986
    %v3927 = vpack.c.b16 %v2995, %v2991
    %v3928 = vpack.c.b16 %v2996, %v2992
    %v3929 = vpack.c.b16 %v2997, %v2993
    %v3930 = vpack.c.b16 %v2998, %v2994
    %v3931 = vpack.c.b16 %v3003, %v2999
    %v3932 = vpack.c.b16 %v3004, %v3000
    %v3933 = vpack.c.b16 %v3005, %v3001
    %v3934 = vpack.c.b16 %v3006, %v3002
    %v3935 = vpack.c.b16 %v3011, %v3007
    %v3936 = vpack.c.b16 %v3012, %v3008
    %v3937 = vpack.c.b16 %v3013, %v3009
    %v3938 = vpack.c.b16 %v3014, %v3010
    %v3939 = vpack.c.b16 %v3019, %v3015
    %v3940 = vpack.c.b16 %v3020, %v3016
    %v3941 = vpack.c.b16 %v3021, %v3017
    %v3942 = vpack.c.b16 %v3022, %v3018
    %v3943 = vpack.c.b16 %v3027, %v3023
    %v3944 = vpack.c.b16 %v3028, %v3024
    %v3945 = vpack.c.b16 %v3029, %v3025
    %v3946 = vpack.c.b16 %v3030, %v3026
    %v3947 = vpack.c.b16 %v3035, %v3031
    %v3948 = vpack.c.b16 %v3036, %v3032
    %v3949 = vpack.c.b16 %v3037, %v3033
    %v3950 = vpack.c.b16 %v3038, %v3034
    %v3951 = vpack.c.b16 %v3043, %v3039
    %v3952 = vpack.c.b16 %v3044, %v3040
    %v3953 = vpack.c.b16 %v3045, %v3041
    %v3954 = vpack.c.b16 %v3046, %v3042
    %v3955 = vpack.c.b16 %v3051, %v3047
    %v3956 = vpack.c.b16 %v3052, %v3048
    %v3957 = vpack.c.b16 %v3053, %v3049
    %v3958 = vpack.c.b16 %v3054, %v3050
    %v3959 = vpack.c.b16 %v3059, %v3055
    %v3960 = vpack.c.b16 %v3060, %v3056
    %v3961 = vpack.c.b16 %v3061, %v3057
    %v3962 = vpack.c.b16 %v3062, %v3058
    %v3963 = vpack.c.b16 %v3067, %v3063
    %v3964 = vpack.c.b16 %v3068, %v3064
    %v3965 = vpack.c.b16 %v3069, %v3065
    %v3966 = vpack.c.b16 %v3070, %v3066
    %v3967 = vpack.c.b16 %v3075, %v3071
    %v3968 = vpack.c.b16 %v3076, %v3072
    %v3969 = vpack.c.b16 %v3077, %v3073
    %v3970 = vpack.c.b16 %v3078, %v3074
    %v3971 = vpack.c.b16 %v3083, %v3079
    %v3972 = vpack.c.b16 %v3084, %v3080
    %v3973 = vpack.c.b16 %v3085, %v3081
    %v3974 = vpack.c.b16 %v3086, %v3082
    %v3975 = vpack.c.b16 %v3091, %v3087
    %v3976 = vpack.c.b16 %v3092, %v3088
    %v3977 = vpack.c.b16 %v3093, %v3089
    %v3978 = vpack.c.b16 %v3094, %v3090
    %v3979 = vpack.c.b16 %v3099, %v3095
    %v3980 = vpack.c.b16 %v3100, %v3096
    %v3981 = vpack.c.b16 %v3101, %v3097
    %v3982 = vpack.c.b16 %v3102, %v3098
    %v3983 = vpack.c.b16 %v3107, %v3103
    %v3984 = vpack.c.b16 %v3108, %v3104
    %v3985 = vpack.c.b16 %v3109, %v3105
    %v3986 = vpack.c.b16 %v3110, %v3106
    %v3987 = vpack.c.b16 %v3115, %v3111
    %v3988 = vpack.c.b16 %v3116, %v3112
    %v3989 = vpack.c.b16 %v3117, %v3113
    %v3990 = vpack.c.b16 %v3118, %v3114
    %v3991 = vpack.c.b16 %v3123, %v3119
    %v3992 = vpack.c.b16 %v3124, %v3120
    %v3993 = vpack.c.b16 %v3125, %v3121
    %v3994 = vpack.c.b16 %v3126, %v3122
    %v3995 = vpack.c.b16 %v3131, %v3127
    %v3996 = vpack.c.b16 %v3132, %v3128
    %v3997 = vpack.c.b16 %v3133, %v3129
    %v3998 = vpack.c.b16 %v3134, %v3130
    %v3999 = vpack.c.b16 %v3139, %v3135
    %v4000 = vpack.c.b16 %v3140, %v3136
    %v4001 = vpack.c.b16 %v3141, %v3137
    %v4002 = vpack.c.b16 %v3142, %v3138
    %v4003 = vpack.c.b16 %v3147, %v3143
    %v4004 = vpack.c.b16 %v3148, %v3144
    %v4005 = vpack.c.b16 %v3149, %v3145
    %v4006 = vpack.c.b16 %v3150, %v3146
    %v4007 = vpack.c.b16 %v3155, %v3151
    %v4008 = vpack.c.b16 %v3156, %v3152
    %v4009 = vpack.c.b16 %v3157, %v3153
    %v4010 = vpack.c.b16 %v3158, %v3154
    %v4011 = vpack.c.b16 %v3163, %v3159
    %v4012 = vpack.c.b16 %v3164, %v3160
    %v4013 = vpack.c.b16 %v3165, %v3161
    %v4014 = vpack.c.b16 %v3166, %v3162
    %v4015 = vpack.c.b16 %v3171, %v3167
    %v4016 = vpack.c.b16 %v3172, %v3168
    %v4017 = vpack.c.b16 %v3173, %v3169
    %v4018 = vpack.c.b16 %v3174, %v3170
    %v4019 = vpack.c.b16 %v3179, %v3175
    %v4020 = vpack.c.b16 %v3180, %v3176
    %v4021 = vpack.c.b16 %v3181, %v3177
    %v4022 = vpack.c.b16 %v3182, %v3178
    %v4023 = vpack.c.b16 %v3187, %v3183
    %v4024 = vpack.c.b16 %v3188, %v3184
    %v4025 = vpack.c.b16 %v3189, %v3185
    %v4026 = vpack.c.b16 %v3190, %v3186
    %v4027 = vpack.c.b16 %v3195, %v3191
    %v4028 = vpack.c.b16 %v3196, %v3192
    %v4029 = vpack.c.b16 %v3197, %v3193
    %v4030 = vpack.c.b16 %v3198, %v3194
    %v4031 = vpack.c.b16 %v3203, %v3199
    %v4032 = vpack.c.b16 %v3204, %v3200
    %v4033 = vpack.c.b16 %v3205, %v3201
    %v4034 = vpack.c.b16 %v3206, %v3202
    %v4035 = vpack.c.b16 %v3211, %v3207
    %v4036 = vpack.c.b16 %v3212, %v3208
    %v4037 = vpack.c.b16 %v3213, %v3209
    %v4038 = vpack.c.b16 %v3214, %v3210
    %v4039 = vpack.c.b16 %v3219, %v3215
    %v4040 = vpack.c.b16 %v3220, %v3216
    %v4041 = vpack.c.b16 %v3221, %v3217
    %v4042 = vpack.c.b16 %v3222, %v3218
    %v4043 = vpack.c.b16 %v3227, %v3223
    %v4044 = vpack.c.b16 %v3228, %v3224
    %v4045 = vpack.c.b16 %v3229, %v3225
    %v4046 = vpack.c.b16 %v3230, %v3226
    %v4047 = vpack.c.b16 %v3235, %v3231
    %v4048 = vpack.c.b16 %v3236, %v3232
    %v4049 = vpack.c.b16 %v3237, %v3233
    %v4050 = vpack.c.b16 %v3238, %v3234
    %v4051 = vpack.c.b16 %v3243, %v3239
    %v4052 = vpack.c.b16 %v3244, %v3240
    %v4053 = vpack.c.b16 %v3245, %v3241
    %v4054 = vpack.c.b16 %v3246, %v3242
    %v4055 = vpack.c.b16 %v3251, %v3247
    %v4056 = vpack.c.b16 %v3252, %v3248
    %v4057 = vpack.c.b16 %v3253, %v3249
    %v4058 = vpack.c.b16 %v3254, %v3250
    %v4059 = vpack.c.b16 %v3259, %v3255
    %v4060 = vpack.c.b16 %v3260, %v3256
    %v4061 = vpack.c.b16 %v3261, %v3257
    %v4062 = vpack.c.b16 %v3262, %v3258
    %v4063 = vpack.c.b16 %v3267, %v3263
    %v4064 = vpack.c.b16 %v3268, %v3264
    %v4065 = vpack.c.b16 %v3269, %v3265
    %v4066 = vpack.c.b16 %v3270, %v3266
    %v4067 = vpack.c.b16 %v3275, %v3271
    %v4068 = vpack.c.b16 %v3276, %v3272
    %v4069 = vpack.c.b16 %v3277, %v3273
    %v4070 = vpack.c.b16 %v3278, %v3274
    %v4071 = vpack.c.b16 %v3283, %v3279
    %v4072 = vpack.c.b16 %v3284, %v3280
    %v4073 = vpack.c.b16 %v3285, %v3281
    %v4074 = vpack.c.b16 %v3286, %v3282
    %v4075 = vpack.c.b16 %v3291, %v3287
    %v4076 = vpack.c.b16 %v3292, %v3288
    %v4077 = vpack.c.b16 %v3293, %v3289
    %v4078 = vpack.c.b16 %v3294, %v3290
    %v4079 = vpack.c.b16 %v3299, %v3295
    %v4080 = vpack.c.b16 %v3300, %v3296
    %v4081 = vpack.c.b16 %v3301, %v3297
    %v4082 = vpack.c.b16 %v3302, %v3298
    %v4083 = vpack.c.b16 %v3307, %v3303
    %v4084 = vpack.c.b16 %v3308, %v3304
    %v4085 = vpack.c.b16 %v3309, %v3305
    %v4086 = vpack.c.b16 %v3310, %v3306
    %v4087 = vpack.c.b16 %v3315, %v3311
    %v4088 = vpack.c.b16 %v3316, %v3312
    %v4089 = vpack.c.b16 %v3317, %v3313
    %v4090 = vpack.c.b16 %v3318, %v3314
    %v4091 = vpack.c.b16 %v3323, %v3319
    %v4092 = vpack.c.b16 %v3324, %v3320
    %v4093 = vpack.c.b16 %v3325, %v3321
    %v4094 = vpack.c.b16 %v3326, %v3322
    %4863 = vmatpush.bf16.msra.mxu0 %v3355
    %4864 = vmatpush.bf16.msra.mxu0 %v3351
    %4865 = vmatpush.bf16.msra.mxu0 %v3347
    %4866 = vmatpush.bf16.msra.mxu0 %v3343
    %4867 = vmatpush.bf16.msra.mxu0 %v3339
    %4868 = vmatpush.bf16.msra.mxu0 %v3335
    %4869 = vmatpush.bf16.msra.mxu0 %v3331
    %4870 = vmatpush.bf16.msra.mxu0 %v3327
    %4871 = vmatmul.bf16.gmra.mxu0 %v975
    %v4872 = vpop.f32.mrf.mxu0
    %v4873 = vadd.f32 %v931, %v4872
    %v4874 = vpop.f32.mrf.mxu0
    %4875 = vdwg.mxu0
    %4876 = vmatpush.bf16.msra.mxu0 %v3387
    %4877 = vmatpush.bf16.msra.mxu0 %v3383
    %4878 = vmatpush.bf16.msra.mxu0 %v3379
    %4879 = vmatpush.bf16.msra.mxu0 %v3375
    %4880 = vmatpush.bf16.msra.mxu0 %v3371
    %4881 = vmatpush.bf16.msra.mxu0 %v3367
    %4882 = vmatpush.bf16.msra.mxu0 %v3363
    %4883 = vmatpush.bf16.msra.mxu0 %v3359
    %4884 = vmatmul.bf16.gmra.mxu0 %v976
    %v4885 = vpop.f32.mrf.mxu0
    %v4886 = vadd.f32 %v4873, %v4885
    %v4887 = vpop.f32.mrf.mxu0
    %4888 = vdwg.mxu0
    %4889 = vmatpush.bf16.msra.mxu0 %v3419
    %4890 = vmatpush.bf16.msra.mxu0 %v3415
    %4891 = vmatpush.bf16.msra.mxu0 %v3411
    %4892 = vmatpush.bf16.msra.mxu0 %v3407
    %4893 = vmatpush.bf16.msra.mxu0 %v3403
    %4894 = vmatpush.bf16.msra.mxu0 %v3399
    %4895 = vmatpush.bf16.msra.mxu0 %v3395
    %4896 = vmatpush.bf16.msra.mxu0 %v3391
    %4897 = vmatmul.bf16.gmra.mxu0 %v977
    %v4898 = vpop.f32.mrf.mxu0
    %v4899 = vadd.f32 %v4886, %v4898
    %v4900 = vpop.f32.mrf.mxu0
    %4901 = vdwg.mxu0
    %4902 = vmatpush.bf16.msra.mxu0 %v3451
    %4903 = vmatpush.bf16.msra.mxu0 %v3447
    %4904 = vmatpush.bf16.msra.mxu0 %v3443
    %4905 = vmatpush.bf16.msra.mxu0 %v3439
    %4906 = vmatpush.bf16.msra.mxu0 %v3435
    %4907 = vmatpush.bf16.msra.mxu0 %v3431
    %4908 = vmatpush.bf16.msra.mxu0 %v3427
    %4909 = vmatpush.bf16.msra.mxu0 %v3423
    %4910 = vmatmul.bf16.gmra.mxu0 %v978
    %v4911 = vpop.f32.mrf.mxu0
    %v4912 = vadd.f32 %v4899, %v4911
    %v4913 = vpop.f32.mrf.mxu0
    %4914 = vdwg.mxu0
    %4915 = vmatpush.bf16.msra.mxu0 %v3483
    %4916 = vmatpush.bf16.msra.mxu0 %v3479
    %4917 = vmatpush.bf16.msra.mxu0 %v3475
    %4918 = vmatpush.bf16.msra.mxu0 %v3471
    %4919 = vmatpush.bf16.msra.mxu0 %v3467
    %4920 = vmatpush.bf16.msra.mxu0 %v3463
    %4921 = vmatpush.bf16.msra.mxu0 %v3459
    %4922 = vmatpush.bf16.msra.mxu0 %v3455
    %4923 = vmatmul.bf16.gmra.mxu0 %v979
    %v4924 = vpop.f32.mrf.mxu0
    %v4925 = vadd.f32 %v4912, %v4924
    %v4926 = vpop.f32.mrf.mxu0
    %4927 = vdwg.mxu0
    %4928 = vmatpush.bf16.msra.mxu0 %v3515
    %4929 = vmatpush.bf16.msra.mxu0 %v3511
    %4930 = vmatpush.bf16.msra.mxu0 %v3507
    %4931 = vmatpush.bf16.msra.mxu0 %v3503
    %4932 = vmatpush.bf16.msra.mxu0 %v3499
    %4933 = vmatpush.bf16.msra.mxu0 %v3495
    %4934 = vmatpush.bf16.msra.mxu0 %v3491
    %4935 = vmatpush.bf16.msra.mxu0 %v3487
    %4936 = vmatmul.bf16.gmra.mxu0 %v980
    %v4937 = vpop.f32.mrf.mxu0
    %v4938 = vadd.f32 %v4925, %v4937
    %v4939 = vpop.f32.mrf.mxu0
    %4940 = vdwg.mxu0
    %4941 = vmatpush.bf16.msra.mxu0 %v3547
    %4942 = vmatpush.bf16.msra.mxu0 %v3543
    %4943 = vmatpush.bf16.msra.mxu0 %v3539
    %4944 = vmatpush.bf16.msra.mxu0 %v3535
    %4945 = vmatpush.bf16.msra.mxu0 %v3531
    %4946 = vmatpush.bf16.msra.mxu0 %v3527
    %4947 = vmatpush.bf16.msra.mxu0 %v3523
    %4948 = vmatpush.bf16.msra.mxu0 %v3519
    %4949 = vmatmul.bf16.gmra.mxu0 %v981
    %v4950 = vpop.f32.mrf.mxu0
    %v4951 = vadd.f32 %v4938, %v4950
    %v4952 = vpop.f32.mrf.mxu0
    %4953 = vdwg.mxu0
    %4954 = vmatpush.bf16.msra.mxu0 %v3579
    %4955 = vmatpush.bf16.msra.mxu0 %v3575
    %4956 = vmatpush.bf16.msra.mxu0 %v3571
    %4957 = vmatpush.bf16.msra.mxu0 %v3567
    %4958 = vmatpush.bf16.msra.mxu0 %v3563
    %4959 = vmatpush.bf16.msra.mxu0 %v3559
    %4960 = vmatpush.bf16.msra.mxu0 %v3555
    %4961 = vmatpush.bf16.msra.mxu0 %v3551
    %4962 = vmatmul.bf16.gmra.mxu0 %v982
    %v4963 = vpop.f32.mrf.mxu0
    %v4964 = vadd.f32 %v4951, %v4963
    %v4965 = vpop.f32.mrf.mxu0
    %4966 = vdwg.mxu0
    %4967 = vmatpush.bf16.msra.mxu0 %v3611
    %4968 = vmatpush.bf16.msra.mxu0 %v3607
    %4969 = vmatpush.bf16.msra.mxu0 %v3603
    %4970 = vmatpush.bf16.msra.mxu0 %v3599
    %4971 = vmatpush.bf16.msra.mxu0 %v3595
    %4972 = vmatpush.bf16.msra.mxu0 %v3591
    %4973 = vmatpush.bf16.msra.mxu0 %v3587
    %4974 = vmatpush.bf16.msra.mxu0 %v3583
    %4975 = vmatmul.bf16.gmra.mxu0 %v983
    %v4976 = vpop.f32.mrf.mxu0
    %v4977 = vadd.f32 %v4964, %v4976
    %v4978 = vpop.f32.mrf.mxu0
    %4979 = vdwg.mxu0
    %4980 = vmatpush.bf16.msra.mxu0 %v3643
    %4981 = vmatpush.bf16.msra.mxu0 %v3639
    %4982 = vmatpush.bf16.msra.mxu0 %v3635
    %4983 = vmatpush.bf16.msra.mxu0 %v3631
    %4984 = vmatpush.bf16.msra.mxu0 %v3627
    %4985 = vmatpush.bf16.msra.mxu0 %v3623
    %4986 = vmatpush.bf16.msra.mxu0 %v3619
    %4987 = vmatpush.bf16.msra.mxu0 %v3615
    %4988 = vmatmul.bf16.gmra.mxu0 %v984
    %v4989 = vpop.f32.mrf.mxu0
    %v4990 = vadd.f32 %v4977, %v4989
    %v4991 = vpop.f32.mrf.mxu0
    %4992 = vdwg.mxu0
    %4993 = vmatpush.bf16.msra.mxu0 %v3675
    %4994 = vmatpush.bf16.msra.mxu0 %v3671
    %4995 = vmatpush.bf16.msra.mxu0 %v3667
    %4996 = vmatpush.bf16.msra.mxu0 %v3663
    %4997 = vmatpush.bf16.msra.mxu0 %v3659
    %4998 = vmatpush.bf16.msra.mxu0 %v3655
    %4999 = vmatpush.bf16.msra.mxu0 %v3651
    %5000 = vmatpush.bf16.msra.mxu0 %v3647
    %5001 = vmatmul.bf16.gmra.mxu0 %v985
    %v5002 = vpop.f32.mrf.mxu0
    %v5003 = vadd.f32 %v4990, %v5002
    %v5004 = vpop.f32.mrf.mxu0
    %5005 = vdwg.mxu0
    %5006 = vmatpush.bf16.msra.mxu0 %v3707
    %5007 = vmatpush.bf16.msra.mxu0 %v3703
    %5008 = vmatpush.bf16.msra.mxu0 %v3699
    %5009 = vmatpush.bf16.msra.mxu0 %v3695
    %5010 = vmatpush.bf16.msra.mxu0 %v3691
    %5011 = vmatpush.bf16.msra.mxu0 %v3687
    %5012 = vmatpush.bf16.msra.mxu0 %v3683
    %5013 = vmatpush.bf16.msra.mxu0 %v3679
    %5014 = vmatmul.bf16.gmra.mxu0 %v986
    %v5015 = vpop.f32.mrf.mxu0
    %v5016 = vadd.f32 %v5003, %v5015
    %v5017 = vpop.f32.mrf.mxu0
    %5018 = vdwg.mxu0
    %5019 = vmatpush.bf16.msra.mxu0 %v3739
    %5020 = vmatpush.bf16.msra.mxu0 %v3735
    %5021 = vmatpush.bf16.msra.mxu0 %v3731
    %5022 = vmatpush.bf16.msra.mxu0 %v3727
    %5023 = vmatpush.bf16.msra.mxu0 %v3723
    %5024 = vmatpush.bf16.msra.mxu0 %v3719
    %5025 = vmatpush.bf16.msra.mxu0 %v3715
    %5026 = vmatpush.bf16.msra.mxu0 %v3711
    %5027 = vmatmul.bf16.gmra.mxu0 %v987
    %v5028 = vpop.f32.mrf.mxu0
    %v5029 = vadd.f32 %v5016, %v5028
    %v5030 = vpop.f32.mrf.mxu0
    %5031 = vdwg.mxu0
    %5032 = vmatpush.bf16.msra.mxu0 %v3771
    %5033 = vmatpush.bf16.msra.mxu0 %v3767
    %5034 = vmatpush.bf16.msra.mxu0 %v3763
    %5035 = vmatpush.bf16.msra.mxu0 %v3759
    %5036 = vmatpush.bf16.msra.mxu0 %v3755
    %5037 = vmatpush.bf16.msra.mxu0 %v3751
    %5038 = vmatpush.bf16.msra.mxu0 %v3747
    %5039 = vmatpush.bf16.msra.mxu0 %v3743
    %5040 = vmatmul.bf16.gmra.mxu0 %v988
    %v5041 = vpop.f32.mrf.mxu0
    %v5042 = vadd.f32 %v5029, %v5041
    %v5043 = vpop.f32.mrf.mxu0
    %5044 = vdwg.mxu0
    %5045 = vmatpush.bf16.msra.mxu0 %v3803
    %5046 = vmatpush.bf16.msra.mxu0 %v3799
    %5047 = vmatpush.bf16.msra.mxu0 %v3795
    %5048 = vmatpush.bf16.msra.mxu0 %v3791
    %5049 = vmatpush.bf16.msra.mxu0 %v3787
    %5050 = vmatpush.bf16.msra.mxu0 %v3783
    %5051 = vmatpush.bf16.msra.mxu0 %v3779
    %5052 = vmatpush.bf16.msra.mxu0 %v3775
    %5053 = vmatmul.bf16.gmra.mxu0 %v989
    %v5054 = vpop.f32.mrf.mxu0
    %v5055 = vadd.f32 %v5042, %v5054
    %v5056 = vpop.f32.mrf.mxu0
    %5057 = vdwg.mxu0
    %5058 = vmatpush.bf16.msra.mxu0 %v3835
    %5059 = vmatpush.bf16.msra.mxu0 %v3831
    %5060 = vmatpush.bf16.msra.mxu0 %v3827
    %5061 = vmatpush.bf16.msra.mxu0 %v3823
    %5062 = vmatpush.bf16.msra.mxu0 %v3819
    %5063 = vmatpush.bf16.msra.mxu0 %v3815
    %5064 = vmatpush.bf16.msra.mxu0 %v3811
    %5065 = vmatpush.bf16.msra.mxu0 %v3807
    %5066 = vmatmul.bf16.gmra.mxu0 %v990
    %v5067 = vpop.f32.mrf.mxu0
    %v5068 = vadd.f32 %v5055, %v5067
    %v5069 = vpop.f32.mrf.mxu0
    %5070 = vdwg.mxu0
    %5071 = vmatpush.bf16.msra.mxu0 %v3867
    %5072 = vmatpush.bf16.msra.mxu0 %v3863
    %5073 = vmatpush.bf16.msra.mxu0 %v3859
    %5074 = vmatpush.bf16.msra.mxu0 %v3855
    %5075 = vmatpush.bf16.msra.mxu0 %v3851
    %5076 = vmatpush.bf16.msra.mxu0 %v3847
    %5077 = vmatpush.bf16.msra.mxu0 %v3843
    %5078 = vmatpush.bf16.msra.mxu0 %v3839
    %5079 = vmatmul.bf16.gmra.mxu0 %v991
    %v5080 = vpop.f32.mrf.mxu0
    %v5081 = vadd.f32 %v5068, %v5080
    %v5082 = vpop.f32.mrf.mxu0
    %5083 = vdwg.mxu0
    %5084 = vmatpush.bf16.msra.mxu0 %v3899
    %5085 = vmatpush.bf16.msra.mxu0 %v3895
    %5086 = vmatpush.bf16.msra.mxu0 %v3891
    %5087 = vmatpush.bf16.msra.mxu0 %v3887
    %5088 = vmatpush.bf16.msra.mxu0 %v3883
    %5089 = vmatpush.bf16.msra.mxu0 %v3879
    %5090 = vmatpush.bf16.msra.mxu0 %v3875
    %5091 = vmatpush.bf16.msra.mxu0 %v3871
    %5092 = vmatmul.bf16.gmra.mxu0 %v992
    %v5093 = vpop.f32.mrf.mxu0
    %v5094 = vadd.f32 %v5081, %v5093
    %v5095 = vpop.f32.mrf.mxu0
    %5096 = vdwg.mxu0
    %5097 = vmatpush.bf16.msra.mxu0 %v3931
    %5098 = vmatpush.bf16.msra.mxu0 %v3927
    %5099 = vmatpush.bf16.msra.mxu0 %v3923
    %5100 = vmatpush.bf16.msra.mxu0 %v3919
    %5101 = vmatpush.bf16.msra.mxu0 %v3915
    %5102 = vmatpush.bf16.msra.mxu0 %v3911
    %5103 = vmatpush.bf16.msra.mxu0 %v3907
    %5104 = vmatpush.bf16.msra.mxu0 %v3903
    %5105 = vmatmul.bf16.gmra.mxu0 %v993
    %v5106 = vpop.f32.mrf.mxu0
    %v5107 = vadd.f32 %v5094, %v5106
    %v5108 = vpop.f32.mrf.mxu0
    %5109 = vdwg.mxu0
    %5110 = vmatpush.bf16.msra.mxu0 %v3963
    %5111 = vmatpush.bf16.msra.mxu0 %v3959
    %5112 = vmatpush.bf16.msra.mxu0 %v3955
    %5113 = vmatpush.bf16.msra.mxu0 %v3951
    %5114 = vmatpush.bf16.msra.mxu0 %v3947
    %5115 = vmatpush.bf16.msra.mxu0 %v3943
    %5116 = vmatpush.bf16.msra.mxu0 %v3939
    %5117 = vmatpush.bf16.msra.mxu0 %v3935
    %5118 = vmatmul.bf16.gmra.mxu0 %v994
    %v5119 = vpop.f32.mrf.mxu0
    %v5120 = vadd.f32 %v5107, %v5119
    %v5121 = vpop.f32.mrf.mxu0
    %5122 = vdwg.mxu0
    %5123 = vmatpush.bf16.msra.mxu0 %v3995
    %5124 = vmatpush.bf16.msra.mxu0 %v3991
    %5125 = vmatpush.bf16.msra.mxu0 %v3987
    %5126 = vmatpush.bf16.msra.mxu0 %v3983
    %5127 = vmatpush.bf16.msra.mxu0 %v3979
    %5128 = vmatpush.bf16.msra.mxu0 %v3975
    %5129 = vmatpush.bf16.msra.mxu0 %v3971
    %5130 = vmatpush.bf16.msra.mxu0 %v3967
    %5131 = vmatmul.bf16.gmra.mxu0 %v995
    %v5132 = vpop.f32.mrf.mxu0
    %v5133 = vadd.f32 %v5120, %v5132
    %v5134 = vpop.f32.mrf.mxu0
    %5135 = vdwg.mxu0
    %5136 = vmatpush.bf16.msra.mxu0 %v4027
    %5137 = vmatpush.bf16.msra.mxu0 %v4023
    %5138 = vmatpush.bf16.msra.mxu0 %v4019
    %5139 = vmatpush.bf16.msra.mxu0 %v4015
    %5140 = vmatpush.bf16.msra.mxu0 %v4011
    %5141 = vmatpush.bf16.msra.mxu0 %v4007
    %5142 = vmatpush.bf16.msra.mxu0 %v4003
    %5143 = vmatpush.bf16.msra.mxu0 %v3999
    %5144 = vmatmul.bf16.gmra.mxu0 %v996
    %v5145 = vpop.f32.mrf.mxu0
    %v5146 = vadd.f32 %v5133, %v5145
    %v5147 = vpop.f32.mrf.mxu0
    %5148 = vdwg.mxu0
    %5149 = vmatpush.bf16.msra.mxu0 %v4059
    %5150 = vmatpush.bf16.msra.mxu0 %v4055
    %5151 = vmatpush.bf16.msra.mxu0 %v4051
    %5152 = vmatpush.bf16.msra.mxu0 %v4047
    %5153 = vmatpush.bf16.msra.mxu0 %v4043
    %5154 = vmatpush.bf16.msra.mxu0 %v4039
    %5155 = vmatpush.bf16.msra.mxu0 %v4035
    %5156 = vmatpush.bf16.msra.mxu0 %v4031
    %5157 = vmatmul.bf16.gmra.mxu0 %v997
    %v5158 = vpop.f32.mrf.mxu0
    %v5159 = vadd.f32 %v5146, %v5158
    %v5160 = vpop.f32.mrf.mxu0
    %5161 = vdwg.mxu0
    %5162 = vmatpush.bf16.msra.mxu0 %v4091
    %5163 = vmatpush.bf16.msra.mxu0 %v4087
    %5164 = vmatpush.bf16.msra.mxu0 %v4083
    %5165 = vmatpush.bf16.msra.mxu0 %v4079
    %5166 = vmatpush.bf16.msra.mxu0 %v4075
    %5167 = vmatpush.bf16.msra.mxu0 %v4071
    %5168 = vmatpush.bf16.msra.mxu0 %v4067
    %5169 = vmatpush.bf16.msra.mxu0 %v4063
    %5170 = vmatmul.bf16.gmra.mxu0 %v998
    %v5171 = vpop.f32.mrf.mxu0
    %v5172 = vadd.f32 %v5159, %v5171
    %v5173 = vpop.f32.mrf.mxu0
    %5174 = vdwg.mxu0
    %5175 = vmatpush.bf16.msra.mxu0 %v3356
    %5176 = vmatpush.bf16.msra.mxu0 %v3352
    %5177 = vmatpush.bf16.msra.mxu0 %v3348
    %5178 = vmatpush.bf16.msra.mxu0 %v3344
    %5179 = vmatpush.bf16.msra.mxu0 %v3340
    %5180 = vmatpush.bf16.msra.mxu0 %v3336
    %5181 = vmatpush.bf16.msra.mxu0 %v3332
    %5182 = vmatpush.bf16.msra.mxu0 %v3328
    %5183 = vmatmul.bf16.gmra.mxu0 %v975
    %v5184 = vpop.f32.mrf.mxu0
    %v5185 = vadd.f32 %v932, %v5184
    %v5186 = vpop.f32.mrf.mxu0
    %5187 = vdwg.mxu0
    %5188 = vmatpush.bf16.msra.mxu0 %v3388
    %5189 = vmatpush.bf16.msra.mxu0 %v3384
    %5190 = vmatpush.bf16.msra.mxu0 %v3380
    %5191 = vmatpush.bf16.msra.mxu0 %v3376
    %5192 = vmatpush.bf16.msra.mxu0 %v3372
    %5193 = vmatpush.bf16.msra.mxu0 %v3368
    %5194 = vmatpush.bf16.msra.mxu0 %v3364
    %5195 = vmatpush.bf16.msra.mxu0 %v3360
    %5196 = vmatmul.bf16.gmra.mxu0 %v976
    %v5197 = vpop.f32.mrf.mxu0
    %v5198 = vadd.f32 %v5185, %v5197
    %v5199 = vpop.f32.mrf.mxu0
    %5200 = vdwg.mxu0
    %5201 = vmatpush.bf16.msra.mxu0 %v3420
    %5202 = vmatpush.bf16.msra.mxu0 %v3416
    %5203 = vmatpush.bf16.msra.mxu0 %v3412
    %5204 = vmatpush.bf16.msra.mxu0 %v3408
    %5205 = vmatpush.bf16.msra.mxu0 %v3404
    %5206 = vmatpush.bf16.msra.mxu0 %v3400
    %5207 = vmatpush.bf16.msra.mxu0 %v3396
    %5208 = vmatpush.bf16.msra.mxu0 %v3392
    %5209 = vmatmul.bf16.gmra.mxu0 %v977
    %v5210 = vpop.f32.mrf.mxu0
    %v5211 = vadd.f32 %v5198, %v5210
    %v5212 = vpop.f32.mrf.mxu0
    %5213 = vdwg.mxu0
    %5214 = vmatpush.bf16.msra.mxu0 %v3452
    %5215 = vmatpush.bf16.msra.mxu0 %v3448
    %5216 = vmatpush.bf16.msra.mxu0 %v3444
    %5217 = vmatpush.bf16.msra.mxu0 %v3440
    %5218 = vmatpush.bf16.msra.mxu0 %v3436
    %5219 = vmatpush.bf16.msra.mxu0 %v3432
    %5220 = vmatpush.bf16.msra.mxu0 %v3428
    %5221 = vmatpush.bf16.msra.mxu0 %v3424
    %5222 = vmatmul.bf16.gmra.mxu0 %v978
    %v5223 = vpop.f32.mrf.mxu0
    %v5224 = vadd.f32 %v5211, %v5223
    %v5225 = vpop.f32.mrf.mxu0
    %5226 = vdwg.mxu0
    %5227 = vmatpush.bf16.msra.mxu0 %v3484
    %5228 = vmatpush.bf16.msra.mxu0 %v3480
    %5229 = vmatpush.bf16.msra.mxu0 %v3476
    %5230 = vmatpush.bf16.msra.mxu0 %v3472
    %5231 = vmatpush.bf16.msra.mxu0 %v3468
    %5232 = vmatpush.bf16.msra.mxu0 %v3464
    %5233 = vmatpush.bf16.msra.mxu0 %v3460
    %5234 = vmatpush.bf16.msra.mxu0 %v3456
    %5235 = vmatmul.bf16.gmra.mxu0 %v979
    %v5236 = vpop.f32.mrf.mxu0
    %v5237 = vadd.f32 %v5224, %v5236
    %v5238 = vpop.f32.mrf.mxu0
    %5239 = vdwg.mxu0
    %5240 = vmatpush.bf16.msra.mxu0 %v3516
    %5241 = vmatpush.bf16.msra.mxu0 %v3512
    %5242 = vmatpush.bf16.msra.mxu0 %v3508
    %5243 = vmatpush.bf16.msra.mxu0 %v3504
    %5244 = vmatpush.bf16.msra.mxu0 %v3500
    %5245 = vmatpush.bf16.msra.mxu0 %v3496
    %5246 = vmatpush.bf16.msra.mxu0 %v3492
    %5247 = vmatpush.bf16.msra.mxu0 %v3488
    %5248 = vmatmul.bf16.gmra.mxu0 %v980
    %v5249 = vpop.f32.mrf.mxu0
    %v5250 = vadd.f32 %v5237, %v5249
    %v5251 = vpop.f32.mrf.mxu0
    %5252 = vdwg.mxu0
    %5253 = vmatpush.bf16.msra.mxu0 %v3548
    %5254 = vmatpush.bf16.msra.mxu0 %v3544
    %5255 = vmatpush.bf16.msra.mxu0 %v3540
    %5256 = vmatpush.bf16.msra.mxu0 %v3536
    %5257 = vmatpush.bf16.msra.mxu0 %v3532
    %5258 = vmatpush.bf16.msra.mxu0 %v3528
    %5259 = vmatpush.bf16.msra.mxu0 %v3524
    %5260 = vmatpush.bf16.msra.mxu0 %v3520
    %5261 = vmatmul.bf16.gmra.mxu0 %v981
    %v5262 = vpop.f32.mrf.mxu0
    %v5263 = vadd.f32 %v5250, %v5262
    %v5264 = vpop.f32.mrf.mxu0
    %5265 = vdwg.mxu0
    %5266 = vmatpush.bf16.msra.mxu0 %v3580
    %5267 = vmatpush.bf16.msra.mxu0 %v3576
    %5268 = vmatpush.bf16.msra.mxu0 %v3572
    %5269 = vmatpush.bf16.msra.mxu0 %v3568
    %5270 = vmatpush.bf16.msra.mxu0 %v3564
    %5271 = vmatpush.bf16.msra.mxu0 %v3560
    %5272 = vmatpush.bf16.msra.mxu0 %v3556
    %5273 = vmatpush.bf16.msra.mxu0 %v3552
    %5274 = vmatmul.bf16.gmra.mxu0 %v982
    %v5275 = vpop.f32.mrf.mxu0
    %v5276 = vadd.f32 %v5263, %v5275
    %v5277 = vpop.f32.mrf.mxu0
    %5278 = vdwg.mxu0
    %5279 = vmatpush.bf16.msra.mxu0 %v3612
    %5280 = vmatpush.bf16.msra.mxu0 %v3608
    %5281 = vmatpush.bf16.msra.mxu0 %v3604
    %5282 = vmatpush.bf16.msra.mxu0 %v3600
    %5283 = vmatpush.bf16.msra.mxu0 %v3596
    %5284 = vmatpush.bf16.msra.mxu0 %v3592
    %5285 = vmatpush.bf16.msra.mxu0 %v3588
    %5286 = vmatpush.bf16.msra.mxu0 %v3584
    %5287 = vmatmul.bf16.gmra.mxu0 %v983
    %v5288 = vpop.f32.mrf.mxu0
    %v5289 = vadd.f32 %v5276, %v5288
    %v5290 = vpop.f32.mrf.mxu0
    %5291 = vdwg.mxu0
    %5292 = vmatpush.bf16.msra.mxu0 %v3644
    %5293 = vmatpush.bf16.msra.mxu0 %v3640
    %5294 = vmatpush.bf16.msra.mxu0 %v3636
    %5295 = vmatpush.bf16.msra.mxu0 %v3632
    %5296 = vmatpush.bf16.msra.mxu0 %v3628
    %5297 = vmatpush.bf16.msra.mxu0 %v3624
    %5298 = vmatpush.bf16.msra.mxu0 %v3620
    %5299 = vmatpush.bf16.msra.mxu0 %v3616
    %5300 = vmatmul.bf16.gmra.mxu0 %v984
    %v5301 = vpop.f32.mrf.mxu0
    %v5302 = vadd.f32 %v5289, %v5301
    %v5303 = vpop.f32.mrf.mxu0
    %5304 = vdwg.mxu0
    %5305 = vmatpush.bf16.msra.mxu0 %v3676
    %5306 = vmatpush.bf16.msra.mxu0 %v3672
    %5307 = vmatpush.bf16.msra.mxu0 %v3668
    %5308 = vmatpush.bf16.msra.mxu0 %v3664
    %5309 = vmatpush.bf16.msra.mxu0 %v3660
    %5310 = vmatpush.bf16.msra.mxu0 %v3656
    %5311 = vmatpush.bf16.msra.mxu0 %v3652
    %5312 = vmatpush.bf16.msra.mxu0 %v3648
    %5313 = vmatmul.bf16.gmra.mxu0 %v985
    %v5314 = vpop.f32.mrf.mxu0
    %v5315 = vadd.f32 %v5302, %v5314
    %v5316 = vpop.f32.mrf.mxu0
    %5317 = vdwg.mxu0
    %5318 = vmatpush.bf16.msra.mxu0 %v3708
    %5319 = vmatpush.bf16.msra.mxu0 %v3704
    %5320 = vmatpush.bf16.msra.mxu0 %v3700
    %5321 = vmatpush.bf16.msra.mxu0 %v3696
    %5322 = vmatpush.bf16.msra.mxu0 %v3692
    %5323 = vmatpush.bf16.msra.mxu0 %v3688
    %5324 = vmatpush.bf16.msra.mxu0 %v3684
    %5325 = vmatpush.bf16.msra.mxu0 %v3680
    %5326 = vmatmul.bf16.gmra.mxu0 %v986
    %v5327 = vpop.f32.mrf.mxu0
    %v5328 = vadd.f32 %v5315, %v5327
    %v5329 = vpop.f32.mrf.mxu0
    %5330 = vdwg.mxu0
    %5331 = vmatpush.bf16.msra.mxu0 %v3740
    %5332 = vmatpush.bf16.msra.mxu0 %v3736
    %5333 = vmatpush.bf16.msra.mxu0 %v3732
    %5334 = vmatpush.bf16.msra.mxu0 %v3728
    %5335 = vmatpush.bf16.msra.mxu0 %v3724
    %5336 = vmatpush.bf16.msra.mxu0 %v3720
    %5337 = vmatpush.bf16.msra.mxu0 %v3716
    %5338 = vmatpush.bf16.msra.mxu0 %v3712
    %5339 = vmatmul.bf16.gmra.mxu0 %v987
    %v5340 = vpop.f32.mrf.mxu0
    %v5341 = vadd.f32 %v5328, %v5340
    %v5342 = vpop.f32.mrf.mxu0
    %5343 = vdwg.mxu0
    %5344 = vmatpush.bf16.msra.mxu0 %v3772
    %5345 = vmatpush.bf16.msra.mxu0 %v3768
    %5346 = vmatpush.bf16.msra.mxu0 %v3764
    %5347 = vmatpush.bf16.msra.mxu0 %v3760
    %5348 = vmatpush.bf16.msra.mxu0 %v3756
    %5349 = vmatpush.bf16.msra.mxu0 %v3752
    %5350 = vmatpush.bf16.msra.mxu0 %v3748
    %5351 = vmatpush.bf16.msra.mxu0 %v3744
    %5352 = vmatmul.bf16.gmra.mxu0 %v988
    %v5353 = vpop.f32.mrf.mxu0
    %v5354 = vadd.f32 %v5341, %v5353
    %v5355 = vpop.f32.mrf.mxu0
    %5356 = vdwg.mxu0
    %5357 = vmatpush.bf16.msra.mxu0 %v3804
    %5358 = vmatpush.bf16.msra.mxu0 %v3800
    %5359 = vmatpush.bf16.msra.mxu0 %v3796
    %5360 = vmatpush.bf16.msra.mxu0 %v3792
    %5361 = vmatpush.bf16.msra.mxu0 %v3788
    %5362 = vmatpush.bf16.msra.mxu0 %v3784
    %5363 = vmatpush.bf16.msra.mxu0 %v3780
    %5364 = vmatpush.bf16.msra.mxu0 %v3776
    %5365 = vmatmul.bf16.gmra.mxu0 %v989
    %v5366 = vpop.f32.mrf.mxu0
    %v5367 = vadd.f32 %v5354, %v5366
    %v5368 = vpop.f32.mrf.mxu0
    %5369 = vdwg.mxu0
    %5370 = vmatpush.bf16.msra.mxu0 %v3836
    %5371 = vmatpush.bf16.msra.mxu0 %v3832
    %5372 = vmatpush.bf16.msra.mxu0 %v3828
    %5373 = vmatpush.bf16.msra.mxu0 %v3824
    %5374 = vmatpush.bf16.msra.mxu0 %v3820
    %5375 = vmatpush.bf16.msra.mxu0 %v3816
    %5376 = vmatpush.bf16.msra.mxu0 %v3812
    %5377 = vmatpush.bf16.msra.mxu0 %v3808
    %5378 = vmatmul.bf16.gmra.mxu0 %v990
    %v5379 = vpop.f32.mrf.mxu0
    %v5380 = vadd.f32 %v5367, %v5379
    %v5381 = vpop.f32.mrf.mxu0
    %5382 = vdwg.mxu0
    %5383 = vmatpush.bf16.msra.mxu0 %v3868
    %5384 = vmatpush.bf16.msra.mxu0 %v3864
    %5385 = vmatpush.bf16.msra.mxu0 %v3860
    %5386 = vmatpush.bf16.msra.mxu0 %v3856
    %5387 = vmatpush.bf16.msra.mxu0 %v3852
    %5388 = vmatpush.bf16.msra.mxu0 %v3848
    %5389 = vmatpush.bf16.msra.mxu0 %v3844
    %5390 = vmatpush.bf16.msra.mxu0 %v3840
    %5391 = vmatmul.bf16.gmra.mxu0 %v991
    %v5392 = vpop.f32.mrf.mxu0
    %v5393 = vadd.f32 %v5380, %v5392
    %v5394 = vpop.f32.mrf.mxu0
    %5395 = vdwg.mxu0
    %5396 = vmatpush.bf16.msra.mxu0 %v3900
    %5397 = vmatpush.bf16.msra.mxu0 %v3896
    %5398 = vmatpush.bf16.msra.mxu0 %v3892
    %5399 = vmatpush.bf16.msra.mxu0 %v3888
    %5400 = vmatpush.bf16.msra.mxu0 %v3884
    %5401 = vmatpush.bf16.msra.mxu0 %v3880
    %5402 = vmatpush.bf16.msra.mxu0 %v3876
    %5403 = vmatpush.bf16.msra.mxu0 %v3872
    %5404 = vmatmul.bf16.gmra.mxu0 %v992
    %v5405 = vpop.f32.mrf.mxu0
    %v5406 = vadd.f32 %v5393, %v5405
    %v5407 = vpop.f32.mrf.mxu0
    %5408 = vdwg.mxu0
    %5409 = vmatpush.bf16.msra.mxu0 %v3932
    %5410 = vmatpush.bf16.msra.mxu0 %v3928
    %5411 = vmatpush.bf16.msra.mxu0 %v3924
    %5412 = vmatpush.bf16.msra.mxu0 %v3920
    %5413 = vmatpush.bf16.msra.mxu0 %v3916
    %5414 = vmatpush.bf16.msra.mxu0 %v3912
    %5415 = vmatpush.bf16.msra.mxu0 %v3908
    %5416 = vmatpush.bf16.msra.mxu0 %v3904
    %5417 = vmatmul.bf16.gmra.mxu0 %v993
    %v5418 = vpop.f32.mrf.mxu0
    %v5419 = vadd.f32 %v5406, %v5418
    %v5420 = vpop.f32.mrf.mxu0
    %5421 = vdwg.mxu0
    %5422 = vmatpush.bf16.msra.mxu0 %v3964
    %5423 = vmatpush.bf16.msra.mxu0 %v3960
    %5424 = vmatpush.bf16.msra.mxu0 %v3956
    %5425 = vmatpush.bf16.msra.mxu0 %v3952
    %5426 = vmatpush.bf16.msra.mxu0 %v3948
    %5427 = vmatpush.bf16.msra.mxu0 %v3944
    %5428 = vmatpush.bf16.msra.mxu0 %v3940
    %5429 = vmatpush.bf16.msra.mxu0 %v3936
    %5430 = vmatmul.bf16.gmra.mxu0 %v994
    %v5431 = vpop.f32.mrf.mxu0
    %v5432 = vadd.f32 %v5419, %v5431
    %v5433 = vpop.f32.mrf.mxu0
    %5434 = vdwg.mxu0
    %5435 = vmatpush.bf16.msra.mxu0 %v3996
    %5436 = vmatpush.bf16.msra.mxu0 %v3992
    %5437 = vmatpush.bf16.msra.mxu0 %v3988
    %5438 = vmatpush.bf16.msra.mxu0 %v3984
    %5439 = vmatpush.bf16.msra.mxu0 %v3980
    %5440 = vmatpush.bf16.msra.mxu0 %v3976
    %5441 = vmatpush.bf16.msra.mxu0 %v3972
    %5442 = vmatpush.bf16.msra.mxu0 %v3968
    %5443 = vmatmul.bf16.gmra.mxu0 %v995
    %v5444 = vpop.f32.mrf.mxu0
    %v5445 = vadd.f32 %v5432, %v5444
    %v5446 = vpop.f32.mrf.mxu0
    %5447 = vdwg.mxu0
    %5448 = vmatpush.bf16.msra.mxu0 %v4028
    %5449 = vmatpush.bf16.msra.mxu0 %v4024
    %5450 = vmatpush.bf16.msra.mxu0 %v4020
    %5451 = vmatpush.bf16.msra.mxu0 %v4016
    %5452 = vmatpush.bf16.msra.mxu0 %v4012
    %5453 = vmatpush.bf16.msra.mxu0 %v4008
    %5454 = vmatpush.bf16.msra.mxu0 %v4004
    %5455 = vmatpush.bf16.msra.mxu0 %v4000
    %5456 = vmatmul.bf16.gmra.mxu0 %v996
    %v5457 = vpop.f32.mrf.mxu0
    %v5458 = vadd.f32 %v5445, %v5457
    %v5459 = vpop.f32.mrf.mxu0
    %5460 = vdwg.mxu0
    %5461 = vmatpush.bf16.msra.mxu0 %v4060
    %5462 = vmatpush.bf16.msra.mxu0 %v4056
    %5463 = vmatpush.bf16.msra.mxu0 %v4052
    %5464 = vmatpush.bf16.msra.mxu0 %v4048
    %5465 = vmatpush.bf16.msra.mxu0 %v4044
    %5466 = vmatpush.bf16.msra.mxu0 %v4040
    %5467 = vmatpush.bf16.msra.mxu0 %v4036
    %5468 = vmatpush.bf16.msra.mxu0 %v4032
    %5469 = vmatmul.bf16.gmra.mxu0 %v997
    %v5470 = vpop.f32.mrf.mxu0
    %v5471 = vadd.f32 %v5458, %v5470
    %v5472 = vpop.f32.mrf.mxu0
    %5473 = vdwg.mxu0
    %5474 = vmatpush.bf16.msra.mxu0 %v4092
    %5475 = vmatpush.bf16.msra.mxu0 %v4088
    %5476 = vmatpush.bf16.msra.mxu0 %v4084
    %5477 = vmatpush.bf16.msra.mxu0 %v4080
    %5478 = vmatpush.bf16.msra.mxu0 %v4076
    %5479 = vmatpush.bf16.msra.mxu0 %v4072
    %5480 = vmatpush.bf16.msra.mxu0 %v4068
    %5481 = vmatpush.bf16.msra.mxu0 %v4064
    %5482 = vmatmul.bf16.gmra.mxu0 %v998
    %v5483 = vpop.f32.mrf.mxu0
    %v5484 = vadd.f32 %v5471, %v5483
    %v5485 = vpop.f32.mrf.mxu0
    %5486 = vdwg.mxu0
    %5487 = vmatpush.bf16.msra.mxu0 %v3357
    %5488 = vmatpush.bf16.msra.mxu0 %v3353
    %5489 = vmatpush.bf16.msra.mxu0 %v3349
    %5490 = vmatpush.bf16.msra.mxu0 %v3345
    %5491 = vmatpush.bf16.msra.mxu0 %v3341
    %5492 = vmatpush.bf16.msra.mxu0 %v3337
    %5493 = vmatpush.bf16.msra.mxu0 %v3333
    %5494 = vmatpush.bf16.msra.mxu0 %v3329
    %5495 = vmatmul.bf16.gmra.mxu0 %v975
    %v5496 = vpop.f32.mrf.mxu0
    %v5497 = vadd.f32 %v933, %v5496
    %v5498 = vpop.f32.mrf.mxu0
    %5499 = vdwg.mxu0
    %5500 = vmatpush.bf16.msra.mxu0 %v3389
    %5501 = vmatpush.bf16.msra.mxu0 %v3385
    %5502 = vmatpush.bf16.msra.mxu0 %v3381
    %5503 = vmatpush.bf16.msra.mxu0 %v3377
    %5504 = vmatpush.bf16.msra.mxu0 %v3373
    %5505 = vmatpush.bf16.msra.mxu0 %v3369
    %5506 = vmatpush.bf16.msra.mxu0 %v3365
    %5507 = vmatpush.bf16.msra.mxu0 %v3361
    %5508 = vmatmul.bf16.gmra.mxu0 %v976
    %v5509 = vpop.f32.mrf.mxu0
    %v5510 = vadd.f32 %v5497, %v5509
    %v5511 = vpop.f32.mrf.mxu0
    %5512 = vdwg.mxu0
    %5513 = vmatpush.bf16.msra.mxu0 %v3421
    %5514 = vmatpush.bf16.msra.mxu0 %v3417
    %5515 = vmatpush.bf16.msra.mxu0 %v3413
    %5516 = vmatpush.bf16.msra.mxu0 %v3409
    %5517 = vmatpush.bf16.msra.mxu0 %v3405
    %5518 = vmatpush.bf16.msra.mxu0 %v3401
    %5519 = vmatpush.bf16.msra.mxu0 %v3397
    %5520 = vmatpush.bf16.msra.mxu0 %v3393
    %5521 = vmatmul.bf16.gmra.mxu0 %v977
    %v5522 = vpop.f32.mrf.mxu0
    %v5523 = vadd.f32 %v5510, %v5522
    %v5524 = vpop.f32.mrf.mxu0
    %5525 = vdwg.mxu0
    %5526 = vmatpush.bf16.msra.mxu0 %v3453
    %5527 = vmatpush.bf16.msra.mxu0 %v3449
    %5528 = vmatpush.bf16.msra.mxu0 %v3445
    %5529 = vmatpush.bf16.msra.mxu0 %v3441
    %5530 = vmatpush.bf16.msra.mxu0 %v3437
    %5531 = vmatpush.bf16.msra.mxu0 %v3433
    %5532 = vmatpush.bf16.msra.mxu0 %v3429
    %5533 = vmatpush.bf16.msra.mxu0 %v3425
    %5534 = vmatmul.bf16.gmra.mxu0 %v978
    %v5535 = vpop.f32.mrf.mxu0
    %v5536 = vadd.f32 %v5523, %v5535
    %v5537 = vpop.f32.mrf.mxu0
    %5538 = vdwg.mxu0
    %5539 = vmatpush.bf16.msra.mxu0 %v3485
    %5540 = vmatpush.bf16.msra.mxu0 %v3481
    %5541 = vmatpush.bf16.msra.mxu0 %v3477
    %5542 = vmatpush.bf16.msra.mxu0 %v3473
    %5543 = vmatpush.bf16.msra.mxu0 %v3469
    %5544 = vmatpush.bf16.msra.mxu0 %v3465
    %5545 = vmatpush.bf16.msra.mxu0 %v3461
    %5546 = vmatpush.bf16.msra.mxu0 %v3457
    %5547 = vmatmul.bf16.gmra.mxu0 %v979
    %v5548 = vpop.f32.mrf.mxu0
    %v5549 = vadd.f32 %v5536, %v5548
    %v5550 = vpop.f32.mrf.mxu0
    %5551 = vdwg.mxu0
    %5552 = vmatpush.bf16.msra.mxu0 %v3517
    %5553 = vmatpush.bf16.msra.mxu0 %v3513
    %5554 = vmatpush.bf16.msra.mxu0 %v3509
    %5555 = vmatpush.bf16.msra.mxu0 %v3505
    %5556 = vmatpush.bf16.msra.mxu0 %v3501
    %5557 = vmatpush.bf16.msra.mxu0 %v3497
    %5558 = vmatpush.bf16.msra.mxu0 %v3493
    %5559 = vmatpush.bf16.msra.mxu0 %v3489
    %5560 = vmatmul.bf16.gmra.mxu0 %v980
    %v5561 = vpop.f32.mrf.mxu0
    %v5562 = vadd.f32 %v5549, %v5561
    %v5563 = vpop.f32.mrf.mxu0
    %5564 = vdwg.mxu0
    %5565 = vmatpush.bf16.msra.mxu0 %v3549
    %5566 = vmatpush.bf16.msra.mxu0 %v3545
    %5567 = vmatpush.bf16.msra.mxu0 %v3541
    %5568 = vmatpush.bf16.msra.mxu0 %v3537
    %5569 = vmatpush.bf16.msra.mxu0 %v3533
    %5570 = vmatpush.bf16.msra.mxu0 %v3529
    %5571 = vmatpush.bf16.msra.mxu0 %v3525
    %5572 = vmatpush.bf16.msra.mxu0 %v3521
    %5573 = vmatmul.bf16.gmra.mxu0 %v981
    %v5574 = vpop.f32.mrf.mxu0
    %v5575 = vadd.f32 %v5562, %v5574
    %v5576 = vpop.f32.mrf.mxu0
    %5577 = vdwg.mxu0
    %5578 = vmatpush.bf16.msra.mxu0 %v3581
    %5579 = vmatpush.bf16.msra.mxu0 %v3577
    %5580 = vmatpush.bf16.msra.mxu0 %v3573
    %5581 = vmatpush.bf16.msra.mxu0 %v3569
    %5582 = vmatpush.bf16.msra.mxu0 %v3565
    %5583 = vmatpush.bf16.msra.mxu0 %v3561
    %5584 = vmatpush.bf16.msra.mxu0 %v3557
    %5585 = vmatpush.bf16.msra.mxu0 %v3553
    %5586 = vmatmul.bf16.gmra.mxu0 %v982
    %v5587 = vpop.f32.mrf.mxu0
    %v5588 = vadd.f32 %v5575, %v5587
    %v5589 = vpop.f32.mrf.mxu0
    %5590 = vdwg.mxu0
    %5591 = vmatpush.bf16.msra.mxu0 %v3613
    %5592 = vmatpush.bf16.msra.mxu0 %v3609
    %5593 = vmatpush.bf16.msra.mxu0 %v3605
    %5594 = vmatpush.bf16.msra.mxu0 %v3601
    %5595 = vmatpush.bf16.msra.mxu0 %v3597
    %5596 = vmatpush.bf16.msra.mxu0 %v3593
    %5597 = vmatpush.bf16.msra.mxu0 %v3589
    %5598 = vmatpush.bf16.msra.mxu0 %v3585
    %5599 = vmatmul.bf16.gmra.mxu0 %v983
    %v5600 = vpop.f32.mrf.mxu0
    %v5601 = vadd.f32 %v5588, %v5600
    %v5602 = vpop.f32.mrf.mxu0
    %5603 = vdwg.mxu0
    %5604 = vmatpush.bf16.msra.mxu0 %v3645
    %5605 = vmatpush.bf16.msra.mxu0 %v3641
    %5606 = vmatpush.bf16.msra.mxu0 %v3637
    %5607 = vmatpush.bf16.msra.mxu0 %v3633
    %5608 = vmatpush.bf16.msra.mxu0 %v3629
    %5609 = vmatpush.bf16.msra.mxu0 %v3625
    %5610 = vmatpush.bf16.msra.mxu0 %v3621
    %5611 = vmatpush.bf16.msra.mxu0 %v3617
    %5612 = vmatmul.bf16.gmra.mxu0 %v984
    %v5613 = vpop.f32.mrf.mxu0
    %v5614 = vadd.f32 %v5601, %v5613
    %v5615 = vpop.f32.mrf.mxu0
    %5616 = vdwg.mxu0
    %5617 = vmatpush.bf16.msra.mxu0 %v3677
    %5618 = vmatpush.bf16.msra.mxu0 %v3673
    %5619 = vmatpush.bf16.msra.mxu0 %v3669
    %5620 = vmatpush.bf16.msra.mxu0 %v3665
    %5621 = vmatpush.bf16.msra.mxu0 %v3661
    %5622 = vmatpush.bf16.msra.mxu0 %v3657
    %5623 = vmatpush.bf16.msra.mxu0 %v3653
    %5624 = vmatpush.bf16.msra.mxu0 %v3649
    %5625 = vmatmul.bf16.gmra.mxu0 %v985
    %v5626 = vpop.f32.mrf.mxu0
    %v5627 = vadd.f32 %v5614, %v5626
    %v5628 = vpop.f32.mrf.mxu0
    %5629 = vdwg.mxu0
    %5630 = vmatpush.bf16.msra.mxu0 %v3709
    %5631 = vmatpush.bf16.msra.mxu0 %v3705
    %5632 = vmatpush.bf16.msra.mxu0 %v3701
    %5633 = vmatpush.bf16.msra.mxu0 %v3697
    %5634 = vmatpush.bf16.msra.mxu0 %v3693
    %5635 = vmatpush.bf16.msra.mxu0 %v3689
    %5636 = vmatpush.bf16.msra.mxu0 %v3685
    %5637 = vmatpush.bf16.msra.mxu0 %v3681
    %5638 = vmatmul.bf16.gmra.mxu0 %v986
    %v5639 = vpop.f32.mrf.mxu0
    %v5640 = vadd.f32 %v5627, %v5639
    %v5641 = vpop.f32.mrf.mxu0
    %5642 = vdwg.mxu0
    %5643 = vmatpush.bf16.msra.mxu0 %v3741
    %5644 = vmatpush.bf16.msra.mxu0 %v3737
    %5645 = vmatpush.bf16.msra.mxu0 %v3733
    %5646 = vmatpush.bf16.msra.mxu0 %v3729
    %5647 = vmatpush.bf16.msra.mxu0 %v3725
    %5648 = vmatpush.bf16.msra.mxu0 %v3721
    %5649 = vmatpush.bf16.msra.mxu0 %v3717
    %5650 = vmatpush.bf16.msra.mxu0 %v3713
    %5651 = vmatmul.bf16.gmra.mxu0 %v987
    %v5652 = vpop.f32.mrf.mxu0
    %v5653 = vadd.f32 %v5640, %v5652
    %v5654 = vpop.f32.mrf.mxu0
    %5655 = vdwg.mxu0
    %5656 = vmatpush.bf16.msra.mxu0 %v3773
    %5657 = vmatpush.bf16.msra.mxu0 %v3769
    %5658 = vmatpush.bf16.msra.mxu0 %v3765
    %5659 = vmatpush.bf16.msra.mxu0 %v3761
    %5660 = vmatpush.bf16.msra.mxu0 %v3757
    %5661 = vmatpush.bf16.msra.mxu0 %v3753
    %5662 = vmatpush.bf16.msra.mxu0 %v3749
    %5663 = vmatpush.bf16.msra.mxu0 %v3745
    %5664 = vmatmul.bf16.gmra.mxu0 %v988
    %v5665 = vpop.f32.mrf.mxu0
    %v5666 = vadd.f32 %v5653, %v5665
    %v5667 = vpop.f32.mrf.mxu0
    %5668 = vdwg.mxu0
    %5669 = vmatpush.bf16.msra.mxu0 %v3805
    %5670 = vmatpush.bf16.msra.mxu0 %v3801
    %5671 = vmatpush.bf16.msra.mxu0 %v3797
    %5672 = vmatpush.bf16.msra.mxu0 %v3793
    %5673 = vmatpush.bf16.msra.mxu0 %v3789
    %5674 = vmatpush.bf16.msra.mxu0 %v3785
    %5675 = vmatpush.bf16.msra.mxu0 %v3781
    %5676 = vmatpush.bf16.msra.mxu0 %v3777
    %5677 = vmatmul.bf16.gmra.mxu0 %v989
    %v5678 = vpop.f32.mrf.mxu0
    %v5679 = vadd.f32 %v5666, %v5678
    %v5680 = vpop.f32.mrf.mxu0
    %5681 = vdwg.mxu0
    %5682 = vmatpush.bf16.msra.mxu0 %v3837
    %5683 = vmatpush.bf16.msra.mxu0 %v3833
    %5684 = vmatpush.bf16.msra.mxu0 %v3829
    %5685 = vmatpush.bf16.msra.mxu0 %v3825
    %5686 = vmatpush.bf16.msra.mxu0 %v3821
    %5687 = vmatpush.bf16.msra.mxu0 %v3817
    %5688 = vmatpush.bf16.msra.mxu0 %v3813
    %5689 = vmatpush.bf16.msra.mxu0 %v3809
    %5690 = vmatmul.bf16.gmra.mxu0 %v990
    %v5691 = vpop.f32.mrf.mxu0
    %v5692 = vadd.f32 %v5679, %v5691
    %v5693 = vpop.f32.mrf.mxu0
    %5694 = vdwg.mxu0
    %5695 = vmatpush.bf16.msra.mxu0 %v3869
    %5696 = vmatpush.bf16.msra.mxu0 %v3865
    %5697 = vmatpush.bf16.msra.mxu0 %v3861
    %5698 = vmatpush.bf16.msra.mxu0 %v3857
    %5699 = vmatpush.bf16.msra.mxu0 %v3853
    %5700 = vmatpush.bf16.msra.mxu0 %v3849
    %5701 = vmatpush.bf16.msra.mxu0 %v3845
    %5702 = vmatpush.bf16.msra.mxu0 %v3841
    %5703 = vmatmul.bf16.gmra.mxu0 %v991
    %v5704 = vpop.f32.mrf.mxu0
    %v5705 = vadd.f32 %v5692, %v5704
    %v5706 = vpop.f32.mrf.mxu0
    %5707 = vdwg.mxu0
    %5708 = vmatpush.bf16.msra.mxu0 %v3901
    %5709 = vmatpush.bf16.msra.mxu0 %v3897
    %5710 = vmatpush.bf16.msra.mxu0 %v3893
    %5711 = vmatpush.bf16.msra.mxu0 %v3889
    %5712 = vmatpush.bf16.msra.mxu0 %v3885
    %5713 = vmatpush.bf16.msra.mxu0 %v3881
    %5714 = vmatpush.bf16.msra.mxu0 %v3877
    %5715 = vmatpush.bf16.msra.mxu0 %v3873
    %5716 = vmatmul.bf16.gmra.mxu0 %v992
    %v5717 = vpop.f32.mrf.mxu0
    %v5718 = vadd.f32 %v5705, %v5717
    %v5719 = vpop.f32.mrf.mxu0
    %5720 = vdwg.mxu0
    %5721 = vmatpush.bf16.msra.mxu0 %v3933
    %5722 = vmatpush.bf16.msra.mxu0 %v3929
    %5723 = vmatpush.bf16.msra.mxu0 %v3925
    %5724 = vmatpush.bf16.msra.mxu0 %v3921
    %5725 = vmatpush.bf16.msra.mxu0 %v3917
    %5726 = vmatpush.bf16.msra.mxu0 %v3913
    %5727 = vmatpush.bf16.msra.mxu0 %v3909
    %5728 = vmatpush.bf16.msra.mxu0 %v3905
    %5729 = vmatmul.bf16.gmra.mxu0 %v993
    %v5730 = vpop.f32.mrf.mxu0
    %v5731 = vadd.f32 %v5718, %v5730
    %v5732 = vpop.f32.mrf.mxu0
    %5733 = vdwg.mxu0
    %5734 = vmatpush.bf16.msra.mxu0 %v3965
    %5735 = vmatpush.bf16.msra.mxu0 %v3961
    %5736 = vmatpush.bf16.msra.mxu0 %v3957
    %5737 = vmatpush.bf16.msra.mxu0 %v3953
    %5738 = vmatpush.bf16.msra.mxu0 %v3949
    %5739 = vmatpush.bf16.msra.mxu0 %v3945
    %5740 = vmatpush.bf16.msra.mxu0 %v3941
    %5741 = vmatpush.bf16.msra.mxu0 %v3937
    %5742 = vmatmul.bf16.gmra.mxu0 %v994
    %v5743 = vpop.f32.mrf.mxu0
    %v5744 = vadd.f32 %v5731, %v5743
    %v5745 = vpop.f32.mrf.mxu0
    %5746 = vdwg.mxu0
    %5747 = vmatpush.bf16.msra.mxu0 %v3997
    %5748 = vmatpush.bf16.msra.mxu0 %v3993
    %5749 = vmatpush.bf16.msra.mxu0 %v3989
    %5750 = vmatpush.bf16.msra.mxu0 %v3985
    %5751 = vmatpush.bf16.msra.mxu0 %v3981
    %5752 = vmatpush.bf16.msra.mxu0 %v3977
    %5753 = vmatpush.bf16.msra.mxu0 %v3973
    %5754 = vmatpush.bf16.msra.mxu0 %v3969
    %5755 = vmatmul.bf16.gmra.mxu0 %v995
    %v5756 = vpop.f32.mrf.mxu0
    %v5757 = vadd.f32 %v5744, %v5756
    %v5758 = vpop.f32.mrf.mxu0
    %5759 = vdwg.mxu0
    %5760 = vmatpush.bf16.msra.mxu0 %v4029
    %5761 = vmatpush.bf16.msra.mxu0 %v4025
    %5762 = vmatpush.bf16.msra.mxu0 %v4021
    %5763 = vmatpush.bf16.msra.mxu0 %v4017
    %5764 = vmatpush.bf16.msra.mxu0 %v4013
    %5765 = vmatpush.bf16.msra.mxu0 %v4009
    %5766 = vmatpush.bf16.msra.mxu0 %v4005
    %5767 = vmatpush.bf16.msra.mxu0 %v4001
    %5768 = vmatmul.bf16.gmra.mxu0 %v996
    %v5769 = vpop.f32.mrf.mxu0
    %v5770 = vadd.f32 %v5757, %v5769
    %v5771 = vpop.f32.mrf.mxu0
    %5772 = vdwg.mxu0
    %5773 = vmatpush.bf16.msra.mxu0 %v4061
    %5774 = vmatpush.bf16.msra.mxu0 %v4057
    %5775 = vmatpush.bf16.msra.mxu0 %v4053
    %5776 = vmatpush.bf16.msra.mxu0 %v4049
    %5777 = vmatpush.bf16.msra.mxu0 %v4045
    %5778 = vmatpush.bf16.msra.mxu0 %v4041
    %5779 = vmatpush.bf16.msra.mxu0 %v4037
    %5780 = vmatpush.bf16.msra.mxu0 %v4033
    %5781 = vmatmul.bf16.gmra.mxu0 %v997
    %v5782 = vpop.f32.mrf.mxu0
    %v5783 = vadd.f32 %v5770, %v5782
    %v5784 = vpop.f32.mrf.mxu0
    %5785 = vdwg.mxu0
    %5786 = vmatpush.bf16.msra.mxu0 %v4093
    %5787 = vmatpush.bf16.msra.mxu0 %v4089
    %5788 = vmatpush.bf16.msra.mxu0 %v4085
    %5789 = vmatpush.bf16.msra.mxu0 %v4081
    %5790 = vmatpush.bf16.msra.mxu0 %v4077
    %5791 = vmatpush.bf16.msra.mxu0 %v4073
    %5792 = vmatpush.bf16.msra.mxu0 %v4069
    %5793 = vmatpush.bf16.msra.mxu0 %v4065
    %5794 = vmatmul.bf16.gmra.mxu0 %v998
    %v5795 = vpop.f32.mrf.mxu0
    %v5796 = vadd.f32 %v5783, %v5795
    %v5797 = vpop.f32.mrf.mxu0
    %5798 = vdwg.mxu0
    %5799 = vmatpush.bf16.msra.mxu0 %v3358
    %5800 = vmatpush.bf16.msra.mxu0 %v3354
    %5801 = vmatpush.bf16.msra.mxu0 %v3350
    %5802 = vmatpush.bf16.msra.mxu0 %v3346
    %5803 = vmatpush.bf16.msra.mxu0 %v3342
    %5804 = vmatpush.bf16.msra.mxu0 %v3338
    %5805 = vmatpush.bf16.msra.mxu0 %v3334
    %5806 = vmatpush.bf16.msra.mxu0 %v3330
    %5807 = vmatmul.bf16.gmra.mxu0 %v975
    %v5808 = vpop.f32.mrf.mxu0
    %v5809 = vadd.f32 %v934, %v5808
    %v5810 = vpop.f32.mrf.mxu0
    %5811 = vdwg.mxu0
    %5812 = vmatpush.bf16.msra.mxu0 %v3390
    %5813 = vmatpush.bf16.msra.mxu0 %v3386
    %5814 = vmatpush.bf16.msra.mxu0 %v3382
    %5815 = vmatpush.bf16.msra.mxu0 %v3378
    %5816 = vmatpush.bf16.msra.mxu0 %v3374
    %5817 = vmatpush.bf16.msra.mxu0 %v3370
    %5818 = vmatpush.bf16.msra.mxu0 %v3366
    %5819 = vmatpush.bf16.msra.mxu0 %v3362
    %5820 = vmatmul.bf16.gmra.mxu0 %v976
    %v5821 = vpop.f32.mrf.mxu0
    %v5822 = vadd.f32 %v5809, %v5821
    %v5823 = vpop.f32.mrf.mxu0
    %5824 = vdwg.mxu0
    %5825 = vmatpush.bf16.msra.mxu0 %v3422
    %5826 = vmatpush.bf16.msra.mxu0 %v3418
    %5827 = vmatpush.bf16.msra.mxu0 %v3414
    %5828 = vmatpush.bf16.msra.mxu0 %v3410
    %5829 = vmatpush.bf16.msra.mxu0 %v3406
    %5830 = vmatpush.bf16.msra.mxu0 %v3402
    %5831 = vmatpush.bf16.msra.mxu0 %v3398
    %5832 = vmatpush.bf16.msra.mxu0 %v3394
    %5833 = vmatmul.bf16.gmra.mxu0 %v977
    %v5834 = vpop.f32.mrf.mxu0
    %v5835 = vadd.f32 %v5822, %v5834
    %v5836 = vpop.f32.mrf.mxu0
    %5837 = vdwg.mxu0
    %5838 = vmatpush.bf16.msra.mxu0 %v3454
    %5839 = vmatpush.bf16.msra.mxu0 %v3450
    %5840 = vmatpush.bf16.msra.mxu0 %v3446
    %5841 = vmatpush.bf16.msra.mxu0 %v3442
    %5842 = vmatpush.bf16.msra.mxu0 %v3438
    %5843 = vmatpush.bf16.msra.mxu0 %v3434
    %5844 = vmatpush.bf16.msra.mxu0 %v3430
    %5845 = vmatpush.bf16.msra.mxu0 %v3426
    %5846 = vmatmul.bf16.gmra.mxu0 %v978
    %v5847 = vpop.f32.mrf.mxu0
    %v5848 = vadd.f32 %v5835, %v5847
    %v5849 = vpop.f32.mrf.mxu0
    %5850 = vdwg.mxu0
    %5851 = vmatpush.bf16.msra.mxu0 %v3486
    %5852 = vmatpush.bf16.msra.mxu0 %v3482
    %5853 = vmatpush.bf16.msra.mxu0 %v3478
    %5854 = vmatpush.bf16.msra.mxu0 %v3474
    %5855 = vmatpush.bf16.msra.mxu0 %v3470
    %5856 = vmatpush.bf16.msra.mxu0 %v3466
    %5857 = vmatpush.bf16.msra.mxu0 %v3462
    %5858 = vmatpush.bf16.msra.mxu0 %v3458
    %5859 = vmatmul.bf16.gmra.mxu0 %v979
    %v5860 = vpop.f32.mrf.mxu0
    %v5861 = vadd.f32 %v5848, %v5860
    %v5862 = vpop.f32.mrf.mxu0
    %5863 = vdwg.mxu0
    %5864 = vmatpush.bf16.msra.mxu0 %v3518
    %5865 = vmatpush.bf16.msra.mxu0 %v3514
    %5866 = vmatpush.bf16.msra.mxu0 %v3510
    %5867 = vmatpush.bf16.msra.mxu0 %v3506
    %5868 = vmatpush.bf16.msra.mxu0 %v3502
    %5869 = vmatpush.bf16.msra.mxu0 %v3498
    %5870 = vmatpush.bf16.msra.mxu0 %v3494
    %5871 = vmatpush.bf16.msra.mxu0 %v3490
    %5872 = vmatmul.bf16.gmra.mxu0 %v980
    %v5873 = vpop.f32.mrf.mxu0
    %v5874 = vadd.f32 %v5861, %v5873
    %v5875 = vpop.f32.mrf.mxu0
    %5876 = vdwg.mxu0
    %5877 = vmatpush.bf16.msra.mxu0 %v3550
    %5878 = vmatpush.bf16.msra.mxu0 %v3546
    %5879 = vmatpush.bf16.msra.mxu0 %v3542
    %5880 = vmatpush.bf16.msra.mxu0 %v3538
    %5881 = vmatpush.bf16.msra.mxu0 %v3534
    %5882 = vmatpush.bf16.msra.mxu0 %v3530
    %5883 = vmatpush.bf16.msra.mxu0 %v3526
    %5884 = vmatpush.bf16.msra.mxu0 %v3522
    %5885 = vmatmul.bf16.gmra.mxu0 %v981
    %v5886 = vpop.f32.mrf.mxu0
    %v5887 = vadd.f32 %v5874, %v5886
    %v5888 = vpop.f32.mrf.mxu0
    %5889 = vdwg.mxu0
    %5890 = vmatpush.bf16.msra.mxu0 %v3582
    %5891 = vmatpush.bf16.msra.mxu0 %v3578
    %5892 = vmatpush.bf16.msra.mxu0 %v3574
    %5893 = vmatpush.bf16.msra.mxu0 %v3570
    %5894 = vmatpush.bf16.msra.mxu0 %v3566
    %5895 = vmatpush.bf16.msra.mxu0 %v3562
    %5896 = vmatpush.bf16.msra.mxu0 %v3558
    %5897 = vmatpush.bf16.msra.mxu0 %v3554
    %5898 = vmatmul.bf16.gmra.mxu0 %v982
    %v5899 = vpop.f32.mrf.mxu0
    %v5900 = vadd.f32 %v5887, %v5899
    %v5901 = vpop.f32.mrf.mxu0
    %5902 = vdwg.mxu0
    %5903 = vmatpush.bf16.msra.mxu0 %v3614
    %5904 = vmatpush.bf16.msra.mxu0 %v3610
    %5905 = vmatpush.bf16.msra.mxu0 %v3606
    %5906 = vmatpush.bf16.msra.mxu0 %v3602
    %5907 = vmatpush.bf16.msra.mxu0 %v3598
    %5908 = vmatpush.bf16.msra.mxu0 %v3594
    %5909 = vmatpush.bf16.msra.mxu0 %v3590
    %5910 = vmatpush.bf16.msra.mxu0 %v3586
    %5911 = vmatmul.bf16.gmra.mxu0 %v983
    %v5912 = vpop.f32.mrf.mxu0
    %v5913 = vadd.f32 %v5900, %v5912
    %v5914 = vpop.f32.mrf.mxu0
    %5915 = vdwg.mxu0
    %5916 = vmatpush.bf16.msra.mxu0 %v3646
    %5917 = vmatpush.bf16.msra.mxu0 %v3642
    %5918 = vmatpush.bf16.msra.mxu0 %v3638
    %5919 = vmatpush.bf16.msra.mxu0 %v3634
    %5920 = vmatpush.bf16.msra.mxu0 %v3630
    %5921 = vmatpush.bf16.msra.mxu0 %v3626
    %5922 = vmatpush.bf16.msra.mxu0 %v3622
    %5923 = vmatpush.bf16.msra.mxu0 %v3618
    %5924 = vmatmul.bf16.gmra.mxu0 %v984
    %v5925 = vpop.f32.mrf.mxu0
    %v5926 = vadd.f32 %v5913, %v5925
    %v5927 = vpop.f32.mrf.mxu0
    %5928 = vdwg.mxu0
    %5929 = vmatpush.bf16.msra.mxu0 %v3678
    %5930 = vmatpush.bf16.msra.mxu0 %v3674
    %5931 = vmatpush.bf16.msra.mxu0 %v3670
    %5932 = vmatpush.bf16.msra.mxu0 %v3666
    %5933 = vmatpush.bf16.msra.mxu0 %v3662
    %5934 = vmatpush.bf16.msra.mxu0 %v3658
    %5935 = vmatpush.bf16.msra.mxu0 %v3654
    %5936 = vmatpush.bf16.msra.mxu0 %v3650
    %5937 = vmatmul.bf16.gmra.mxu0 %v985
    %v5938 = vpop.f32.mrf.mxu0
    %v5939 = vadd.f32 %v5926, %v5938
    %v5940 = vpop.f32.mrf.mxu0
    %5941 = vdwg.mxu0
    %5942 = vmatpush.bf16.msra.mxu0 %v3710
    %5943 = vmatpush.bf16.msra.mxu0 %v3706
    %5944 = vmatpush.bf16.msra.mxu0 %v3702
    %5945 = vmatpush.bf16.msra.mxu0 %v3698
    %5946 = vmatpush.bf16.msra.mxu0 %v3694
    %5947 = vmatpush.bf16.msra.mxu0 %v3690
    %5948 = vmatpush.bf16.msra.mxu0 %v3686
    %5949 = vmatpush.bf16.msra.mxu0 %v3682
    %5950 = vmatmul.bf16.gmra.mxu0 %v986
    %v5951 = vpop.f32.mrf.mxu0
    %v5952 = vadd.f32 %v5939, %v5951
    %v5953 = vpop.f32.mrf.mxu0
    %5954 = vdwg.mxu0
    %5955 = vmatpush.bf16.msra.mxu0 %v3742
    %5956 = vmatpush.bf16.msra.mxu0 %v3738
    %5957 = vmatpush.bf16.msra.mxu0 %v3734
    %5958 = vmatpush.bf16.msra.mxu0 %v3730
    %5959 = vmatpush.bf16.msra.mxu0 %v3726
    %5960 = vmatpush.bf16.msra.mxu0 %v3722
    %5961 = vmatpush.bf16.msra.mxu0 %v3718
    %5962 = vmatpush.bf16.msra.mxu0 %v3714
    %5963 = vmatmul.bf16.gmra.mxu0 %v987
    %v5964 = vpop.f32.mrf.mxu0
    %v5965 = vadd.f32 %v5952, %v5964
    %v5966 = vpop.f32.mrf.mxu0
    %5967 = vdwg.mxu0
    %5968 = vmatpush.bf16.msra.mxu0 %v3774
    %5969 = vmatpush.bf16.msra.mxu0 %v3770
    %5970 = vmatpush.bf16.msra.mxu0 %v3766
    %5971 = vmatpush.bf16.msra.mxu0 %v3762
    %5972 = vmatpush.bf16.msra.mxu0 %v3758
    %5973 = vmatpush.bf16.msra.mxu0 %v3754
    %5974 = vmatpush.bf16.msra.mxu0 %v3750
    %5975 = vmatpush.bf16.msra.mxu0 %v3746
    %5976 = vmatmul.bf16.gmra.mxu0 %v988
    %v5977 = vpop.f32.mrf.mxu0
    %v5978 = vadd.f32 %v5965, %v5977
    %v5979 = vpop.f32.mrf.mxu0
    %5980 = vdwg.mxu0
    %5981 = vmatpush.bf16.msra.mxu0 %v3806
    %5982 = vmatpush.bf16.msra.mxu0 %v3802
    %5983 = vmatpush.bf16.msra.mxu0 %v3798
    %5984 = vmatpush.bf16.msra.mxu0 %v3794
    %5985 = vmatpush.bf16.msra.mxu0 %v3790
    %5986 = vmatpush.bf16.msra.mxu0 %v3786
    %5987 = vmatpush.bf16.msra.mxu0 %v3782
    %5988 = vmatpush.bf16.msra.mxu0 %v3778
    %5989 = vmatmul.bf16.gmra.mxu0 %v989
    %v5990 = vpop.f32.mrf.mxu0
    %v5991 = vadd.f32 %v5978, %v5990
    %v5992 = vpop.f32.mrf.mxu0
    %5993 = vdwg.mxu0
    %5994 = vmatpush.bf16.msra.mxu0 %v3838
    %5995 = vmatpush.bf16.msra.mxu0 %v3834
    %5996 = vmatpush.bf16.msra.mxu0 %v3830
    %5997 = vmatpush.bf16.msra.mxu0 %v3826
    %5998 = vmatpush.bf16.msra.mxu0 %v3822
    %5999 = vmatpush.bf16.msra.mxu0 %v3818
    %6000 = vmatpush.bf16.msra.mxu0 %v3814
    %6001 = vmatpush.bf16.msra.mxu0 %v3810
    %6002 = vmatmul.bf16.gmra.mxu0 %v990
    %v6003 = vpop.f32.mrf.mxu0
    %v6004 = vadd.f32 %v5991, %v6003
    %v6005 = vpop.f32.mrf.mxu0
    %6006 = vdwg.mxu0
    %6007 = vmatpush.bf16.msra.mxu0 %v3870
    %6008 = vmatpush.bf16.msra.mxu0 %v3866
    %6009 = vmatpush.bf16.msra.mxu0 %v3862
    %6010 = vmatpush.bf16.msra.mxu0 %v3858
    %6011 = vmatpush.bf16.msra.mxu0 %v3854
    %6012 = vmatpush.bf16.msra.mxu0 %v3850
    %6013 = vmatpush.bf16.msra.mxu0 %v3846
    %6014 = vmatpush.bf16.msra.mxu0 %v3842
    %6015 = vmatmul.bf16.gmra.mxu0 %v991
    %v6016 = vpop.f32.mrf.mxu0
    %v6017 = vadd.f32 %v6004, %v6016
    %v6018 = vpop.f32.mrf.mxu0
    %6019 = vdwg.mxu0
    %6020 = vmatpush.bf16.msra.mxu0 %v3902
    %6021 = vmatpush.bf16.msra.mxu0 %v3898
    %6022 = vmatpush.bf16.msra.mxu0 %v3894
    %6023 = vmatpush.bf16.msra.mxu0 %v3890
    %6024 = vmatpush.bf16.msra.mxu0 %v3886
    %6025 = vmatpush.bf16.msra.mxu0 %v3882
    %6026 = vmatpush.bf16.msra.mxu0 %v3878
    %6027 = vmatpush.bf16.msra.mxu0 %v3874
    %6028 = vmatmul.bf16.gmra.mxu0 %v992
    %v6029 = vpop.f32.mrf.mxu0
    %v6030 = vadd.f32 %v6017, %v6029
    %v6031 = vpop.f32.mrf.mxu0
    %6032 = vdwg.mxu0
    %6033 = vmatpush.bf16.msra.mxu0 %v3934
    %6034 = vmatpush.bf16.msra.mxu0 %v3930
    %6035 = vmatpush.bf16.msra.mxu0 %v3926
    %6036 = vmatpush.bf16.msra.mxu0 %v3922
    %6037 = vmatpush.bf16.msra.mxu0 %v3918
    %6038 = vmatpush.bf16.msra.mxu0 %v3914
    %6039 = vmatpush.bf16.msra.mxu0 %v3910
    %6040 = vmatpush.bf16.msra.mxu0 %v3906
    %6041 = vmatmul.bf16.gmra.mxu0 %v993
    %v6042 = vpop.f32.mrf.mxu0
    %v6043 = vadd.f32 %v6030, %v6042
    %v6044 = vpop.f32.mrf.mxu0
    %6045 = vdwg.mxu0
    %6046 = vmatpush.bf16.msra.mxu0 %v3966
    %6047 = vmatpush.bf16.msra.mxu0 %v3962
    %6048 = vmatpush.bf16.msra.mxu0 %v3958
    %6049 = vmatpush.bf16.msra.mxu0 %v3954
    %6050 = vmatpush.bf16.msra.mxu0 %v3950
    %6051 = vmatpush.bf16.msra.mxu0 %v3946
    %6052 = vmatpush.bf16.msra.mxu0 %v3942
    %6053 = vmatpush.bf16.msra.mxu0 %v3938
    %6054 = vmatmul.bf16.gmra.mxu0 %v994
    %v6055 = vpop.f32.mrf.mxu0
    %v6056 = vadd.f32 %v6043, %v6055
    %v6057 = vpop.f32.mrf.mxu0
    %6058 = vdwg.mxu0
    %6059 = vmatpush.bf16.msra.mxu0 %v3998
    %6060 = vmatpush.bf16.msra.mxu0 %v3994
    %6061 = vmatpush.bf16.msra.mxu0 %v3990
    %6062 = vmatpush.bf16.msra.mxu0 %v3986
    %6063 = vmatpush.bf16.msra.mxu0 %v3982
    %6064 = vmatpush.bf16.msra.mxu0 %v3978
    %6065 = vmatpush.bf16.msra.mxu0 %v3974
    %6066 = vmatpush.bf16.msra.mxu0 %v3970
    %6067 = vmatmul.bf16.gmra.mxu0 %v995
    %v6068 = vpop.f32.mrf.mxu0
    %v6069 = vadd.f32 %v6056, %v6068
    %v6070 = vpop.f32.mrf.mxu0
    %6071 = vdwg.mxu0
    %6072 = vmatpush.bf16.msra.mxu0 %v4030
    %6073 = vmatpush.bf16.msra.mxu0 %v4026
    %6074 = vmatpush.bf16.msra.mxu0 %v4022
    %6075 = vmatpush.bf16.msra.mxu0 %v4018
    %6076 = vmatpush.bf16.msra.mxu0 %v4014
    %6077 = vmatpush.bf16.msra.mxu0 %v4010
    %6078 = vmatpush.bf16.msra.mxu0 %v4006
    %6079 = vmatpush.bf16.msra.mxu0 %v4002
    %6080 = vmatmul.bf16.gmra.mxu0 %v996
    %v6081 = vpop.f32.mrf.mxu0
    %v6082 = vadd.f32 %v6069, %v6081
    %v6083 = vpop.f32.mrf.mxu0
    %6084 = vdwg.mxu0
    %6085 = vmatpush.bf16.msra.mxu0 %v4062
    %6086 = vmatpush.bf16.msra.mxu0 %v4058
    %6087 = vmatpush.bf16.msra.mxu0 %v4054
    %6088 = vmatpush.bf16.msra.mxu0 %v4050
    %6089 = vmatpush.bf16.msra.mxu0 %v4046
    %6090 = vmatpush.bf16.msra.mxu0 %v4042
    %6091 = vmatpush.bf16.msra.mxu0 %v4038
    %6092 = vmatpush.bf16.msra.mxu0 %v4034
    %6093 = vmatmul.bf16.gmra.mxu0 %v997
    %v6094 = vpop.f32.mrf.mxu0
    %v6095 = vadd.f32 %v6082, %v6094
    %v6096 = vpop.f32.mrf.mxu0
    %6097 = vdwg.mxu0
    %6098 = vmatpush.bf16.msra.mxu0 %v4094
    %6099 = vmatpush.bf16.msra.mxu0 %v4090
    %6100 = vmatpush.bf16.msra.mxu0 %v4086
    %6101 = vmatpush.bf16.msra.mxu0 %v4082
    %6102 = vmatpush.bf16.msra.mxu0 %v4078
    %6103 = vmatpush.bf16.msra.mxu0 %v4074
    %6104 = vmatpush.bf16.msra.mxu0 %v4070
    %6105 = vmatpush.bf16.msra.mxu0 %v4066
    %6106 = vmatmul.bf16.gmra.mxu0 %v998
    %v6107 = vpop.f32.mrf.mxu0
    %v6108 = vadd.f32 %v6095, %v6107
    %v6109 = vpop.f32.mrf.mxu0
    %6110 = vdwg.mxu0
    %v6111 = vmax.f32 %v5172, 0.0
    %v6112 = vmax.f32 %v5484, 0.0
    %v6113 = vmax.f32 %v5796, 0.0
    %v6114 = vmax.f32 %v6108, 0.0
    %v6115 = vpack.c.bf16 %v6111, %v6111
    %v6116 = vpack.c.bf16 %v6112, %v6112
    %v6117 = vpack.c.bf16 %v6113, %v6113
    %v6118 = vpack.c.bf16 %v6114, %v6114
    %v6119 = vld [vmem:[#allocation6] sm:$0xf]
    %v6120 = vld [vmem:[#allocation6 + $0x4] sm:$0xf]
    %v6121 = vld [vmem:[#allocation6 + $0x8] sm:$0xf]
    %v6122 = vld [vmem:[#allocation6 + $0xc] sm:$0xf]
    %v6123 = vld [vmem:[#allocation6 + $0x10] sm:$0xf]
    %v6124 = vld [vmem:[#allocation6 + $0x14] sm:$0xf]
    %v6125 = vld [vmem:[#allocation6 + $0x18] sm:$0xf]
    %v6126 = vld [vmem:[#allocation6 + $0x1c] sm:$0xf]
    %v6127 = vld [vmem:[#allocation6 + $0x20] sm:$0xf]
    %v6128 = vld [vmem:[#allocation6 + $0x24] sm:$0xf]
    %v6129 = vld [vmem:[#allocation6 + $0x28] sm:$0xf]
    %v6130 = vld [vmem:[#allocation6 + $0x2c] sm:$0xf]
    %v6131 = vld [vmem:[#allocation6 + $0x30] sm:$0xf]
    %v6132 = vld [vmem:[#allocation6 + $0x34] sm:$0xf]
    %v6133 = vld [vmem:[#allocation6 + $0x38] sm:$0xf]
    %v6134 = vld [vmem:[#allocation6 + $0x3c] sm:$0xf]
    %v6135 = vld [vmem:[#allocation6 + $0x40] sm:$0xf]
    %v6136 = vld [vmem:[#allocation6 + $0x44] sm:$0xf]
    %v6137 = vld [vmem:[#allocation6 + $0x48] sm:$0xf]
    %v6138 = vld [vmem:[#allocation6 + $0x4c] sm:$0xf]
    %v6139 = vld [vmem:[#allocation6 + $0x50] sm:$0xf]
    %v6140 = vld [vmem:[#allocation6 + $0x54] sm:$0xf]
    %v6141 = vld [vmem:[#allocation6 + $0x58] sm:$0xf]
    %v6142 = vld [vmem:[#allocation6 + $0x5c] sm:$0xf]
    %v6143 = vld [vmem:[#allocation6 + $0x60] sm:$0xf]
    %v6144 = vld [vmem:[#allocation6 + $0x64] sm:$0xf]
    %v6145 = vld [vmem:[#allocation6 + $0x68] sm:$0xf]
    %v6146 = vld [vmem:[#allocation6 + $0x6c] sm:$0xf]
    %v6147 = vld [vmem:[#allocation6 + $0x70] sm:$0xf]
    %v6148 = vld [vmem:[#allocation6 + $0x74] sm:$0xf]
    %v6149 = vld [vmem:[#allocation6 + $0x78] sm:$0xf]
    %v6150 = vld [vmem:[#allocation6 + $0x7c] sm:$0xf]
    %v6151 = vld [vmem:[#allocation6 + $0x80] sm:$0xf]
    %v6152 = vld [vmem:[#allocation6 + $0x84] sm:$0xf]
    %v6153 = vld [vmem:[#allocation6 + $0x88] sm:$0xf]
    %v6154 = vld [vmem:[#allocation6 + $0x8c] sm:$0xf]
    %v6155 = vld [vmem:[#allocation6 + $0x90] sm:$0xf]
    %v6156 = vld [vmem:[#allocation6 + $0x94] sm:$0xf]
    %v6157 = vld [vmem:[#allocation6 + $0x98] sm:$0xf]
    %v6158 = vld [vmem:[#allocation6 + $0x9c] sm:$0xf]
    %v6159 = vld [vmem:[#allocation6 + $0xa0] sm:$0xf]
    %v6160 = vld [vmem:[#allocation6 + $0xa4] sm:$0xf]
    %v6161 = vld [vmem:[#allocation6 + $0xa8] sm:$0xf]
    %v6162 = vld [vmem:[#allocation6 + $0xac] sm:$0xf]
    %v6163 = vld [vmem:[#allocation6 + $0xb0] sm:$0xf]
    %v6164 = vld [vmem:[#allocation6 + $0xb4] sm:$0xf]
    %v6165 = vld [vmem:[#allocation6 + $0xb8] sm:$0xf]
    %v6166 = vld [vmem:[#allocation6 + $0xbc] sm:$0xf]
    %v6167 = vld [vmem:[#allocation6 + $0xc0] sm:$0xf]
    %v6168 = vld [vmem:[#allocation6 + $0xc4] sm:$0xf]
    %v6169 = vld [vmem:[#allocation6 + $0xc8] sm:$0xf]
    %v6170 = vld [vmem:[#allocation6 + $0xcc] sm:$0xf]
    %v6171 = vld [vmem:[#allocation6 + $0xd0] sm:$0xf]
    %v6172 = vld [vmem:[#allocation6 + $0xd4] sm:$0xf]
    %v6173 = vld [vmem:[#allocation6 + $0xd8] sm:$0xf]
    %v6174 = vld [vmem:[#allocation6 + $0xdc] sm:$0xf]
    %v6175 = vld [vmem:[#allocation6 + $0xe0] sm:$0xf]
    %v6176 = vld [vmem:[#allocation6 + $0xe4] sm:$0xf]
    %v6177 = vld [vmem:[#allocation6 + $0xe8] sm:$0xf]
    %v6178 = vld [vmem:[#allocation6 + $0xec] sm:$0xf]
    %v6179 = vld [vmem:[#allocation6 + $0xf0] sm:$0xf]
    %v6180 = vld [vmem:[#allocation6 + $0xf4] sm:$0xf]
    %v6181 = vld [vmem:[#allocation6 + $0xf8] sm:$0xf]
    %v6182 = vld [vmem:[#allocation6 + $0xfc] sm:$0xf]
    %v6183 = vld [vmem:[#allocation7] sm:$0x1]
    %v6185 = vperm.slane %v6183, 0
    %v6251 = vunpack.c.l.b16 %v6119
    %v6252 = vunpack.c.l.b16 %v6120
    %v6253 = vunpack.c.l.b16 %v6121
    %v6254 = vunpack.c.l.b16 %v6122
    %v6255 = vunpack.c.l.b16 %v6123
    %v6256 = vunpack.c.l.b16 %v6124
    %v6257 = vunpack.c.l.b16 %v6125
    %v6258 = vunpack.c.l.b16 %v6126
    %v6259 = vunpack.c.l.b16 %v6127
    %v6260 = vunpack.c.l.b16 %v6128
    %v6261 = vunpack.c.l.b16 %v6129
    %v6262 = vunpack.c.l.b16 %v6130
    %v6263 = vunpack.c.l.b16 %v6131
    %v6264 = vunpack.c.l.b16 %v6132
    %v6265 = vunpack.c.l.b16 %v6133
    %v6266 = vunpack.c.l.b16 %v6134
    %v6267 = vunpack.c.l.b16 %v6135
    %v6268 = vunpack.c.l.b16 %v6136
    %v6269 = vunpack.c.l.b16 %v6137
    %v6270 = vunpack.c.l.b16 %v6138
    %v6271 = vunpack.c.l.b16 %v6139
    %v6272 = vunpack.c.l.b16 %v6140
    %v6273 = vunpack.c.l.b16 %v6141
    %v6274 = vunpack.c.l.b16 %v6142
    %v6275 = vunpack.c.l.b16 %v6143
    %v6276 = vunpack.c.l.b16 %v6144
    %v6277 = vunpack.c.l.b16 %v6145
    %v6278 = vunpack.c.l.b16 %v6146
    %v6279 = vunpack.c.l.b16 %v6147
    %v6280 = vunpack.c.l.b16 %v6148
    %v6281 = vunpack.c.l.b16 %v6149
    %v6282 = vunpack.c.l.b16 %v6150
    %v6283 = vunpack.c.l.b16 %v6151
    %v6284 = vunpack.c.l.b16 %v6152
    %v6285 = vunpack.c.l.b16 %v6153
    %v6286 = vunpack.c.l.b16 %v6154
    %v6287 = vunpack.c.l.b16 %v6155
    %v6288 = vunpack.c.l.b16 %v6156
    %v6289 = vunpack.c.l.b16 %v6157
    %v6290 = vunpack.c.l.b16 %v6158
    %v6291 = vunpack.c.l.b16 %v6159
    %v6292 = vunpack.c.l.b16 %v6160
    %v6293 = vunpack.c.l.b16 %v6161
    %v6294 = vunpack.c.l.b16 %v6162
    %v6295 = vunpack.c.l.b16 %v6163
    %v6296 = vunpack.c.l.b16 %v6164
    %v6297 = vunpack.c.l.b16 %v6165
    %v6298 = vunpack.c.l.b16 %v6166
    %v6299 = vunpack.c.l.b16 %v6167
    %v6300 = vunpack.c.l.b16 %v6168
    %v6301 = vunpack.c.l.b16 %v6169
    %v6302 = vunpack.c.l.b16 %v6170
    %v6303 = vunpack.c.l.b16 %v6171
    %v6304 = vunpack.c.l.b16 %v6172
    %v6305 = vunpack.c.l.b16 %v6173
    %v6306 = vunpack.c.l.b16 %v6174
    %v6307 = vunpack.c.l.b16 %v6175
    %v6308 = vunpack.c.l.b16 %v6176
    %v6309 = vunpack.c.l.b16 %v6177
    %v6310 = vunpack.c.l.b16 %v6178
    %v6311 = vunpack.c.l.b16 %v6179
    %v6312 = vunpack.c.l.b16 %v6180
    %v6313 = vunpack.c.l.b16 %v6181
    %v6314 = vunpack.c.l.b16 %v6182
    %v6315 = vpack.c.b16 %v6252, %v6251
    %v6316 = vpack.c.b16 %v6254, %v6253
    %v6317 = vpack.c.b16 %v6256, %v6255
    %v6318 = vpack.c.b16 %v6258, %v6257
    %v6319 = vpack.c.b16 %v6260, %v6259
    %v6320 = vpack.c.b16 %v6262, %v6261
    %v6321 = vpack.c.b16 %v6264, %v6263
    %v6322 = vpack.c.b16 %v6266, %v6265
    %v6323 = vpack.c.b16 %v6268, %v6267
    %v6324 = vpack.c.b16 %v6270, %v6269
    %v6325 = vpack.c.b16 %v6272, %v6271
    %v6326 = vpack.c.b16 %v6274, %v6273
    %v6327 = vpack.c.b16 %v6276, %v6275
    %v6328 = vpack.c.b16 %v6278, %v6277
    %v6329 = vpack.c.b16 %v6280, %v6279
    %v6330 = vpack.c.b16 %v6282, %v6281
    %v6331 = vpack.c.b16 %v6284, %v6283
    %v6332 = vpack.c.b16 %v6286, %v6285
    %v6333 = vpack.c.b16 %v6288, %v6287
    %v6334 = vpack.c.b16 %v6290, %v6289
    %v6335 = vpack.c.b16 %v6292, %v6291
    %v6336 = vpack.c.b16 %v6294, %v6293
    %v6337 = vpack.c.b16 %v6296, %v6295
    %v6338 = vpack.c.b16 %v6298, %v6297
    %v6339 = vpack.c.b16 %v6300, %v6299
    %v6340 = vpack.c.b16 %v6302, %v6301
    %v6341 = vpack.c.b16 %v6304, %v6303
    %v6342 = vpack.c.b16 %v6306, %v6305
    %v6343 = vpack.c.b16 %v6308, %v6307
    %v6344 = vpack.c.b16 %v6310, %v6309
    %v6345 = vpack.c.b16 %v6312, %v6311
    %v6346 = vpack.c.b16 %v6314, %v6313
    %6379 = vmatpush.bf16.msra.mxu0 %v6322
    %6380 = vmatpush.bf16.msra.mxu0 %v6321
    %6381 = vmatpush.bf16.msra.mxu0 %v6320
    %6382 = vmatpush.bf16.msra.mxu0 %v6319
    %6383 = vmatpush.bf16.msra.mxu0 %v6318
    %6384 = vmatpush.bf16.msra.mxu0 %v6317
    %6385 = vmatpush.bf16.msra.mxu0 %v6316
    %6386 = vmatpush.bf16.msra.mxu0 %v6315
    %6387 = vmatmul.bf16.gmra.mxu0 %v6115
    %v6388 = vpop.f32.mrf.mxu0
    %v6389 = vadd.f32 %v6185, %v6388
    %v6390 = vpop.f32.mrf.mxu0
    %6391 = vdwg.mxu0
    %6392 = vmatpush.bf16.msra.mxu0 %v6330
    %6393 = vmatpush.bf16.msra.mxu0 %v6329
    %6394 = vmatpush.bf16.msra.mxu0 %v6328
    %6395 = vmatpush.bf16.msra.mxu0 %v6327
    %6396 = vmatpush.bf16.msra.mxu0 %v6326
    %6397 = vmatpush.bf16.msra.mxu0 %v6325
    %6398 = vmatpush.bf16.msra.mxu0 %v6324
    %6399 = vmatpush.bf16.msra.mxu0 %v6323
    %6400 = vmatmul.bf16.gmra.mxu0 %v6116
    %v6401 = vpop.f32.mrf.mxu0
    %v6402 = vadd.f32 %v6389, %v6401
    %v6403 = vpop.f32.mrf.mxu0
    %6404 = vdwg.mxu0
    %6405 = vmatpush.bf16.msra.mxu0 %v6338
    %6406 = vmatpush.bf16.msra.mxu0 %v6337
    %6407 = vmatpush.bf16.msra.mxu0 %v6336
    %6408 = vmatpush.bf16.msra.mxu0 %v6335
    %6409 = vmatpush.bf16.msra.mxu0 %v6334
    %6410 = vmatpush.bf16.msra.mxu0 %v6333
    %6411 = vmatpush.bf16.msra.mxu0 %v6332
    %6412 = vmatpush.bf16.msra.mxu0 %v6331
    %6413 = vmatmul.bf16.gmra.mxu0 %v6117
    %v6414 = vpop.f32.mrf.mxu0
    %v6415 = vadd.f32 %v6402, %v6414
    %v6416 = vpop.f32.mrf.mxu0
    %6417 = vdwg.mxu0
    %6418 = vmatpush.bf16.msra.mxu0 %v6346
    %6419 = vmatpush.bf16.msra.mxu0 %v6345
    %6420 = vmatpush.bf16.msra.mxu0 %v6344
    %6421 = vmatpush.bf16.msra.mxu0 %v6343
    %6422 = vmatpush.bf16.msra.mxu0 %v6342
    %6423 = vmatpush.bf16.msra.mxu0 %v6341
    %6424 = vmatpush.bf16.msra.mxu0 %v6340
    %6425 = vmatpush.bf16.msra.mxu0 %v6339
    %6426 = vmatmul.bf16.gmra.mxu0 %v6118
    %v6427 = vpop.f32.mrf.mxu0
    %v6428 = vadd.f32 %v6415, %v6427
    %v6429 = vpop.f32.mrf.mxu0
    %6430 = vdwg.mxu0
    %v6431 = vmax.f32 %v6428, 0.0
    %v6432 = vpack.c.bf16 %v6431, %v6431
    %v6433 = vld [vmem:[#allocation9] sm:$0xff]
    %v6434 = vld [vmem:[#allocation9 + $0x8] sm:$0xff]
    %v6435 = vld [vmem:[#allocation9 + $0x10] sm:$0xff]
    %v6436 = vld [vmem:[#allocation9 + $0x18] sm:$0xff]
    %v6437 = vld [vmem:[#allocation9 + $0x20] sm:$0xff]
    %v6438 = vld [vmem:[#allocation9 + $0x28] sm:$0xff]
    %v6439 = vld [vmem:[#allocation9 + $0x30] sm:$0xff]
    %v6440 = vld [vmem:[#allocation9 + $0x38] sm:$0xff]
    %v6441 = vld [vmem:[#allocation9 + $0x40] sm:$0xff]
    %v6442 = vld [vmem:[#allocation9 + $0x48] sm:$0xff]
    %v6443 = vld [vmem:[#allocation9 + $0x50] sm:$0xff]
    %v6444 = vld [vmem:[#allocation9 + $0x58] sm:$0xff]
    %v6445 = vld [vmem:[#allocation9 + $0x60] sm:$0xff]
    %v6446 = vld [vmem:[#allocation9 + $0x68] sm:$0xff]
    %v6447 = vld [vmem:[#allocation9 + $0x70] sm:$0xff]
    %v6448 = vld [vmem:[#allocation9 + $0x78] sm:$0xff]
    %v6449 = vld [vmem:[#allocation9 + $0x80] sm:$0xff]
    %v6450 = vld [vmem:[#allocation9 + $0x88] sm:$0xff]
    %v6451 = vld [vmem:[#allocation9 + $0x90] sm:$0xff]
    %v6452 = vld [vmem:[#allocation9 + $0x98] sm:$0xff]
    %v6453 = vld [vmem:[#allocation9 + $0xa0] sm:$0xff]
    %v6454 = vld [vmem:[#allocation9 + $0xa8] sm:$0xff]
    %v6455 = vld [vmem:[#allocation9 + $0xb0] sm:$0xff]
    %v6456 = vld [vmem:[#allocation9 + $0xb8] sm:$0xff]
    %v6457 = vld [vmem:[#allocation9 + $0xc0] sm:$0xff]
    %v6458 = vld [vmem:[#allocation9 + $0xc8] sm:$0xff]
    %v6459 = vld [vmem:[#allocation9 + $0xd0] sm:$0xff]
    %v6460 = vld [vmem:[#allocation9 + $0xd8] sm:$0xff]
    %v6461 = vld [vmem:[#allocation9 + $0xe0] sm:$0xff]
    %v6462 = vld [vmem:[#allocation9 + $0xe8] sm:$0xff]
    %v6463 = vld [vmem:[#allocation9 + $0xf0] sm:$0xff]
    %v6464 = vld [vmem:[#allocation9 + $0xf8] sm:$0xff]
    %v6465 = vld [vmem:[#allocation10] sm:$0xf]
    %v6467 = vperm.slane %v6465, 0
    %v6468 = vperm.slane %v6465, 1
    %v6469 = vperm.slane %v6465, 2
    %v6470 = vperm.slane %v6465, 3
    %v6507 = vunpack.c.l.b16 %v6433
    %v6508 = vunpack.c.h.b16 %v6433
    %v6509 = vunpack.c.l.b16 %v6434
    %v6510 = vunpack.c.h.b16 %v6434
    %v6511 = vunpack.c.l.b16 %v6435
    %v6512 = vunpack.c.h.b16 %v6435
    %v6513 = vunpack.c.l.b16 %v6436
    %v6514 = vunpack.c.h.b16 %v6436
    %v6515 = vunpack.c.l.b16 %v6437
    %v6516 = vunpack.c.h.b16 %v6437
    %v6517 = vunpack.c.l.b16 %v6438
    %v6518 = vunpack.c.h.b16 %v6438
    %v6519 = vunpack.c.l.b16 %v6439
    %v6520 = vunpack.c.h.b16 %v6439
    %v6521 = vunpack.c.l.b16 %v6440
    %v6522 = vunpack.c.h.b16 %v6440
    %v6523 = vunpack.c.l.b16 %v6441
    %v6524 = vunpack.c.h.b16 %v6441
    %v6525 = vunpack.c.l.b16 %v6442
    %v6526 = vunpack.c.h.b16 %v6442
    %v6527 = vunpack.c.l.b16 %v6443
    %v6528 = vunpack.c.h.b16 %v6443
    %v6529 = vunpack.c.l.b16 %v6444
    %v6530 = vunpack.c.h.b16 %v6444
    %v6531 = vunpack.c.l.b16 %v6445
    %v6532 = vunpack.c.h.b16 %v6445
    %v6533 = vunpack.c.l.b16 %v6446
    %v6534 = vunpack.c.h.b16 %v6446
    %v6535 = vunpack.c.l.b16 %v6447
    %v6536 = vunpack.c.h.b16 %v6447
    %v6537 = vunpack.c.l.b16 %v6448
    %v6538 = vunpack.c.h.b16 %v6448
    %v6539 = vunpack.c.l.b16 %v6449
    %v6540 = vunpack.c.h.b16 %v6449
    %v6541 = vunpack.c.l.b16 %v6450
    %v6542 = vunpack.c.h.b16 %v6450
    %v6543 = vunpack.c.l.b16 %v6451
    %v6544 = vunpack.c.h.b16 %v6451
    %v6545 = vunpack.c.l.b16 %v6452
    %v6546 = vunpack.c.h.b16 %v6452
    %v6547 = vunpack.c.l.b16 %v6453
    %v6548 = vunpack.c.h.b16 %v6453
    %v6549 = vunpack.c.l.b16 %v6454
    %v6550 = vunpack.c.h.b16 %v6454
    %v6551 = vunpack.c.l.b16 %v6455
    %v6552 = vunpack.c.h.b16 %v6455
    %v6553 = vunpack.c.l.b16 %v6456
    %v6554 = vunpack.c.h.b16 %v6456
    %v6555 = vunpack.c.l.b16 %v6457
    %v6556 = vunpack.c.h.b16 %v6457
    %v6557 = vunpack.c.l.b16 %v6458
    %v6558 = vunpack.c.h.b16 %v6458
    %v6559 = vunpack.c.l.b16 %v6459
    %v6560 = vunpack.c.h.b16 %v6459
    %v6561 = vunpack.c.l.b16 %v6460
    %v6562 = vunpack.c.h.b16 %v6460
    %v6563 = vunpack.c.l.b16 %v6461
    %v6564 = vunpack.c.h.b16 %v6461
    %v6565 = vunpack.c.l.b16 %v6462
    %v6566 = vunpack.c.h.b16 %v6462
    %v6567 = vunpack.c.l.b16 %v6463
    %v6568 = vunpack.c.h.b16 %v6463
    %v6569 = vunpack.c.l.b16 %v6464
    %v6570 = vunpack.c.h.b16 %v6464
    %v6571 = vpack.c.b16 %v6511, %v6507
    %v6572 = vpack.c.b16 %v6512, %v6508
    %v6573 = vpack.c.b16 %v6513, %v6509
    %v6574 = vpack.c.b16 %v6514, %v6510
    %v6575 = vpack.c.b16 %v6519, %v6515
    %v6576 = vpack.c.b16 %v6520, %v6516
    %v6577 = vpack.c.b16 %v6521, %v6517
    %v6578 = vpack.c.b16 %v6522, %v6518
    %v6579 = vpack.c.b16 %v6527, %v6523
    %v6580 = vpack.c.b16 %v6528, %v6524
    %v6581 = vpack.c.b16 %v6529, %v6525
    %v6582 = vpack.c.b16 %v6530, %v6526
    %v6583 = vpack.c.b16 %v6535, %v6531
    %v6584 = vpack.c.b16 %v6536, %v6532
    %v6585 = vpack.c.b16 %v6537, %v6533
    %v6586 = vpack.c.b16 %v6538, %v6534
    %v6587 = vpack.c.b16 %v6543, %v6539
    %v6588 = vpack.c.b16 %v6544, %v6540
    %v6589 = vpack.c.b16 %v6545, %v6541
    %v6590 = vpack.c.b16 %v6546, %v6542
    %v6591 = vpack.c.b16 %v6551, %v6547
    %v6592 = vpack.c.b16 %v6552, %v6548
    %v6593 = vpack.c.b16 %v6553, %v6549
    %v6594 = vpack.c.b16 %v6554, %v6550
    %v6595 = vpack.c.b16 %v6559, %v6555
    %v6596 = vpack.c.b16 %v6560, %v6556
    %v6597 = vpack.c.b16 %v6561, %v6557
    %v6598 = vpack.c.b16 %v6562, %v6558
    %v6599 = vpack.c.b16 %v6567, %v6563
    %v6600 = vpack.c.b16 %v6568, %v6564
    %v6601 = vpack.c.b16 %v6569, %v6565
    %v6602 = vpack.c.b16 %v6570, %v6566
    %6635 = vmatpush.bf16.msra.mxu0 %v6599
    %6636 = vmatpush.bf16.msra.mxu0 %v6595
    %6637 = vmatpush.bf16.msra.mxu0 %v6591
    %6638 = vmatpush.bf16.msra.mxu0 %v6587
    %6639 = vmatpush.bf16.msra.mxu0 %v6583
    %6640 = vmatpush.bf16.msra.mxu0 %v6579
    %6641 = vmatpush.bf16.msra.mxu0 %v6575
    %6642 = vmatpush.bf16.msra.mxu0 %v6571
    %6643 = vmatmul.bf16.gmra.mxu0 %v6432
    %v6644 = vpop.f32.mrf.mxu0
    %v6645 = vadd.f32 %v6467, %v6644
    %v6646 = vpop.f32.mrf.mxu0
    %6647 = vdwg.mxu0
    %6648 = vmatpush.bf16.msra.mxu0 %v6600
    %6649 = vmatpush.bf16.msra.mxu0 %v6596
    %6650 = vmatpush.bf16.msra.mxu0 %v6592
    %6651 = vmatpush.bf16.msra.mxu0 %v6588
    %6652 = vmatpush.bf16.msra.mxu0 %v6584
    %6653 = vmatpush.bf16.msra.mxu0 %v6580
    %6654 = vmatpush.bf16.msra.mxu0 %v6576
    %6655 = vmatpush.bf16.msra.mxu0 %v6572
    %6656 = vmatmul.bf16.gmra.mxu0 %v6432
    %v6657 = vpop.f32.mrf.mxu0
    %v6658 = vadd.f32 %v6468, %v6657
    %v6659 = vpop.f32.mrf.mxu0
    %6660 = vdwg.mxu0
    %6661 = vmatpush.bf16.msra.mxu0 %v6601
    %6662 = vmatpush.bf16.msra.mxu0 %v6597
    %6663 = vmatpush.bf16.msra.mxu0 %v6593
    %6664 = vmatpush.bf16.msra.mxu0 %v6589
    %6665 = vmatpush.bf16.msra.mxu0 %v6585
    %6666 = vmatpush.bf16.msra.mxu0 %v6581
    %6667 = vmatpush.bf16.msra.mxu0 %v6577
    %6668 = vmatpush.bf16.msra.mxu0 %v6573
    %6669 = vmatmul.bf16.gmra.mxu0 %v6432
    %v6670 = vpop.f32.mrf.mxu0
    %v6671 = vadd.f32 %v6469, %v6670
    %v6672 = vpop.f32.mrf.mxu0
    %6673 = vdwg.mxu0
    %6674 = vmatpush.bf16.msra.mxu0 %v6602
    %6675 = vmatpush.bf16.msra.mxu0 %v6598
    %6676 = vmatpush.bf16.msra.mxu0 %v6594
    %6677 = vmatpush.bf16.msra.mxu0 %v6590
    %6678 = vmatpush.bf16.msra.mxu0 %v6586
    %6679 = vmatpush.bf16.msra.mxu0 %v6582
    %6680 = vmatpush.bf16.msra.mxu0 %v6578
    %6681 = vmatpush.bf16.msra.mxu0 %v6574
    %6682 = vmatmul.bf16.gmra.mxu0 %v6432
    %v6683 = vpop.f32.mrf.mxu0
    %v6684 = vadd.f32 %v6470, %v6683
    %v6685 = vpop.f32.mrf.mxu0
    %6686 = vdwg.mxu0
    %v6687 = vmax.f32 %v6645, 0.0
    %v6688 = vmax.f32 %v6658, 0.0
    %v6689 = vmax.f32 %v6671, 0.0
    %v6690 = vmax.f32 %v6684, 0.0
    %v6691 = vpack.c.bf16 %v6687, %v6687
    %v6692 = vpack.c.bf16 %v6688, %v6688
    %v6693 = vpack.c.bf16 %v6689, %v6689
    %v6694 = vpack.c.bf16 %v6690, %v6690
    %v6695 = vld [vmem:[#allocation12] sm:$0xf]
    %v6696 = vld [vmem:[#allocation12 + $0x4] sm:$0xf]
    %v6697 = vld [vmem:[#allocation12 + $0x8] sm:$0xf]
    %v6698 = vld [vmem:[#allocation12 + $0xc] sm:$0xf]
    %v6699 = vld [vmem:[#allocation12 + $0x10] sm:$0xf]
    %v6700 = vld [vmem:[#allocation12 + $0x14] sm:$0xf]
    %v6701 = vld [vmem:[#allocation12 + $0x18] sm:$0xf]
    %v6702 = vld [vmem:[#allocation12 + $0x1c] sm:$0xf]
    %v6703 = vld [vmem:[#allocation12 + $0x20] sm:$0xf]
    %v6704 = vld [vmem:[#allocation12 + $0x24] sm:$0xf]
    %v6705 = vld [vmem:[#allocation12 + $0x28] sm:$0xf]
    %v6706 = vld [vmem:[#allocation12 + $0x2c] sm:$0xf]
    %v6707 = vld [vmem:[#allocation12 + $0x30] sm:$0xf]
    %v6708 = vld [vmem:[#allocation12 + $0x34] sm:$0xf]
    %v6709 = vld [vmem:[#allocation12 + $0x38] sm:$0xf]
    %v6710 = vld [vmem:[#allocation12 + $0x3c] sm:$0xf]
    %v6711 = vld [vmem:[#allocation12 + $0x40] sm:$0xf]
    %v6712 = vld [vmem:[#allocation12 + $0x44] sm:$0xf]
    %v6713 = vld [vmem:[#allocation12 + $0x48] sm:$0xf]
    %v6714 = vld [vmem:[#allocation12 + $0x4c] sm:$0xf]
    %v6715 = vld [vmem:[#allocation12 + $0x50] sm:$0xf]
    %v6716 = vld [vmem:[#allocation12 + $0x54] sm:$0xf]
    %v6717 = vld [vmem:[#allocation12 + $0x58] sm:$0xf]
    %v6718 = vld [vmem:[#allocation12 + $0x5c] sm:$0xf]
    %v6719 = vld [vmem:[#allocation12 + $0x60] sm:$0xf]
    %v6720 = vld [vmem:[#allocation12 + $0x64] sm:$0xf]
    %v6721 = vld [vmem:[#allocation12 + $0x68] sm:$0xf]
    %v6722 = vld [vmem:[#allocation12 + $0x6c] sm:$0xf]
    %v6723 = vld [vmem:[#allocation12 + $0x70] sm:$0xf]
    %v6724 = vld [vmem:[#allocation12 + $0x74] sm:$0xf]
    %v6725 = vld [vmem:[#allocation12 + $0x78] sm:$0xf]
    %v6726 = vld [vmem:[#allocation12 + $0x7c] sm:$0xf]
    %v6727 = vld [vmem:[#allocation12 + $0x80] sm:$0xf]
    %v6728 = vld [vmem:[#allocation12 + $0x84] sm:$0xf]
    %v6729 = vld [vmem:[#allocation12 + $0x88] sm:$0xf]
    %v6730 = vld [vmem:[#allocation12 + $0x8c] sm:$0xf]
    %v6731 = vld [vmem:[#allocation12 + $0x90] sm:$0xf]
    %v6732 = vld [vmem:[#allocation12 + $0x94] sm:$0xf]
    %v6733 = vld [vmem:[#allocation12 + $0x98] sm:$0xf]
    %v6734 = vld [vmem:[#allocation12 + $0x9c] sm:$0xf]
    %v6735 = vld [vmem:[#allocation12 + $0xa0] sm:$0xf]
    %v6736 = vld [vmem:[#allocation12 + $0xa4] sm:$0xf]
    %v6737 = vld [vmem:[#allocation12 + $0xa8] sm:$0xf]
    %v6738 = vld [vmem:[#allocation12 + $0xac] sm:$0xf]
    %v6739 = vld [vmem:[#allocation12 + $0xb0] sm:$0xf]
    %v6740 = vld [vmem:[#allocation12 + $0xb4] sm:$0xf]
    %v6741 = vld [vmem:[#allocation12 + $0xb8] sm:$0xf]
    %v6742 = vld [vmem:[#allocation12 + $0xbc] sm:$0xf]
    %v6743 = vld [vmem:[#allocation12 + $0xc0] sm:$0xf]
    %v6744 = vld [vmem:[#allocation12 + $0xc4] sm:$0xf]
    %v6745 = vld [vmem:[#allocation12 + $0xc8] sm:$0xf]
    %v6746 = vld [vmem:[#allocation12 + $0xcc] sm:$0xf]
    %v6747 = vld [vmem:[#allocation12 + $0xd0] sm:$0xf]
    %v6748 = vld [vmem:[#allocation12 + $0xd4] sm:$0xf]
    %v6749 = vld [vmem:[#allocation12 + $0xd8] sm:$0xf]
    %v6750 = vld [vmem:[#allocation12 + $0xdc] sm:$0xf]
    %v6751 = vld [vmem:[#allocation12 + $0xe0] sm:$0xf]
    %v6752 = vld [vmem:[#allocation12 + $0xe4] sm:$0xf]
    %v6753 = vld [vmem:[#allocation12 + $0xe8] sm:$0xf]
    %v6754 = vld [vmem:[#allocation12 + $0xec] sm:$0xf]
    %v6755 = vld [vmem:[#allocation12 + $0xf0] sm:$0xf]
    %v6756 = vld [vmem:[#allocation12 + $0xf4] sm:$0xf]
    %v6757 = vld [vmem:[#allocation12 + $0xf8] sm:$0xf]
    %v6758 = vld [vmem:[#allocation12 + $0xfc] sm:$0xf]
    %v6759 = vld [vmem:[#allocation13] sm:$0x1]
    %v6761 = vperm.slane %v6759, 0
    %v6827 = vunpack.c.l.b16 %v6695
    %v6828 = vunpack.c.l.b16 %v6696
    %v6829 = vunpack.c.l.b16 %v6697
    %v6830 = vunpack.c.l.b16 %v6698
    %v6831 = vunpack.c.l.b16 %v6699
    %v6832 = vunpack.c.l.b16 %v6700
    %v6833 = vunpack.c.l.b16 %v6701
    %v6834 = vunpack.c.l.b16 %v6702
    %v6835 = vunpack.c.l.b16 %v6703
    %v6836 = vunpack.c.l.b16 %v6704
    %v6837 = vunpack.c.l.b16 %v6705
    %v6838 = vunpack.c.l.b16 %v6706
    %v6839 = vunpack.c.l.b16 %v6707
    %v6840 = vunpack.c.l.b16 %v6708
    %v6841 = vunpack.c.l.b16 %v6709
    %v6842 = vunpack.c.l.b16 %v6710
    %v6843 = vunpack.c.l.b16 %v6711
    %v6844 = vunpack.c.l.b16 %v6712
    %v6845 = vunpack.c.l.b16 %v6713
    %v6846 = vunpack.c.l.b16 %v6714
    %v6847 = vunpack.c.l.b16 %v6715
    %v6848 = vunpack.c.l.b16 %v6716
    %v6849 = vunpack.c.l.b16 %v6717
    %v6850 = vunpack.c.l.b16 %v6718
    %v6851 = vunpack.c.l.b16 %v6719
    %v6852 = vunpack.c.l.b16 %v6720
    %v6853 = vunpack.c.l.b16 %v6721
    %v6854 = vunpack.c.l.b16 %v6722
    %v6855 = vunpack.c.l.b16 %v6723
    %v6856 = vunpack.c.l.b16 %v6724
    %v6857 = vunpack.c.l.b16 %v6725
    %v6858 = vunpack.c.l.b16 %v6726
    %v6859 = vunpack.c.l.b16 %v6727
    %v6860 = vunpack.c.l.b16 %v6728
    %v6861 = vunpack.c.l.b16 %v6729
    %v6862 = vunpack.c.l.b16 %v6730
    %v6863 = vunpack.c.l.b16 %v6731
    %v6864 = vunpack.c.l.b16 %v6732
    %v6865 = vunpack.c.l.b16 %v6733
    %v6866 = vunpack.c.l.b16 %v6734
    %v6867 = vunpack.c.l.b16 %v6735
    %v6868 = vunpack.c.l.b16 %v6736
    %v6869 = vunpack.c.l.b16 %v6737
    %v6870 = vunpack.c.l.b16 %v6738
    %v6871 = vunpack.c.l.b16 %v6739
    %v6872 = vunpack.c.l.b16 %v6740
    %v6873 = vunpack.c.l.b16 %v6741
    %v6874 = vunpack.c.l.b16 %v6742
    %v6875 = vunpack.c.l.b16 %v6743
    %v6876 = vunpack.c.l.b16 %v6744
    %v6877 = vunpack.c.l.b16 %v6745
    %v6878 = vunpack.c.l.b16 %v6746
    %v6879 = vunpack.c.l.b16 %v6747
    %v6880 = vunpack.c.l.b16 %v6748
    %v6881 = vunpack.c.l.b16 %v6749
    %v6882 = vunpack.c.l.b16 %v6750
    %v6883 = vunpack.c.l.b16 %v6751
    %v6884 = vunpack.c.l.b16 %v6752
    %v6885 = vunpack.c.l.b16 %v6753
    %v6886 = vunpack.c.l.b16 %v6754
    %v6887 = vunpack.c.l.b16 %v6755
    %v6888 = vunpack.c.l.b16 %v6756
    %v6889 = vunpack.c.l.b16 %v6757
    %v6890 = vunpack.c.l.b16 %v6758
    %v6891 = vpack.c.b16 %v6828, %v6827
    %v6892 = vpack.c.b16 %v6830, %v6829
    %v6893 = vpack.c.b16 %v6832, %v6831
    %v6894 = vpack.c.b16 %v6834, %v6833
    %v6895 = vpack.c.b16 %v6836, %v6835
    %v6896 = vpack.c.b16 %v6838, %v6837
    %v6897 = vpack.c.b16 %v6840, %v6839
    %v6898 = vpack.c.b16 %v6842, %v6841
    %v6899 = vpack.c.b16 %v6844, %v6843
    %v6900 = vpack.c.b16 %v6846, %v6845
    %v6901 = vpack.c.b16 %v6848, %v6847
    %v6902 = vpack.c.b16 %v6850, %v6849
    %v6903 = vpack.c.b16 %v6852, %v6851
    %v6904 = vpack.c.b16 %v6854, %v6853
    %v6905 = vpack.c.b16 %v6856, %v6855
    %v6906 = vpack.c.b16 %v6858, %v6857
    %v6907 = vpack.c.b16 %v6860, %v6859
    %v6908 = vpack.c.b16 %v6862, %v6861
    %v6909 = vpack.c.b16 %v6864, %v6863
    %v6910 = vpack.c.b16 %v6866, %v6865
    %v6911 = vpack.c.b16 %v6868, %v6867
    %v6912 = vpack.c.b16 %v6870, %v6869
    %v6913 = vpack.c.b16 %v6872, %v6871
    %v6914 = vpack.c.b16 %v6874, %v6873
    %v6915 = vpack.c.b16 %v6876, %v6875
    %v6916 = vpack.c.b16 %v6878, %v6877
    %v6917 = vpack.c.b16 %v6880, %v6879
    %v6918 = vpack.c.b16 %v6882, %v6881
    %v6919 = vpack.c.b16 %v6884, %v6883
    %v6920 = vpack.c.b16 %v6886, %v6885
    %v6921 = vpack.c.b16 %v6888, %v6887
    %v6922 = vpack.c.b16 %v6890, %v6889
    %6955 = vmatpush.bf16.msra.mxu0 %v6898
    %6956 = vmatpush.bf16.msra.mxu0 %v6897
    %6957 = vmatpush.bf16.msra.mxu0 %v6896
    %6958 = vmatpush.bf16.msra.mxu0 %v6895
    %6959 = vmatpush.bf16.msra.mxu0 %v6894
    %6960 = vmatpush.bf16.msra.mxu0 %v6893
    %6961 = vmatpush.bf16.msra.mxu0 %v6892
    %6962 = vmatpush.bf16.msra.mxu0 %v6891
    %6963 = vmatmul.bf16.gmra.mxu0 %v6691
    %v6964 = vpop.f32.mrf.mxu0
    %v6965 = vadd.f32 %v6761, %v6964
    %v6966 = vpop.f32.mrf.mxu0
    %6967 = vdwg.mxu0
    %6968 = vmatpush.bf16.msra.mxu0 %v6906
    %6969 = vmatpush.bf16.msra.mxu0 %v6905
    %6970 = vmatpush.bf16.msra.mxu0 %v6904
    %6971 = vmatpush.bf16.msra.mxu0 %v6903
    %6972 = vmatpush.bf16.msra.mxu0 %v6902
    %6973 = vmatpush.bf16.msra.mxu0 %v6901
    %6974 = vmatpush.bf16.msra.mxu0 %v6900
    %6975 = vmatpush.bf16.msra.mxu0 %v6899
    %6976 = vmatmul.bf16.gmra.mxu0 %v6692
    %v6977 = vpop.f32.mrf.mxu0
    %v6978 = vadd.f32 %v6965, %v6977
    %v6979 = vpop.f32.mrf.mxu0
    %6980 = vdwg.mxu0
    %6981 = vmatpush.bf16.msra.mxu0 %v6914
    %6982 = vmatpush.bf16.msra.mxu0 %v6913
    %6983 = vmatpush.bf16.msra.mxu0 %v6912
    %6984 = vmatpush.bf16.msra.mxu0 %v6911
    %6985 = vmatpush.bf16.msra.mxu0 %v6910
    %6986 = vmatpush.bf16.msra.mxu0 %v6909
    %6987 = vmatpush.bf16.msra.mxu0 %v6908
    %6988 = vmatpush.bf16.msra.mxu0 %v6907
    %6989 = vmatmul.bf16.gmra.mxu0 %v6693
    %v6990 = vpop.f32.mrf.mxu0
    %v6991 = vadd.f32 %v6978, %v6990
    %v6992 = vpop.f32.mrf.mxu0
    %6993 = vdwg.mxu0
    %6994 = vmatpush.bf16.msra.mxu0 %v6922
    %6995 = vmatpush.bf16.msra.mxu0 %v6921
    %6996 = vmatpush.bf16.msra.mxu0 %v6920
    %6997 = vmatpush.bf16.msra.mxu0 %v6919
    %6998 = vmatpush.bf16.msra.mxu0 %v6918
    %6999 = vmatpush.bf16.msra.mxu0 %v6917
    %7000 = vmatpush.bf16.msra.mxu0 %v6916
    %7001 = vmatpush.bf16.msra.mxu0 %v6915
    %7002 = vmatmul.bf16.gmra.mxu0 %v6694
    %v7003 = vpop.f32.mrf.mxu0
    %v7004 = vadd.f32 %v6991, %v7003
    %v7005 = vpop.f32.mrf.mxu0
    %7006 = vdwg.mxu0
    %7007 = vst [vmem:[%s9] sm:$0xff] %v7004
    // Predicated region
    $region70: #{mlp_forward.1} parent=1 // pred_check
      _
    $region71: #{mlp_forward.1} parent=1 // pred_check_branch
      %7009 = sbr.rel (0) target = $region73
    $region72: #{mlp_forward.1} parent=1 // pred_region
      _
    $region73: #{mlp_forward.1} parent=1 // pred_fallthru
      _
    // Predicated region
    $region74: #{mlp_forward.1} parent=1 // pred_check
      _
    $region75: #{mlp_forward.1} parent=1 // pred_check_branch
      %7011 = sbr.rel (0) target = $region77
    $region76: #{mlp_forward.1} parent=1 // pred_region
      _
    $region77: #{mlp_forward.1} parent=1 // pred_fallthru
      _
    %7012 = vsyncpa [#allocation3], 1
    %7013 = vsyncpa [#allocation5], 1
    %7014 = vsyncpa [#allocation8], 1
    %7015 = vsyncpa [#allocation11], 1
    %7016 = vsyncpa [#allocation14], 1

</llo_original>
